<compile_context>
chip_gen: v7x
topology: tpu7x:2x2x1
jax: 0.10.0
libtpu: 0.0.40
codegen_flags: <defaults>
</compile_context>

<pallas_src>
import jax
import jax.numpy as jnp
from jax.experimental import pallas as pl
from jax.experimental.pallas import tpu as pltpu


_SQRT_2_OVER_PI = 0.7978845608028654
_GELU_C2 = _SQRT_2_OVER_PI * 0.044715


def _round_up(n, m):
    return (n + m - 1) // m * m


def _cdiv(a, b):
    return (a + b - 1) // b


def _vmem_limit_bytes():
    try:
        cap = int(pltpu.get_tpu_info().vmem_capacity_bytes)
    except Exception:
        cap = 64 << 20  # conservative default (v7x per-TC VMEM)
    # Leave margin for Mosaic internal scratch / semaphores; never claim more
    # than ~110 MiB even on 128 MiB parts (v5e / v6e).
    return int(max(32 << 20, min(cap - (8 << 20), 110 << 20)))


def _mlp_kernel(x_ref, w1_ref, b1_ref, w2_ref, b2_ref, o_ref, acc_ref):
    # x_ref: (tm, H) bf16; w1_ref: (H, ti); b1_ref: (1, ti) f32;
    # w2_ref: (ti, H); b2_ref: (1, H) f32; o_ref: (tm, H); acc_ref: (tm, H) f32.
    i = pl.program_id(1)

    @pl.when(i == 0)
    def _():
        acc_ref[...] = jnp.zeros_like(acc_ref)

    # fc1 slice over the intermediate dim: (tm, H) @ (H, ti) -> f32 (tm, ti).
    h = (jnp.dot(x_ref[...], w1_ref[...], preferred_element_type=jnp.float32)
         + b1_ref[...])

    # GELU tanh approximation (== nn.GELU(approximate='tanh')), f32, factored
    # polynomial: c*(h + a*h^3) == h*(c + (c*a)*h*h).
    g = 0.5 * h * (1.0 + jnp.tanh(h * (_SQRT_2_OVER_PI + _GELU_C2 * (h * h))))

    # fc2 partial product, accumulated in f32 across the I grid axis.
    acc_ref[...] += jnp.dot(g.astype(w2_ref.dtype), w2_ref[...],
                            preferred_element_type=jnp.float32)

    @pl.when(i == pl.num_programs(1) - 1)
    def _():
        # TODO(synk): dropout is identity at inference; training-mode dropout
        # would use pltpu.prng_seed / pltpu.prng_random_bits here.
        o_ref[...] = (acc_ref[...] + b2_ref[...]).astype(o_ref.dtype)


def vit_mlp(x, w1, b1, w2, b2, *, compute_dtype=jnp.bfloat16, tm_cap=1024):
    """ViT MLP forward: GELU_tanh(x @ w1 + b1) @ w2 + b2 (dropout = eval mode).

    x: (B, T, H). w1: (H, I), b1: (I,), w2: (I, H), b2: (H,) — weights stored
    transposed relative to PyTorch's (out, in) layout so the kernel computes
    x @ W directly.
    """
    B, T, H = x.shape
    I = w1.shape[1]
    rows = B * T
    out_dtype = x.dtype

    # MXU operands in compute_dtype (bf16 by default); f32 biases/accumulate.
    xc = x.reshape(rows, H).astype(compute_dtype)
    w1c = w1.astype(compute_dtype)
    w2c = w2.astype(compute_dtype)
    b1_2d = b1.astype(jnp.float32).reshape(1, I)
    b2_2d = b2.astype(jnp.float32).reshape(1, H)

    c_bytes = jnp.dtype(compute_dtype).itemsize
    o_bytes = jnp.dtype(out_dtype).itemsize

    vmem_limit = _vmem_limit_bytes()
    budget = vmem_limit - (4 << 20)  # headroom for misc compiler scratch

    # --- choose the intermediate-dim tile ti (grid axis 1, reduction). ---
    if 2 * H * I * c_bytes <= budget // 2:
        # Both weights fit resident (single-buffered): one reduction step.
        ti, i_grid, single_weight_buf = I, 1, True
    else:
        # Tile I so double-buffered weight tiles use <= ~half the budget.
        max_ti = max(128, (budget // 2) // (2 * 2 * H * c_bytes))
        i_grid = _cdiv(I, max_ti)
        ti = _round_up(_cdiv(I, i_grid), 128)
        single_weight_buf = False
    I_pad = ti * i_grid
    if I_pad != I:
        # Zero-padding the intermediate dim is exact: GELU(0 + 0) = 0 and the
        # padded W2 rows are zero, so padded columns contribute nothing.
        w1c = jnp.pad(w1c, ((0, 0), (0, I_pad - I)))
        w2c = jnp.pad(w2c, ((0, I_pad - I), (0, 0)))
        b1_2d = jnp.pad(b1_2d, ((0, 0), (0, I_pad - I)))

    # --- choose the row tile tm (grid axis 0, parallel). ---
    sub = 8 * (4 // c_bytes)  # sublane packing: 8 for f32, 16 for bf16
    w_bufs = 1 if single_weight_buf else 2
    weight_bytes = w_bufs * (2 * H * ti * c_bytes + ti * 4) + H * 4
    per_row = (2 * H * c_bytes      # x tile, double buffered
               + 2 * H * o_bytes    # out tile, double buffered
               + H * 4              # f32 accumulator scratch
               + 2 * ti * 4)        # fc1 / GELU f32 intermediates
    tm = max(sub, ((budget - weight_bytes) // per_row) // sub * sub)
    tm = min(tm, _round_up(tm_cap, sub))
    # Keep >= 4 row steps so each v7x TensorCore gets >= 2 pipelined steps.
    if rows > 4 * sub:
        tm = min(tm, _round_up(_cdiv(rows, 4), sub))
    tm = min(tm, _round_up(rows, sub))
    tm = max(tm, sub)

    rows_pad = _round_up(rows, tm)
    if rows_pad != rows:
        xc = jnp.pad(xc, ((0, rows_pad - rows), (0, 0)))

    grid = (rows_pad // tm, i_grid)

    def build(weight_mode):
        def wspec(shape, imap):
            if weight_mode is None:
                return pl.BlockSpec(shape, imap)
            return pl.BlockSpec(shape, imap, pipeline_mode=weight_mode)

        return pl.pallas_call(
            _mlp_kernel,
            out_shape=jax.ShapeDtypeStruct((rows_pad, H), out_dtype),
            grid_spec=pltpu.PrefetchScalarGridSpec(
                num_scalar_prefetch=0,
                grid=grid,
                in_specs=[
                    pl.BlockSpec((tm, H), lambda r, i: (r, 0)),   # x rows tile
                    wspec((H, ti), lambda r, i: (0, i)),          # W1 tile
                    wspec((1, ti), lambda r, i: (0, i)),          # b1 tile (f32)
                    wspec((ti, H), lambda r, i: (i, 0)),          # W2 tile
                    wspec((1, H), lambda r, i: (0, 0)),           # b2 (f32)
                ],
                out_specs=pl.BlockSpec((tm, H), lambda r, i: (r, 0)),
                scratch_shapes=[pltpu.VMEM((tm, H), jnp.float32)],
            ),
            compiler_params=pltpu.CompilerParams(
                dimension_semantics=("parallel", "arbitrary"),
                vmem_limit_bytes=vmem_limit),
        )(xc, w1c, b1_2d, w2c, b2_2d)

    if single_weight_buf:
        try:
            # Constant-index weights: single-buffered residency (halves VMEM).
            out2d = build(pl.Buffered(1))
        except Exception:
            out2d = build(None)  # fall back to default double buffering
    else:
        out2d = build(None)

    return out2d[:rows].reshape(B, T, H)


def _reference(x, w1, b1, w2, b2):
    h = x @ w1 + b1
    c = 0.7978845608028654
    g = 0.5 * h * (1.0 + jnp.tanh(c * (h + 0.044715 * h ** 3)))
    return g @ w2 + b2


if __name__ == "__main__":
    # Small ViT-MLP-consistent shapes (vit_hidden_dim=128, vit_inter_dim=512,
    # 196 patch tokens): 392 rows exercises the padded tail and a 4-step grid.
    B, T, H, I = 2, 196, 128, 512

    key = jax.random.PRNGKey(0)
    kx, kw1, kb1, kw2, kb2 = jax.random.split(key, 5)

    x = jax.random.normal(kx, (B, T, H), dtype=jnp.float32)
    # fc1: H->I, fc2: I->H, stored transposed vs PyTorch's (out, in).
    w1 = jax.random.normal(kw1, (H, I), dtype=jnp.float32) * 0.05
    b1 = jax.random.normal(kb1, (I,), dtype=jnp.float32) * 0.01
    w2 = jax.random.normal(kw2, (I, H), dtype=jnp.float32) * 0.05
    b2 = jax.random.normal(kb2, (H,), dtype=jnp.float32) * 0.01

    out = jax.block_until_ready(vit_mlp(x, w1, b1, w2, b2))

    # Reference with matching numerics: bf16 operands, f32 accumulation.
    bf = lambda a: a.astype(jnp.bfloat16).astype(jnp.float32)
    ref = _reference(bf(x), bf(w1), b1.astype(jnp.float32),
                     bf(w2), b2.astype(jnp.float32))

    assert out.shape == (B, T, H)
    assert jnp.allclose(out, ref, atol=1e-2, rtol=1e-2), "mismatch vs reference"

    print("KERNEL_OK")
</pallas_src>

<mosaic_0001>
module attributes {stable_mosaic.version = 11 : i64} {
  func.func @_mlp_kernel(%arg0: i32, %arg1: i32, %arg2: memref<112x128xbf16, #tpu.memory_space<vmem>>, %arg3: memref<128x512xbf16, #tpu.memory_space<vmem>>, %arg4: memref<1x512xf32, #tpu.memory_space<vmem>>, %arg5: memref<512x128xbf16, #tpu.memory_space<vmem>>, %arg6: memref<1x128xf32, #tpu.memory_space<vmem>>, %arg7: memref<112x128xf32, #tpu.memory_space<vmem>>, %arg8: memref<112x128xf32, #tpu.memory_space<vmem>>) attributes {dimension_semantics = [#tpu.dimension_semantics<parallel>, #tpu.dimension_semantics<arbitrary>], iteration_bounds = array<i64: 4, 1>, scalar_prefetch = 0 : i64, scratch_operands = 1 : i64, tpu.core_type = #tpu.core_type<tc>, window_params = [{transform_indices = @transform_0, window_bounds = array<i64: 112, 128>}, {pipeline_mode = #tpu.pipeline_mode<synchronous>, transform_indices = @transform_1, window_bounds = array<i64: 128, 512>}, {pipeline_mode = #tpu.pipeline_mode<synchronous>, transform_indices = @transform_2, window_bounds = array<i64: 1, 512>}, {pipeline_mode = #tpu.pipeline_mode<synchronous>, transform_indices = @transform_3, window_bounds = array<i64: 512, 128>}, {pipeline_mode = #tpu.pipeline_mode<synchronous>, transform_indices = @transform_4, window_bounds = array<i64: 1, 128>}, {transform_indices = @transform_5, window_bounds = array<i64: 112, 128>}]} {
    %c0_i32 = arith.constant 0 : i32
    %0 = arith.cmpi eq, %arg1, %c0_i32 : i32
    %1 = arith.extui %0 : i1 to i32
    %c0_i32_0 = arith.constant 0 : i32
    %2 = arith.cmpi ne, %1, %c0_i32_0 : i32
    scf.if %2 {
      %cst_19 = arith.constant 0.000000e+00 : f32
      %30 = vector.broadcast %cst_19 : f32 to vector<112x128xf32>
      %c0_20 = arith.constant 0 : index
      %c0_21 = arith.constant 0 : index
      %31 = vector.load %arg8[%c0_20, %c0_21] : memref<112x128xf32, #tpu.memory_space<vmem>>, vector<112x128xf32>
      tpu.vector_store %arg8[%c0_20, %c0_21], %30 {strides = array<i32>} : memref<112x128xf32, #tpu.memory_space<vmem>>, vector<112x128xf32>,
    } else {
    }
    %c0 = arith.constant 0 : index
    %c0_1 = arith.constant 0 : index
    %3 = vector.load %arg2[%c0, %c0_1] : memref<112x128xbf16, #tpu.memory_space<vmem>>, vector<112x128xbf16>
    %c0_2 = arith.constant 0 : index
    %c0_3 = arith.constant 0 : index
    %4 = vector.load %arg3[%c0_2, %c0_3] : memref<128x512xbf16, #tpu.memory_space<vmem>>, vector<128x512xbf16>
    %cst = arith.constant dense<0.000000e+00> : vector<112x512xf32>
    %5 = tpu.matmul %3, %4, %cst {dimension_numbers = #tpu.dot_dimension_numbers<[1], [0], [0], [1], [0, 0, 1, 1], [], []>} : vector<112x128xbf16>, vector<128x512xbf16>, vector<112x512xf32> -> vector<112x512xf32>
    %c0_4 = arith.constant 0 : index
    %c0_5 = arith.constant 0 : index
    %6 = vector.load %arg4[%c0_4, %c0_5] : memref<1x512xf32, #tpu.memory_space<vmem>>, vector<1x512xf32>
    %7 = vector.broadcast %6 : vector<1x512xf32> to vector<112x512xf32>
    %8 = arith.addf %5, %7 : vector<112x512xf32>
    %cst_6 = arith.constant 5.000000e-01 : f32
    %9 = vector.broadcast %cst_6 : f32 to vector<112x512xf32>
    %10 = arith.mulf %9, %8 : vector<112x512xf32>
    %11 = arith.mulf %8, %8 : vector<112x512xf32>
    %cst_7 = arith.constant 0.0356774069 : f32
    %12 = vector.broadcast %cst_7 : f32 to vector<112x512xf32>
    %13 = arith.mulf %12, %11 : vector<112x512xf32>
    %cst_8 = arith.constant 0.797884583 : f32
    %14 = vector.broadcast %cst_8 : f32 to vector<112x512xf32>
    %15 = arith.addf %14, %13 : vector<112x512xf32>
    %16 = arith.mulf %8, %15 : vector<112x512xf32>
    %17 = math.tanh %16 : vector<112x512xf32>
    %cst_9 = arith.constant 1.000000e+00 : f32
    %18 = vector.broadcast %cst_9 : f32 to vector<112x512xf32>
    %19 = arith.addf %18, %17 : vector<112x512xf32>
    %20 = arith.mulf %10, %19 : vector<112x512xf32>
    %c0_10 = arith.constant 0 : index
    %c0_11 = arith.constant 0 : index
    %21 = vector.load %arg8[%c0_10, %c0_11] : memref<112x128xf32, #tpu.memory_space<vmem>>, vector<112x128xf32>
    %22 = arith.truncf %20 : vector<112x512xf32> to vector<112x512xbf16>
    %c0_12 = arith.constant 0 : index
    %c0_13 = arith.constant 0 : index
    %23 = vector.load %arg5[%c0_12, %c0_13] : memref<512x128xbf16, #tpu.memory_space<vmem>>, vector<512x128xbf16>
    %cst_14 = arith.constant dense<0.000000e+00> : vector<112x128xf32>
    %24 = tpu.matmul %22, %23, %cst_14 {dimension_numbers = #tpu.dot_dimension_numbers<[1], [0], [0], [1], [0, 0, 1, 1], [], []>} : vector<112x512xbf16>, vector<512x128xbf16>, vector<112x128xf32> -> vector<112x128xf32>
    %25 = arith.addf %21, %24 : vector<112x128xf32>
    %c0_15 = arith.constant 0 : index
    %c0_16 = arith.constant 0 : index
    %26 = vector.load %arg8[%c0_15, %c0_16] : memref<112x128xf32, #tpu.memory_space<vmem>>, vector<112x128xf32>
    tpu.vector_store %arg8[%c0_15, %c0_16], %25 {strides = array<i32>} : memref<112x128xf32, #tpu.memory_space<vmem>>, vector<112x128xf32>,
    %c0_i32_17 = arith.constant 0 : i32
    %27 = arith.cmpi eq, %arg1, %c0_i32_17 : i32
    %28 = arith.extui %27 : i1 to i32
    %c0_i32_18 = arith.constant 0 : i32
    %29 = arith.cmpi ne, %28, %c0_i32_18 : i32
    scf.if %29 {
      %c0_19 = arith.constant 0 : index
      %c0_20 = arith.constant 0 : index
      %30 = vector.load %arg8[%c0_19, %c0_20] : memref<112x128xf32, #tpu.memory_space<vmem>>, vector<112x128xf32>
      %c0_21 = arith.constant 0 : index
      %c0_22 = arith.constant 0 : index
      %31 = vector.load %arg6[%c0_21, %c0_22] : memref<1x128xf32, #tpu.memory_space<vmem>>, vector<1x128xf32>
      %32 = vector.broadcast %31 : vector<1x128xf32> to vector<112x128xf32>
      %33 = arith.addf %30, %32 : vector<112x128xf32>
      %c0_23 = arith.constant 0 : index
      %c0_24 = arith.constant 0 : index
      %34 = vector.load %arg7[%c0_23, %c0_24] : memref<112x128xf32, #tpu.memory_space<vmem>>, vector<112x128xf32>
      tpu.vector_store %arg7[%c0_23, %c0_24], %33 {strides = array<i32>} : memref<112x128xf32, #tpu.memory_space<vmem>>, vector<112x128xf32>,
    } else {
    }
    return
  }
  func.func @transform_0(%arg0: i32, %arg1: i32) -> (i32, i32) {
    %c0_i32 = arith.constant 0 : i32
    %c0_i32_0 = arith.constant 0 : i32
    return %arg0, %c0_i32 : i32, i32
  }
  func.func @transform_1(%arg0: i32, %arg1: i32) -> (i32, i32) {
    %c0_i32 = arith.constant 0 : i32
    %c0_i32_0 = arith.constant 0 : i32
    return %c0_i32, %arg1 : i32, i32
  }
  func.func @transform_2(%arg0: i32, %arg1: i32) -> (i32, i32) {
    %c0_i32 = arith.constant 0 : i32
    %c0_i32_0 = arith.constant 0 : i32
    return %c0_i32, %arg1 : i32, i32
  }
  func.func @transform_3(%arg0: i32, %arg1: i32) -> (i32, i32) {
    %c0_i32 = arith.constant 0 : i32
    %c0_i32_0 = arith.constant 0 : i32
    return %arg1, %c0_i32 : i32, i32
  }
  func.func @transform_4(%arg0: i32, %arg1: i32) -> (i32, i32) {
    %c0_i32 = arith.constant 0 : i32
    %c0_i32_0 = arith.constant 0 : i32
    %c0_i32_1 = arith.constant 0 : i32
    return %c0_i32, %c0_i32_0 : i32, i32
  }
  func.func @transform_5(%arg0: i32, %arg1: i32) -> (i32, i32) {
    %c0_i32 = arith.constant 0 : i32
    %c0_i32_0 = arith.constant 0 : i32
    return %arg0, %c0_i32 : i32, i32
  }
}

module attributes {stable_mosaic.version = 11 : i64} {
  func.func @_mlp_kernel(%arg0: i32, %arg1: i32, %arg2: memref<112x128xbf16, #tpu.memory_space<vmem>>, %arg3: memref<128x512xbf16, #tpu.memory_space<vmem>>, %arg4: memref<1x512xf32, #tpu.memory_space<vmem>>, %arg5: memref<512x128xbf16, #tpu.memory_space<vmem>>, %arg6: memref<1x128xf32, #tpu.memory_space<vmem>>, %arg7: memref<112x128xf32, #tpu.memory_space<vmem>>, %arg8: memref<112x128xf32, #tpu.memory_space<vmem>>) attributes {dimension_semantics = [#tpu.dimension_semantics<parallel>, #tpu.dimension_semantics<arbitrary>], iteration_bounds = array<i64: 4, 1>, scalar_prefetch = 0 : i64, scratch_operands = 1 : i64, tpu.core_type = #tpu.core_type<tc>, window_params = [{transform_indices = @transform_0, window_bounds = array<i64: 112, 128>}, {transform_indices = @transform_1, window_bounds = array<i64: 128, 512>}, {transform_indices = @transform_2, window_bounds = array<i64: 1, 512>}, {transform_indices = @transform_3, window_bounds = array<i64: 512, 128>}, {pipeline_mode = #tpu.pipeline_mode<synchronous>, transform_indices = @transform_4, window_bounds = array<i64: 1, 128>}, {transform_indices = @transform_5, window_bounds = array<i64: 112, 128>}]} {
    %c0_i32 = arith.constant 0 : i32
    %0 = arith.cmpi eq, %arg1, %c0_i32 : i32
    %1 = arith.extui %0 : i1 to i32
    %c0_i32_0 = arith.constant 0 : i32
    %2 = arith.cmpi ne, %1, %c0_i32_0 : i32
    scf.if %2 {
      %cst_19 = arith.constant 0.000000e+00 : f32
      %30 = vector.broadcast %cst_19 : f32 to vector<112x128xf32>
      %c0_20 = arith.constant 0 : index
      %c0_21 = arith.constant 0 : index
      %31 = vector.load %arg8[%c0_20, %c0_21] : memref<112x128xf32, #tpu.memory_space<vmem>>, vector<112x128xf32>
      tpu.vector_store %arg8[%c0_20, %c0_21], %30 {strides = array<i32>} : memref<112x128xf32, #tpu.memory_space<vmem>>, vector<112x128xf32>,
    } else {
    }
    %c0 = arith.constant 0 : index
    %c0_1 = arith.constant 0 : index
    %3 = vector.load %arg2[%c0, %c0_1] : memref<112x128xbf16, #tpu.memory_space<vmem>>, vector<112x128xbf16>
    %c0_2 = arith.constant 0 : index
    %c0_3 = arith.constant 0 : index
    %4 = vector.load %arg3[%c0_2, %c0_3] : memref<128x512xbf16, #tpu.memory_space<vmem>>, vector<128x512xbf16>
    %cst = arith.constant dense<0.000000e+00> : vector<112x512xf32>
    %5 = tpu.matmul %3, %4, %cst {dimension_numbers = #tpu.dot_dimension_numbers<[1], [0], [0], [1], [0, 0, 1, 1], [], []>} : vector<112x128xbf16>, vector<128x512xbf16>, vector<112x512xf32> -> vector<112x512xf32>
    %c0_4 = arith.constant 0 : index
    %c0_5 = arith.constant 0 : index
    %6 = vector.load %arg4[%c0_4, %c0_5] : memref<1x512xf32, #tpu.memory_space<vmem>>, vector<1x512xf32>
    %7 = vector.broadcast %6 : vector<1x512xf32> to vector<112x512xf32>
    %8 = arith.addf %5, %7 : vector<112x512xf32>
    %cst_6 = arith.constant 5.000000e-01 : f32
    %9 = vector.broadcast %cst_6 : f32 to vector<112x512xf32>
    %10 = arith.mulf %9, %8 : vector<112x512xf32>
    %11 = arith.mulf %8, %8 : vector<112x512xf32>
    %cst_7 = arith.constant 0.0356774069 : f32
    %12 = vector.broadcast %cst_7 : f32 to vector<112x512xf32>
    %13 = arith.mulf %12, %11 : vector<112x512xf32>
    %cst_8 = arith.constant 0.797884583 : f32
    %14 = vector.broadcast %cst_8 : f32 to vector<112x512xf32>
    %15 = arith.addf %14, %13 : vector<112x512xf32>
    %16 = arith.mulf %8, %15 : vector<112x512xf32>
    %17 = math.tanh %16 : vector<112x512xf32>
    %cst_9 = arith.constant 1.000000e+00 : f32
    %18 = vector.broadcast %cst_9 : f32 to vector<112x512xf32>
    %19 = arith.addf %18, %17 : vector<112x512xf32>
    %20 = arith.mulf %10, %19 : vector<112x512xf32>
    %c0_10 = arith.constant 0 : index
    %c0_11 = arith.constant 0 : index
    %21 = vector.load %arg8[%c0_10, %c0_11] : memref<112x128xf32, #tpu.memory_space<vmem>>, vector<112x128xf32>
    %22 = arith.truncf %20 : vector<112x512xf32> to vector<112x512xbf16>
    %c0_12 = arith.constant 0 : index
    %c0_13 = arith.constant 0 : index
    %23 = vector.load %arg5[%c0_12, %c0_13] : memref<512x128xbf16, #tpu.memory_space<vmem>>, vector<512x128xbf16>
    %cst_14 = arith.constant dense<0.000000e+00> : vector<112x128xf32>
    %24 = tpu.matmul %22, %23, %cst_14 {dimension_numbers = #tpu.dot_dimension_numbers<[1], [0], [0], [1], [0, 0, 1, 1], [], []>} : vector<112x512xbf16>, vector<512x128xbf16>, vector<112x128xf32> -> vector<112x128xf32>
    %25 = arith.addf %21, %24 : vector<112x128xf32>
    %c0_15 = arith.constant 0 : index
    %c0_16 = arith.constant 0 : index
    %26 = vector.load %arg8[%c0_15, %c0_16] : memref<112x128xf32, #tpu.memory_space<vmem>>, vector<112x128xf32>
    tpu.vector_store %arg8[%c0_15, %c0_16], %25 {strides = array<i32>} : memref<112x128xf32, #tpu.memory_space<vmem>>, vector<112x128xf32>,
    %c0_i32_17 = arith.constant 0 : i32
    %27 = arith.cmpi eq, %arg1, %c0_i32_17 : i32
    %28 = arith.extui %27 : i1 to i32
    %c0_i32_18 = arith.constant 0 : i32
    %29 = arith.cmpi ne, %28, %c0_i32_18 : i32
    scf.if %29 {
      %c0_19 = arith.constant 0 : index
      %c0_20 = arith.constant 0 : index
      %30 = vector.load %arg8[%c0_19, %c0_20] : memref<112x128xf32, #tpu.memory_space<vmem>>, vector<112x128xf32>
      %c0_21 = arith.constant 0 : index
      %c0_22 = arith.constant 0 : index
      %31 = vector.load %arg6[%c0_21, %c0_22] : memref<1x128xf32, #tpu.memory_space<vmem>>, vector<1x128xf32>
      %32 = vector.broadcast %31 : vector<1x128xf32> to vector<112x128xf32>
      %33 = arith.addf %30, %32 : vector<112x128xf32>
      %c0_23 = arith.constant 0 : index
      %c0_24 = arith.constant 0 : index
      %34 = vector.load %arg7[%c0_23, %c0_24] : memref<112x128xf32, #tpu.memory_space<vmem>>, vector<112x128xf32>
      tpu.vector_store %arg7[%c0_23, %c0_24], %33 {strides = array<i32>} : memref<112x128xf32, #tpu.memory_space<vmem>>, vector<112x128xf32>,
    } else {
    }
    return
  }
  func.func @transform_0(%arg0: i32, %arg1: i32) -> (i32, i32) {
    %c0_i32 = arith.constant 0 : i32
    %c0_i32_0 = arith.constant 0 : i32
    return %arg0, %c0_i32 : i32, i32
  }
  func.func @transform_1(%arg0: i32, %arg1: i32) -> (i32, i32) {
    %c0_i32 = arith.constant 0 : i32
    %c0_i32_0 = arith.constant 0 : i32
    return %c0_i32, %arg1 : i32, i32
  }
  func.func @transform_2(%arg0: i32, %arg1: i32) -> (i32, i32) {
    %c0_i32 = arith.constant 0 : i32
    %c0_i32_0 = arith.constant 0 : i32
    return %c0_i32, %arg1 : i32, i32
  }
  func.func @transform_3(%arg0: i32, %arg1: i32) -> (i32, i32) {
    %c0_i32 = arith.constant 0 : i32
    %c0_i32_0 = arith.constant 0 : i32
    return %arg1, %c0_i32 : i32, i32
  }
  func.func @transform_4(%arg0: i32, %arg1: i32) -> (i32, i32) {
    %c0_i32 = arith.constant 0 : i32
    %c0_i32_0 = arith.constant 0 : i32
    %c0_i32_1 = arith.constant 0 : i32
    return %c0_i32, %c0_i32_0 : i32, i32
  }
  func.func @transform_5(%arg0: i32, %arg1: i32) -> (i32, i32) {
    %c0_i32 = arith.constant 0 : i32
    %c0_i32_0 = arith.constant 0 : i32
    return %arg0, %c0_i32 : i32, i32
  }
}

</mosaic_0001>

<llo_original>
// kernel: tpu_custom_call.1
$region0: #{tpu_custom_call.1}
  #allocation0 [shape = 'u32[]', space=smem, size = 0x4, offset = 0x4, fixed_abs, tag = 'smem constant byte address 0x4 - core index']
  #allocation1 [shape = 'u32[144,128]{1,0:T(1,128)}', space=vmem, size = 0x12000, scoped, tag = 'internal scratch']
  #allocation2 [shape = 'f32[112,128]{1,0:T(8,128)}', space=vmem, size = 0xe000, scoped, tag = 'scratch operand']
  %s0 = inlined_call_operand.hbm [shape: bf16[448,128], index: 0, kind: input, shape index: {}]
  %s1 = inlined_call_operand.hbm [shape: bf16[128,512], index: 1, kind: input, shape index: {}]
  %s2 = inlined_call_operand.vmem [shape: f32[1,512], index: 2, kind: input, shape index: {}]
  %s3 = inlined_call_operand.hbm [shape: bf16[512,128], index: 3, kind: input, shape index: {}]
  %s4 = inlined_call_operand.vmem [shape: f32[1,128], index: 4, kind: input, shape index: {}]
  %s5 = inlined_call_operand.hbm [shape: f32[448,128], index: 5, kind: output, shape index: {}]
  %s6 = sld [smem:[#allocation0]]
  $region73: #{tpu_custom_call.1} parent=0
    _
  %s8 = ssub.s32 1, %s6
  %s9 = scalar_select 0, %s8, %s6
  $region1: #{tpu_custom_call.1} parent=0
    #allocation3 [shape = 'u8[57344]{0}', space=vmem, size = 0xe000, scoped, tag = 'input window, operand 0']
    #allocation4 [shape = 's32[2]{0}', space=sflag, size = 0x8, scoped, tag = 'scoped memory for tpu_custom_call.1']
    #allocation5 [shape = 's32[2]{0}', space=sflag, size = 0x8, scoped, tag = 'scoped memory for tpu_custom_call.1']
    #allocation6 [shape = 'u8[131072]{0}', space=vmem, size = 0x20000, scoped, tag = 'input window, operand 1, single buffered']
    #allocation7 [shape = 's32[1]{0}', space=sflag, size = 0x4, scoped, tag = 'scoped memory for tpu_custom_call.1']
    #allocation8 [shape = 'u8[131072]{0}', space=vmem, size = 0x20000, scoped, tag = 'input window, operand 3, single buffered']
    #allocation9 [shape = 'u8[114688]{0}', space=vmem, size = 0x1c000, scoped, tag = 'output window, operand 0']
    %10 = vsyncpa [#allocation4], 0
    %s11 = scalar_lea.sflag [#allocation4], 1
    %12 = vsyncpa %s11, 0
    %13 = vsyncpa [#allocation7], 0
    %14 = vsyncpa [#allocation5], 0
    %s15 = scalar_lea.sflag [#allocation5], 1
    %16 = vsyncpa %s15, 0
    loop: start=0, step=1, limit=6
    $region2: #{tpu_custom_call.1} parent=1 // loop_pre_header
      _
    $region3: #{tpu_custom_call.1} parent=1 // loop_header
      %s18 = sphi 0, %s22
      %p19 = scmp.ge.s32.totalorder %s18, 6
      %s25 = sphi 0, %s37
      %s26 = sphi 0, %s33
      %s27 = sphi 0, %s25
      %s28 = sphi 0, %s26
      %s29 = sphi 0, %s27
      %s30 = sphi 0, %s28
      %s40 = sphi 0, %s42
      %s43 = sphi 0, %s40
      %s44 = sphi 0, %s43
      %s60 = sphi 0, %s44
      %s66 = sphi 0, %s68
      %s69 = sphi 0, %s66
      %s70 = sphi 0, %s69
      %s86 = sphi 0, %s70
      %s92 = sphi 0, %s94
      %s95 = sphi 0, %s92
      %s96 = sphi 0, %s95
      %s112 = sphi 0, %s96
      %s118 = sphi 0, %s120
      %s121 = sphi 0, %s118
      %s122 = sphi 0, %s121
      %s138 = sphi 0, %s122
      %s142 = sphi 0, %s142
      %s144 = sphi 0, %s142
      %s145 = sphi 0, %s144
      %s159 = sphi 0, %s145
      %s165 = sphi 0, %s167
      %s168 = sphi 0, %s165
      %s169 = sphi 0, %s168
      %s185 = sphi 0, %s169
    $region4: #{tpu_custom_call.1} parent=1 // loop_header_branch
      %21 = sbr.rel (%p19) target = $region8
    $region5: #{tpu_custom_call.1} parent=1 // loop_body
      %s23 = ssub.s32 %s18, 1
      %s24 = ssub.s32 %s18, 2
      %s31 = sadd.s32 1, %s26
      %p32 = scmp.ge.s32.totalorder %s31, 1
      %s33 = scalar_select %p32, 0, %s31
      %s34 = sadd.s32 1, %s25
      %s35 = scalar_select %p32, %s34, %s25
      %p36 = scmp.ge.s32.totalorder %s35, 4
      %s37 = scalar_select %p36, 0, %s35
      %s38 = ssub.s32 %s25, %s37
      %p39 = scmp.eq.s32.totalorder %s38, 0
      %s41 = sadd.s32 %s40, 1
      %s42 = scalar_select %p39, %s40, %s41
      %p45 = pneg %p39
      %p46 = scmp.eq.s32.totalorder %s18, 3
      %p47 = por %p45, %p46
      %p48 = scmp.ne.s32.totalorder %s40, %s43
      %p49 = scmp.eq.s32.totalorder %s18, 0
      %p50 = por %p48, %p49
      %p51 = scmp.ne.s32.totalorder %s40, %s43
      %p52 = scmp.eq.s32.totalorder %s23, 3
      %p53 = por %p51, %p52
      %p54 = scmp.ne.s32.totalorder %s43, %s44
      %p55 = scmp.eq.s32.totalorder %s23, 0
      %p56 = por %p54, %p55
      %p57 = scmp.ne.s32.totalorder %s43, %s44
      %p58 = scmp.eq.s32.totalorder %s24, 3
      %p59 = por %p57, %p58
      %p61 = scmp.ne.s32.totalorder %s44, %s60
      %p62 = scmp.eq.s32.totalorder %s24, 0
      %p63 = por %p61, %p62
      %s64 = ssub.s32 %s26, %s33
      %p65 = scmp.eq.s32.totalorder %s64, 0
      %s67 = sadd.s32 %s66, 1
      %s68 = scalar_select %p65, %s66, %s67
      %p71 = pneg %p65
      %p72 = scmp.eq.s32.totalorder %s18, 3
      %p73 = por %p71, %p72
      %p74 = scmp.ne.s32.totalorder %s66, %s69
      %p75 = scmp.eq.s32.totalorder %s18, 0
      %p76 = por %p74, %p75
      %p77 = scmp.ne.s32.totalorder %s66, %s69
      %p78 = scmp.eq.s32.totalorder %s23, 3
      %p79 = por %p77, %p78
      %p80 = scmp.ne.s32.totalorder %s69, %s70
      %p81 = scmp.eq.s32.totalorder %s23, 0
      %p82 = por %p80, %p81
      %p83 = scmp.ne.s32.totalorder %s69, %s70
      %p84 = scmp.eq.s32.totalorder %s24, 3
      %p85 = por %p83, %p84
      %p87 = scmp.ne.s32.totalorder %s70, %s86
      %p88 = scmp.eq.s32.totalorder %s24, 0
      %p89 = por %p87, %p88
      %s90 = ssub.s32 %s26, %s33
      %p91 = scmp.eq.s32.totalorder %s90, 0
      %s93 = sadd.s32 %s92, 1
      %s94 = scalar_select %p91, %s92, %s93
      %p97 = pneg %p91
      %p98 = scmp.eq.s32.totalorder %s18, 3
      %p99 = por %p97, %p98
      %p100 = scmp.ne.s32.totalorder %s92, %s95
      %p101 = scmp.eq.s32.totalorder %s18, 0
      %p102 = por %p100, %p101
      %p103 = scmp.ne.s32.totalorder %s92, %s95
      %p104 = scmp.eq.s32.totalorder %s23, 3
      %p105 = por %p103, %p104
      %p106 = scmp.ne.s32.totalorder %s95, %s96
      %p107 = scmp.eq.s32.totalorder %s23, 0
      %p108 = por %p106, %p107
      %p109 = scmp.ne.s32.totalorder %s95, %s96
      %p110 = scmp.eq.s32.totalorder %s24, 3
      %p111 = por %p109, %p110
      %p113 = scmp.ne.s32.totalorder %s96, %s112
      %p114 = scmp.eq.s32.totalorder %s24, 0
      %p115 = por %p113, %p114
      %s116 = ssub.s32 %s26, %s33
      %p117 = scmp.eq.s32.totalorder %s116, 0
      %s119 = sadd.s32 %s118, 1
      %s120 = scalar_select %p117, %s118, %s119
      %p123 = pneg %p117
      %p124 = scmp.eq.s32.totalorder %s18, 3
      %p125 = por %p123, %p124
      %p126 = scmp.ne.s32.totalorder %s118, %s121
      %p127 = scmp.eq.s32.totalorder %s18, 0
      %p128 = por %p126, %p127
      %p129 = scmp.ne.s32.totalorder %s118, %s121
      %p130 = scmp.eq.s32.totalorder %s23, 3
      %p131 = por %p129, %p130
      %p132 = scmp.ne.s32.totalorder %s121, %s122
      %p133 = scmp.eq.s32.totalorder %s23, 0
      %p134 = por %p132, %p133
      %p135 = scmp.ne.s32.totalorder %s121, %s122
      %p136 = scmp.eq.s32.totalorder %s24, 3
      %p137 = por %p135, %p136
      %p139 = scmp.ne.s32.totalorder %s122, %s138
      %p140 = scmp.eq.s32.totalorder %s24, 0
      %p141 = por %p139, %p140
      %s143 = sadd.s32 %s142, 1
      %p146 = scmp.eq.s32.totalorder %s18, 3
      %p147 = scmp.ne.s32.totalorder %s142, %s144
      %p148 = scmp.eq.s32.totalorder %s18, 0
      %p149 = por %p147, %p148
      %p150 = scmp.ne.s32.totalorder %s142, %s144
      %p151 = scmp.eq.s32.totalorder %s23, 3
      %p152 = por %p150, %p151
      %p153 = scmp.ne.s32.totalorder %s144, %s145
      %p154 = scmp.eq.s32.totalorder %s23, 0
      %p155 = por %p153, %p154
      %p156 = scmp.ne.s32.totalorder %s144, %s145
      %p157 = scmp.eq.s32.totalorder %s24, 3
      %p158 = por %p156, %p157
      %p160 = scmp.ne.s32.totalorder %s145, %s159
      %p161 = scmp.eq.s32.totalorder %s24, 0
      %p162 = por %p160, %p161
      %s163 = ssub.s32 %s25, %s37
      %p164 = scmp.eq.s32.totalorder %s163, 0
      %s166 = sadd.s32 %s165, 1
      %s167 = scalar_select %p164, %s165, %s166
      %p170 = pneg %p164
      %p171 = scmp.eq.s32.totalorder %s18, 3
      %p172 = por %p170, %p171
      %p173 = scmp.ne.s32.totalorder %s165, %s168
      %p174 = scmp.eq.s32.totalorder %s18, 0
      %p175 = por %p173, %p174
      %p176 = scmp.ne.s32.totalorder %s165, %s168
      %p177 = scmp.eq.s32.totalorder %s23, 3
      %p178 = por %p176, %p177
      %p179 = scmp.ne.s32.totalorder %s168, %s169
      %p180 = scmp.eq.s32.totalorder %s23, 0
      %p181 = por %p179, %p180
      %p182 = scmp.ne.s32.totalorder %s168, %s169
      %p183 = scmp.eq.s32.totalorder %s24, 3
      %p184 = por %p182, %p183
      %p186 = scmp.ne.s32.totalorder %s169, %s185
      %p187 = scmp.eq.s32.totalorder %s24, 0
      %p188 = por %p186, %p187
      %p189 = scmp.le.s32.totalorder 1, %s18
      %p190 = scmp.lt.s32.totalorder %s18, 5
      %p191 = pnand %p189, %p190
      %p192 = pneg %p191
      // Predicated region
      $region9: #{tpu_custom_call.1} parent=5 // pred_check
        _
      $region10: #{tpu_custom_call.1} parent=5 // pred_check_branch
        %194 = sbr.rel (%p191) target = $region12
      $region11: #{tpu_custom_call.1} parent=5 // pred_region
        %s195 = ssub.s32 %s18, 1
        // Predicated region
        $region13: #{tpu_custom_call.1} parent=11 // pred_check
          %p196 = pneg %p82
        $region14: #{tpu_custom_call.1} parent=11 // pred_check_branch
          %198 = sbr.rel (%p196) target = $region16
        $region15: #{tpu_custom_call.1} parent=11 // pred_region
          %s199 = smul.u32 4, %s28
          %s201 = ssub.s32 4096, 4096
          %202 = vsyncadd [#allocation7], %s201
          %s203 = smul.addr %s199, 64
          %s204 = scalar_lea.hbm %s1, %s203
          %s205 = sshll.u32 [#allocation6], 4
          %s206 = int_to_ptr.vmem [resolvable:$true] %s205
          %211 = dma.hbm_to_vmem [thread:$0]  %s204, 4096, %s206, [#allocation7], 256, 256, 16
        $region16: #{tpu_custom_call.1} parent=11 // pred_fallthru
          _
        // Predicated region
        $region17: #{tpu_custom_call.1} parent=11 // pred_check
          %p212 = pneg %p108
        $region18: #{tpu_custom_call.1} parent=11 // pred_check_branch
          %214 = sbr.rel (%p212) target = $region20
        $region19: #{tpu_custom_call.1} parent=11 // pred_region
          %s215 = smul.u32 4, %s28
          %p216 = scmp.lt.s32.totalorder %s215, 3
          %s217 = scalar_select %p216, %s215, 3
          %s218 = scalar_lea.vmem %s2, %s217
          %s219 = smul.u32 4, %s28
        $region20: #{tpu_custom_call.1} parent=11 // pred_fallthru
          _
        // Predicated region
        $region21: #{tpu_custom_call.1} parent=11 // pred_check
          %p220 = pneg %p134
        $region22: #{tpu_custom_call.1} parent=11 // pred_check_branch
          %222 = sbr.rel (%p220) target = $region24
        $region23: #{tpu_custom_call.1} parent=11 // pred_region
          %s223 = smul.u32 64, %s28
          %s225 = ssub.s32 4096, 4096
          %226 = vsyncadd [#allocation7], %s225
          %s227 = smul.addr %s223, 64
          %s228 = scalar_lea.hbm %s3, %s227
          %s229 = sshll.u32 [#allocation8], 4
          %s230 = int_to_ptr.vmem [resolvable:$true] %s229
          %235 = dma.hbm_to_vmem [thread:$0]  %s228, 4096, %s230, [#allocation7], 64, 64, 4
        $region24: #{tpu_custom_call.1} parent=11 // pred_fallthru
          _
        // Predicated region
        $region25: #{tpu_custom_call.1} parent=11 // pred_check
          %p236 = pneg %p155
        $region26: #{tpu_custom_call.1} parent=11 // pred_check_branch
          %238 = sbr.rel (%p236) target = $region28
        $region27: #{tpu_custom_call.1} parent=11 // pred_region
          _
        $region28: #{tpu_custom_call.1} parent=11 // pred_fallthru
          _
      $region12: #{tpu_custom_call.1} parent=5 // pred_fallthru
        _
      %p239 = scmp.lt.s32.totalorder %s18, 4
      // Predicated region
      $region29: #{tpu_custom_call.1} parent=5 // pred_check
        %p240 = pneg %p239
      $region30: #{tpu_custom_call.1} parent=5 // pred_check_branch
        %242 = sbr.rel (%p240) target = $region32
      $region31: #{tpu_custom_call.1} parent=5 // pred_region
        // Predicated region
        $region33: #{tpu_custom_call.1} parent=31 // pred_check
          %p243 = pneg %p50
        $region34: #{tpu_custom_call.1} parent=31 // pred_check_branch
          %245 = sbr.rel (%p243) target = $region36
        $region35: #{tpu_custom_call.1} parent=31 // pred_region
          %s246 = sand.u32 %s40, 1
          %s247 = scalar_lea.sflag [#allocation4], %s246
          %s248 = sand.u32 %s40, 1
          %s249 = smul.addr %s248, 56
          %s250 = scalar_lea.vmem [#allocation3], %s249
          %s251 = smul.u32 14, %s25
          %s253 = ssub.s32 896, 896
          %254 = vsyncadd %s247, %s253
          %s255 = smul.addr %s251, 64
          %s256 = scalar_lea.hbm %s0, %s255
          %s257 = sshll.u32 %s250, 4
          %s258 = int_to_ptr.vmem [resolvable:$true] %s257
          %263 = dma.hbm_to_vmem [thread:$0]  %s256, 896, %s258, %s247, 64, 64, 4
        $region36: #{tpu_custom_call.1} parent=31 // pred_fallthru
          _
      $region32: #{tpu_custom_call.1} parent=5 // pred_fallthru
        _
      %p264 = scmp.le.s32.totalorder 1, %s18
      %p265 = scmp.lt.s32.totalorder %s18, 5
      %p266 = pnand %p264, %p265
      %p267 = pneg %p266
      // Predicated region
      $region37: #{tpu_custom_call.1} parent=5 // pred_check
        _
      $region38: #{tpu_custom_call.1} parent=5 // pred_check_branch
        %269 = sbr.rel (%p266) target = $region40
      $region39: #{tpu_custom_call.1} parent=5 // pred_region
        %s270 = ssub.s32 %s18, 1
        %s271 = sand.u32 %s43, 1
        %s272 = scalar_lea.sflag [#allocation4], %s271
        %s273 = sand.u32 %s43, 1
        %s274 = smul.addr %s273, 56
        %s275 = scalar_lea.vmem [#allocation3], %s274
        // Predicated region
        $region41: #{tpu_custom_call.1} parent=39 // pred_check
          %p276 = pneg %p56
        $region42: #{tpu_custom_call.1} parent=39 // pred_check_branch
          %278 = sbr.rel (%p276) target = $region44
        $region43: #{tpu_custom_call.1} parent=39 // pred_region
          %279 = dma.done %s272, 896
        $region44: #{tpu_custom_call.1} parent=39 // pred_fallthru
          _
        // Predicated region
        $region45: #{tpu_custom_call.1} parent=39 // pred_check
          %p280 = pneg %p82
        $region46: #{tpu_custom_call.1} parent=39 // pred_check_branch
          %282 = sbr.rel (%p280) target = $region48
        $region47: #{tpu_custom_call.1} parent=39 // pred_region
          %283 = dma.done [#allocation7], 4096
        $region48: #{tpu_custom_call.1} parent=39 // pred_fallthru
          _
        // Predicated region
        $region49: #{tpu_custom_call.1} parent=39 // pred_check
          %p284 = pneg %p134
        $region50: #{tpu_custom_call.1} parent=39 // pred_check_branch
          %286 = sbr.rel (%p284) target = $region52
        $region51: #{tpu_custom_call.1} parent=39 // pred_region
          %287 = dma.done [#allocation7], 4096
        $region52: #{tpu_custom_call.1} parent=39 // pred_fallthru
          _
        %s288 = sand.u32 %s43, 1
        %s289 = scalar_lea.sflag [#allocation4], %s288
        %s290 = sand.u32 %s43, 1
        %s291 = smul.addr %s290, 56
        %s292 = scalar_lea.vmem [#allocation3], %s291
        %p293 = pneg %p56
        %p294 = pneg %p53
        %p295 = pneg %p82
        %p296 = pneg %p79
        %s297 = smul.u32 4, %s28
        %p298 = scmp.lt.s32.totalorder %s297, 3
        %s299 = scalar_select %p298, %s297, 3
        %s300 = scalar_lea.vmem %s2, %s299
        %p301 = pneg %p108
        %p302 = pneg %p105
        %p303 = pneg %p134
        %p304 = pneg %p131
        %p305 = pneg %p155
        %p306 = pneg %p152
        %p307 = pneg %p181
        %p308 = pneg %p178
        %s309 = sand.u32 %s168, 1
        %s310 = scalar_lea.sflag [#allocation5], %s309
        %s311 = sand.u32 %s168, 1
        %s312 = smul.addr %s311, 112
        %s313 = scalar_lea.vmem [#allocation9], %s312
        %s314 = smul.u32 14, %s27
        %s315 = smul.u32 4, %s28
        %s316 = smul.u32 4, %s28
        %p317 = scmp.lt.s32.totalorder %s316, 3
        %s318 = scalar_select %p317, %s316, 3
        %s319 = scalar_lea.vmem %s2, %s318
        %s320 = smul.u32 4, %s28
        %s321 = smul.u32 64, %s28
        %s322 = smul.u32 14, %s27
        %p324 = scmp.eq.s32.totalorder %s28, 0
        // Predicated region
        $region53: #{tpu_custom_call.1} parent=39 // pred_check
          %p325 = pneg %p324
        $region54: #{tpu_custom_call.1} parent=39 // pred_check_branch
          %327 = sbr.rel (%p325) target = $region56
        $region55: #{tpu_custom_call.1} parent=39 // pred_region
          %328 = vst [vmem:[#allocation2] sm:$0xff] 0.0
          %329 = vst [vmem:[#allocation2 + $0x8] sm:$0xff] 0.0
          %330 = vst [vmem:[#allocation2 + $0x10] sm:$0xff] 0.0
          %331 = vst [vmem:[#allocation2 + $0x18] sm:$0xff] 0.0
          %332 = vst [vmem:[#allocation2 + $0x20] sm:$0xff] 0.0
          %333 = vst [vmem:[#allocation2 + $0x28] sm:$0xff] 0.0
          %334 = vst [vmem:[#allocation2 + $0x30] sm:$0xff] 0.0
          %335 = vst [vmem:[#allocation2 + $0x38] sm:$0xff] 0.0
          %336 = vst [vmem:[#allocation2 + $0x40] sm:$0xff] 0.0
          %337 = vst [vmem:[#allocation2 + $0x48] sm:$0xff] 0.0
          %338 = vst [vmem:[#allocation2 + $0x50] sm:$0xff] 0.0
          %339 = vst [vmem:[#allocation2 + $0x58] sm:$0xff] 0.0
          %340 = vst [vmem:[#allocation2 + $0x60] sm:$0xff] 0.0
          %341 = vst [vmem:[#allocation2 + $0x68] sm:$0xff] 0.0
        $region56: #{tpu_custom_call.1} parent=39 // pred_fallthru
          _
        %v342 = vld [vmem:[%s275] sm:$0xf]
        %v343 = vld [vmem:[%s275 + $0x4] sm:$0xf]
        %v344 = vld [vmem:[%s275 + $0x8] sm:$0xf]
        %v345 = vld [vmem:[%s275 + $0xc] sm:$0xf]
        %v346 = vld [vmem:[%s275 + $0x10] sm:$0xf]
        %v347 = vld [vmem:[%s275 + $0x14] sm:$0xf]
        %v348 = vld [vmem:[%s275 + $0x18] sm:$0xf]
        %v349 = vld [vmem:[%s275 + $0x1c] sm:$0xf]
        %v350 = vld [vmem:[%s275 + $0x20] sm:$0xf]
        %v351 = vld [vmem:[%s275 + $0x24] sm:$0xf]
        %v352 = vld [vmem:[%s275 + $0x28] sm:$0xf]
        %v353 = vld [vmem:[%s275 + $0x2c] sm:$0xf]
        %v354 = vld [vmem:[%s275 + $0x30] sm:$0xf]
        %v355 = vld [vmem:[%s275 + $0x34] sm:$0xf]
        %v356 = vld [vmem:[#allocation6] sm:$0xff]
        %v357 = vld [vmem:[#allocation6 + $0x8] sm:$0xff]
        %v358 = vld [vmem:[#allocation6 + $0x10] sm:$0xff]
        %v359 = vld [vmem:[#allocation6 + $0x18] sm:$0xff]
        %v360 = vld [vmem:[#allocation6 + $0x20] sm:$0xff]
        %v361 = vld [vmem:[#allocation6 + $0x28] sm:$0xff]
        %v362 = vld [vmem:[#allocation6 + $0x30] sm:$0xff]
        %v363 = vld [vmem:[#allocation6 + $0x38] sm:$0xff]
        %v364 = vld [vmem:[#allocation6 + $0x40] sm:$0xff]
        %v365 = vld [vmem:[#allocation6 + $0x48] sm:$0xff]
        %v366 = vld [vmem:[#allocation6 + $0x50] sm:$0xff]
        %v367 = vld [vmem:[#allocation6 + $0x58] sm:$0xff]
        %v368 = vld [vmem:[#allocation6 + $0x60] sm:$0xff]
        %v369 = vld [vmem:[#allocation6 + $0x68] sm:$0xff]
        %v370 = vld [vmem:[#allocation6 + $0x70] sm:$0xff]
        %v371 = vld [vmem:[#allocation6 + $0x78] sm:$0xff]
        %v372 = vld [vmem:[#allocation6 + $0x80] sm:$0xff]
        %v373 = vld [vmem:[#allocation6 + $0x88] sm:$0xff]
        %v374 = vld [vmem:[#allocation6 + $0x90] sm:$0xff]
        %v375 = vld [vmem:[#allocation6 + $0x98] sm:$0xff]
        %v376 = vld [vmem:[#allocation6 + $0xa0] sm:$0xff]
        %v377 = vld [vmem:[#allocation6 + $0xa8] sm:$0xff]
        %v378 = vld [vmem:[#allocation6 + $0xb0] sm:$0xff]
        %v379 = vld [vmem:[#allocation6 + $0xb8] sm:$0xff]
        %v380 = vld [vmem:[#allocation6 + $0xc0] sm:$0xff]
        %v381 = vld [vmem:[#allocation6 + $0xc8] sm:$0xff]
        %v382 = vld [vmem:[#allocation6 + $0xd0] sm:$0xff]
        %v383 = vld [vmem:[#allocation6 + $0xd8] sm:$0xff]
        %v384 = vld [vmem:[#allocation6 + $0xe0] sm:$0xff]
        %v385 = vld [vmem:[#allocation6 + $0xe8] sm:$0xff]
        %v386 = vld [vmem:[#allocation6 + $0xf0] sm:$0xff]
        %v387 = vld [vmem:[#allocation6 + $0xf8] sm:$0xff]
        %v388 = vld [vmem:[%s319] sm:$0xf]
        %v390 = vlaneseq
        %v391 = vshrl.u32 %v390, 7
        %v392 = vsub.s32 0, %v391
        %v393 = vrot.slane %v388, %v392
        %v394 = vlaneseq
        %v395 = vshrl.u32 %v394, 7
        %v396 = vsub.s32 1, %v395
        %v397 = vrot.slane %v388, %v396
        %v398 = vlaneseq
        %v399 = vshrl.u32 %v398, 7
        %v400 = vsub.s32 2, %v399
        %v401 = vrot.slane %v388, %v400
        %v402 = vlaneseq
        %v403 = vshrl.u32 %v402, 7
        %v404 = vsub.s32 3, %v403
        %v405 = vrot.slane %v388, %v404
        %v424 = vunpack.c.l.b16 %v342
        %v425 = vunpack.c.l.b16 %v343
        %v426 = vunpack.c.l.b16 %v344
        %v427 = vunpack.c.l.b16 %v345
        %v428 = vunpack.c.l.b16 %v346
        %v429 = vunpack.c.l.b16 %v347
        %v430 = vunpack.c.l.b16 %v348
        %v431 = vunpack.c.l.b16 %v349
        %v432 = vunpack.c.l.b16 %v350
        %v433 = vunpack.c.l.b16 %v351
        %v434 = vunpack.c.l.b16 %v352
        %v435 = vunpack.c.l.b16 %v353
        %v436 = vunpack.c.l.b16 %v354
        %v437 = vunpack.c.l.b16 %v355
        %v438 = vpack.c.b16 %v425, %v424
        %v439 = vpack.c.b16 %v427, %v426
        %v440 = vpack.c.b16 %v429, %v428
        %v441 = vpack.c.b16 %v431, %v430
        %v442 = vpack.c.b16 %v433, %v432
        %v443 = vpack.c.b16 %v435, %v434
        %v444 = vpack.c.b16 %v437, %v436
        %v484 = vunpack.c.l.b16 %v356
        %v485 = vunpack.c.h.b16 %v356
        %v486 = vunpack.c.l.b16 %v357
        %v487 = vunpack.c.h.b16 %v357
        %v488 = vunpack.c.l.b16 %v358
        %v489 = vunpack.c.h.b16 %v358
        %v490 = vunpack.c.l.b16 %v359
        %v491 = vunpack.c.h.b16 %v359
        %v492 = vunpack.c.l.b16 %v360
        %v493 = vunpack.c.h.b16 %v360
        %v494 = vunpack.c.l.b16 %v361
        %v495 = vunpack.c.h.b16 %v361
        %v496 = vunpack.c.l.b16 %v362
        %v497 = vunpack.c.h.b16 %v362
        %v498 = vunpack.c.l.b16 %v363
        %v499 = vunpack.c.h.b16 %v363
        %v500 = vunpack.c.l.b16 %v364
        %v501 = vunpack.c.h.b16 %v364
        %v502 = vunpack.c.l.b16 %v365
        %v503 = vunpack.c.h.b16 %v365
        %v504 = vunpack.c.l.b16 %v366
        %v505 = vunpack.c.h.b16 %v366
        %v506 = vunpack.c.l.b16 %v367
        %v507 = vunpack.c.h.b16 %v367
        %v508 = vunpack.c.l.b16 %v368
        %v509 = vunpack.c.h.b16 %v368
        %v510 = vunpack.c.l.b16 %v369
        %v511 = vunpack.c.h.b16 %v369
        %v512 = vunpack.c.l.b16 %v370
        %v513 = vunpack.c.h.b16 %v370
        %v514 = vunpack.c.l.b16 %v371
        %v515 = vunpack.c.h.b16 %v371
        %v516 = vunpack.c.l.b16 %v372
        %v517 = vunpack.c.h.b16 %v372
        %v518 = vunpack.c.l.b16 %v373
        %v519 = vunpack.c.h.b16 %v373
        %v520 = vunpack.c.l.b16 %v374
        %v521 = vunpack.c.h.b16 %v374
        %v522 = vunpack.c.l.b16 %v375
        %v523 = vunpack.c.h.b16 %v375
        %v524 = vunpack.c.l.b16 %v376
        %v525 = vunpack.c.h.b16 %v376
        %v526 = vunpack.c.l.b16 %v377
        %v527 = vunpack.c.h.b16 %v377
        %v528 = vunpack.c.l.b16 %v378
        %v529 = vunpack.c.h.b16 %v378
        %v530 = vunpack.c.l.b16 %v379
        %v531 = vunpack.c.h.b16 %v379
        %v532 = vunpack.c.l.b16 %v380
        %v533 = vunpack.c.h.b16 %v380
        %v534 = vunpack.c.l.b16 %v381
        %v535 = vunpack.c.h.b16 %v381
        %v536 = vunpack.c.l.b16 %v382
        %v537 = vunpack.c.h.b16 %v382
        %v538 = vunpack.c.l.b16 %v383
        %v539 = vunpack.c.h.b16 %v383
        %v540 = vunpack.c.l.b16 %v384
        %v541 = vunpack.c.h.b16 %v384
        %v542 = vunpack.c.l.b16 %v385
        %v543 = vunpack.c.h.b16 %v385
        %v544 = vunpack.c.l.b16 %v386
        %v545 = vunpack.c.h.b16 %v386
        %v546 = vunpack.c.l.b16 %v387
        %v547 = vunpack.c.h.b16 %v387
        %v548 = vpack.c.b16 %v488, %v484
        %v549 = vpack.c.b16 %v489, %v485
        %v550 = vpack.c.b16 %v490, %v486
        %v551 = vpack.c.b16 %v491, %v487
        %v552 = vpack.c.b16 %v496, %v492
        %v553 = vpack.c.b16 %v497, %v493
        %v554 = vpack.c.b16 %v498, %v494
        %v555 = vpack.c.b16 %v499, %v495
        %v556 = vpack.c.b16 %v504, %v500
        %v557 = vpack.c.b16 %v505, %v501
        %v558 = vpack.c.b16 %v506, %v502
        %v559 = vpack.c.b16 %v507, %v503
        %v560 = vpack.c.b16 %v512, %v508
        %v561 = vpack.c.b16 %v513, %v509
        %v562 = vpack.c.b16 %v514, %v510
        %v563 = vpack.c.b16 %v515, %v511
        %v564 = vpack.c.b16 %v520, %v516
        %v565 = vpack.c.b16 %v521, %v517
        %v566 = vpack.c.b16 %v522, %v518
        %v567 = vpack.c.b16 %v523, %v519
        %v568 = vpack.c.b16 %v528, %v524
        %v569 = vpack.c.b16 %v529, %v525
        %v570 = vpack.c.b16 %v530, %v526
        %v571 = vpack.c.b16 %v531, %v527
        %v572 = vpack.c.b16 %v536, %v532
        %v573 = vpack.c.b16 %v537, %v533
        %v574 = vpack.c.b16 %v538, %v534
        %v575 = vpack.c.b16 %v539, %v535
        %v576 = vpack.c.b16 %v544, %v540
        %v577 = vpack.c.b16 %v545, %v541
        %v578 = vpack.c.b16 %v546, %v542
        %v579 = vpack.c.b16 %v547, %v543
        %612 = vmatprep.subr.bf16.mxu0 %v549
        %613 = vmatpush1.bf16.msra.mxu0 %v548
        %614 = vmatprep.subr.bf16.mxu0 %v553
        %615 = vmatpush1.bf16.msra.mxu0 %v552
        %616 = vmatprep.subr.bf16.mxu0 %v557
        %617 = vmatpush1.bf16.msra.mxu0 %v556
        %618 = vmatprep.subr.bf16.mxu0 %v561
        %619 = vmatpush1.bf16.msra.mxu0 %v560
        %620 = vmatprep.subr.bf16.mxu0 %v565
        %621 = vmatpush1.bf16.msra.mxu0 %v564
        %622 = vmatprep.subr.bf16.mxu0 %v569
        %623 = vmatpush1.bf16.msra.mxu0 %v568
        %624 = vmatprep.subr.bf16.mxu0 %v573
        %625 = vmatpush1.bf16.msra.mxu0 %v572
        %626 = vmatprep.subr.bf16.mxu0 %v577
        %627 = vmatpush1.bf16.msra.mxu0 %v576
        %628 = vmatprep.subr.bf16.mxu0 0
        %629 = vmatpush1.bf16.msra.mxu0 0
        %630 = vmatprep.subr.bf16.mxu0 0
        %631 = vmatpush1.bf16.msra.mxu0 0
        %632 = vmatprep.subr.bf16.mxu0 0
        %633 = vmatpush1.bf16.msra.mxu0 0
        %634 = vmatprep.subr.bf16.mxu0 0
        %635 = vmatpush1.bf16.msra.mxu0 0
        %636 = vmatprep.subr.bf16.mxu0 0
        %637 = vmatpush1.bf16.msra.mxu0 0
        %638 = vmatprep.subr.bf16.mxu0 0
        %639 = vmatpush1.bf16.msra.mxu0 0
        %640 = vmatprep.subr.bf16.mxu0 0
        %641 = vmatpush1.bf16.msra.mxu0 0
        %642 = vmatprep.subr.bf16.mxu0 0
        %643 = vmatpush1.bf16.msra.mxu0 0
        %644 = vmatprep.mubr.bf16.mxu0 0
        %645 = vmatmul.mubr.bf16.gmra.mrb[0].mxu0 %v438
        %v646 = vpop.f32.mrb[0].mxu0
        %v647 = vadd.f32 %v393, %v646
        %v648 = vpop.f32.mrb[0].mxu0
        %v649 = vadd.f32 %v397, %v648
        %v650 = vpop.f32.mrb[0].mxu0
        %v651 = vadd.f32 %v393, %v650
        %v652 = vpop.f32.mrb[0].mxu0
        %v653 = vadd.f32 %v397, %v652
        %654 = vmatprep.mubr.bf16.mxu0 0
        %655 = vmatmul.mubr.bf16.gmra.mrb[0].mxu0 %v439
        %v656 = vpop.f32.mrb[0].mxu0
        %v657 = vadd.f32 %v393, %v656
        %v658 = vpop.f32.mrb[0].mxu0
        %v659 = vadd.f32 %v397, %v658
        %v660 = vpop.f32.mrb[0].mxu0
        %v661 = vadd.f32 %v393, %v660
        %v662 = vpop.f32.mrb[0].mxu0
        %v663 = vadd.f32 %v397, %v662
        %664 = vmatprep.mubr.bf16.mxu0 0
        %665 = vmatmul.mubr.bf16.gmra.mrb[0].mxu0 %v440
        %v666 = vpop.f32.mrb[0].mxu0
        %v667 = vadd.f32 %v393, %v666
        %v668 = vpop.f32.mrb[0].mxu0
        %v669 = vadd.f32 %v397, %v668
        %v670 = vpop.f32.mrb[0].mxu0
        %v671 = vadd.f32 %v393, %v670
        %v672 = vpop.f32.mrb[0].mxu0
        %v673 = vadd.f32 %v397, %v672
        %674 = vmatprep.mubr.bf16.mxu0 0
        %675 = vmatmul.mubr.bf16.gmra.mrb[0].mxu0 %v441
        %v676 = vpop.f32.mrb[0].mxu0
        %v677 = vadd.f32 %v393, %v676
        %v678 = vpop.f32.mrb[0].mxu0
        %v679 = vadd.f32 %v397, %v678
        %v680 = vpop.f32.mrb[0].mxu0
        %v681 = vadd.f32 %v393, %v680
        %v682 = vpop.f32.mrb[0].mxu0
        %v683 = vadd.f32 %v397, %v682
        %684 = vmatprep.mubr.bf16.mxu0 0
        %685 = vmatmul.mubr.bf16.gmra.mrb[0].mxu0 %v442
        %v686 = vpop.f32.mrb[0].mxu0
        %v687 = vadd.f32 %v393, %v686
        %v688 = vpop.f32.mrb[0].mxu0
        %v689 = vadd.f32 %v397, %v688
        %v690 = vpop.f32.mrb[0].mxu0
        %v691 = vadd.f32 %v393, %v690
        %v692 = vpop.f32.mrb[0].mxu0
        %v693 = vadd.f32 %v397, %v692
        %694 = vmatprep.mubr.bf16.mxu0 0
        %695 = vmatmul.mubr.bf16.gmra.mrb[0].mxu0 %v443
        %v696 = vpop.f32.mrb[0].mxu0
        %v697 = vadd.f32 %v393, %v696
        %v698 = vpop.f32.mrb[0].mxu0
        %v699 = vadd.f32 %v397, %v698
        %v700 = vpop.f32.mrb[0].mxu0
        %v701 = vadd.f32 %v393, %v700
        %v702 = vpop.f32.mrb[0].mxu0
        %v703 = vadd.f32 %v397, %v702
        %704 = vmatprep.mubr.bf16.mxu0 0
        %705 = vmatmul.mubr.bf16.gmra.mrb[0].mxu0 %v444
        %v706 = vpop.f32.mrb[0].mxu0
        %v707 = vadd.f32 %v393, %v706
        %v708 = vpop.f32.mrb[0].mxu0
        %v709 = vadd.f32 %v397, %v708
        %v710 = vpop.f32.mrb[0].mxu0
        %v711 = vadd.f32 %v393, %v710
        %v712 = vpop.f32.mrb[0].mxu0
        %v713 = vadd.f32 %v397, %v712
        %714 = vdwg.mxu0
        %715 = vmatprep.subr.bf16.mxu0 %v551
        %716 = vmatpush1.bf16.msra.mxu0 %v550
        %717 = vmatprep.subr.bf16.mxu0 %v555
        %718 = vmatpush1.bf16.msra.mxu0 %v554
        %719 = vmatprep.subr.bf16.mxu0 %v559
        %720 = vmatpush1.bf16.msra.mxu0 %v558
        %721 = vmatprep.subr.bf16.mxu0 %v563
        %722 = vmatpush1.bf16.msra.mxu0 %v562
        %723 = vmatprep.subr.bf16.mxu0 %v567
        %724 = vmatpush1.bf16.msra.mxu0 %v566
        %725 = vmatprep.subr.bf16.mxu0 %v571
        %726 = vmatpush1.bf16.msra.mxu0 %v570
        %727 = vmatprep.subr.bf16.mxu0 %v575
        %728 = vmatpush1.bf16.msra.mxu0 %v574
        %729 = vmatprep.subr.bf16.mxu0 %v579
        %730 = vmatpush1.bf16.msra.mxu0 %v578
        %731 = vmatprep.subr.bf16.mxu0 0
        %732 = vmatpush1.bf16.msra.mxu0 0
        %733 = vmatprep.subr.bf16.mxu0 0
        %734 = vmatpush1.bf16.msra.mxu0 0
        %735 = vmatprep.subr.bf16.mxu0 0
        %736 = vmatpush1.bf16.msra.mxu0 0
        %737 = vmatprep.subr.bf16.mxu0 0
        %738 = vmatpush1.bf16.msra.mxu0 0
        %739 = vmatprep.subr.bf16.mxu0 0
        %740 = vmatpush1.bf16.msra.mxu0 0
        %741 = vmatprep.subr.bf16.mxu0 0
        %742 = vmatpush1.bf16.msra.mxu0 0
        %743 = vmatprep.subr.bf16.mxu0 0
        %744 = vmatpush1.bf16.msra.mxu0 0
        %745 = vmatprep.subr.bf16.mxu0 0
        %746 = vmatpush1.bf16.msra.mxu0 0
        %747 = vmatprep.mubr.bf16.mxu0 0
        %748 = vmatmul.mubr.bf16.gmra.mrb[0].mxu0 %v438
        %v749 = vpop.f32.mrb[0].mxu0
        %v750 = vadd.f32 %v401, %v749
        %v751 = vpop.f32.mrb[0].mxu0
        %v752 = vadd.f32 %v405, %v751
        %v753 = vpop.f32.mrb[0].mxu0
        %v754 = vadd.f32 %v401, %v753
        %v755 = vpop.f32.mrb[0].mxu0
        %v756 = vadd.f32 %v405, %v755
        %757 = vmatprep.mubr.bf16.mxu0 0
        %758 = vmatmul.mubr.bf16.gmra.mrb[0].mxu0 %v439
        %v759 = vpop.f32.mrb[0].mxu0
        %v760 = vadd.f32 %v401, %v759
        %v761 = vpop.f32.mrb[0].mxu0
        %v762 = vadd.f32 %v405, %v761
        %v763 = vpop.f32.mrb[0].mxu0
        %v764 = vadd.f32 %v401, %v763
        %v765 = vpop.f32.mrb[0].mxu0
        %v766 = vadd.f32 %v405, %v765
        %767 = vmatprep.mubr.bf16.mxu0 0
        %768 = vmatmul.mubr.bf16.gmra.mrb[0].mxu0 %v440
        %v769 = vpop.f32.mrb[0].mxu0
        %v770 = vadd.f32 %v401, %v769
        %v771 = vpop.f32.mrb[0].mxu0
        %v772 = vadd.f32 %v405, %v771
        %v773 = vpop.f32.mrb[0].mxu0
        %v774 = vadd.f32 %v401, %v773
        %v775 = vpop.f32.mrb[0].mxu0
        %v776 = vadd.f32 %v405, %v775
        %777 = vmatprep.mubr.bf16.mxu0 0
        %778 = vmatmul.mubr.bf16.gmra.mrb[0].mxu0 %v441
        %v779 = vpop.f32.mrb[0].mxu0
        %v780 = vadd.f32 %v401, %v779
        %v781 = vpop.f32.mrb[0].mxu0
        %v782 = vadd.f32 %v405, %v781
        %v783 = vpop.f32.mrb[0].mxu0
        %v784 = vadd.f32 %v401, %v783
        %v785 = vpop.f32.mrb[0].mxu0
        %v786 = vadd.f32 %v405, %v785
        %787 = vmatprep.mubr.bf16.mxu0 0
        %788 = vmatmul.mubr.bf16.gmra.mrb[0].mxu0 %v442
        %v789 = vpop.f32.mrb[0].mxu0
        %v790 = vadd.f32 %v401, %v789
        %v791 = vpop.f32.mrb[0].mxu0
        %v792 = vadd.f32 %v405, %v791
        %v793 = vpop.f32.mrb[0].mxu0
        %v794 = vadd.f32 %v401, %v793
        %v795 = vpop.f32.mrb[0].mxu0
        %v796 = vadd.f32 %v405, %v795
        %797 = vmatprep.mubr.bf16.mxu0 0
        %798 = vmatmul.mubr.bf16.gmra.mrb[0].mxu0 %v443
        %v799 = vpop.f32.mrb[0].mxu0
        %v800 = vadd.f32 %v401, %v799
        %v801 = vpop.f32.mrb[0].mxu0
        %v802 = vadd.f32 %v405, %v801
        %v803 = vpop.f32.mrb[0].mxu0
        %v804 = vadd.f32 %v401, %v803
        %v805 = vpop.f32.mrb[0].mxu0
        %v806 = vadd.f32 %v405, %v805
        %807 = vmatprep.mubr.bf16.mxu0 0
        %808 = vmatmul.mubr.bf16.gmra.mrb[0].mxu0 %v444
        %v809 = vpop.f32.mrb[0].mxu0
        %v810 = vadd.f32 %v401, %v809
        %v811 = vpop.f32.mrb[0].mxu0
        %v812 = vadd.f32 %v405, %v811
        %v813 = vpop.f32.mrb[0].mxu0
        %v814 = vadd.f32 %v401, %v813
        %v815 = vpop.f32.mrb[0].mxu0
        %v816 = vadd.f32 %v405, %v815
        %817 = vdwg.mxu0
        %v818 = vmul.f32 %v647, 0.5
        %v819 = vmul.f32 %v649, 0.5
        %v820 = vmul.f32 %v750, 0.5
        %v821 = vmul.f32 %v752, 0.5
        %v822 = vmul.f32 %v651, 0.5
        %v823 = vmul.f32 %v653, 0.5
        %v824 = vmul.f32 %v754, 0.5
        %v825 = vmul.f32 %v756, 0.5
        %v826 = vmul.f32 %v657, 0.5
        %v827 = vmul.f32 %v659, 0.5
        %v828 = vmul.f32 %v760, 0.5
        %v829 = vmul.f32 %v762, 0.5
        %v830 = vmul.f32 %v661, 0.5
        %v831 = vmul.f32 %v663, 0.5
        %v832 = vmul.f32 %v764, 0.5
        %v833 = vmul.f32 %v766, 0.5
        %v834 = vmul.f32 %v667, 0.5
        %v835 = vmul.f32 %v669, 0.5
        %v836 = vmul.f32 %v770, 0.5
        %v837 = vmul.f32 %v772, 0.5
        %v838 = vmul.f32 %v671, 0.5
        %v839 = vmul.f32 %v673, 0.5
        %v840 = vmul.f32 %v774, 0.5
        %v841 = vmul.f32 %v776, 0.5
        %v842 = vmul.f32 %v677, 0.5
        %v843 = vmul.f32 %v679, 0.5
        %v844 = vmul.f32 %v780, 0.5
        %v845 = vmul.f32 %v782, 0.5
        %v846 = vmul.f32 %v681, 0.5
        %v847 = vmul.f32 %v683, 0.5
        %v848 = vmul.f32 %v784, 0.5
        %v849 = vmul.f32 %v786, 0.5
        %v850 = vmul.f32 %v687, 0.5
        %v851 = vmul.f32 %v689, 0.5
        %v852 = vmul.f32 %v790, 0.5
        %v853 = vmul.f32 %v792, 0.5
        %v854 = vmul.f32 %v691, 0.5
        %v855 = vmul.f32 %v693, 0.5
        %v856 = vmul.f32 %v794, 0.5
        %v857 = vmul.f32 %v796, 0.5
        %v858 = vmul.f32 %v697, 0.5
        %v859 = vmul.f32 %v699, 0.5
        %v860 = vmul.f32 %v800, 0.5
        %v861 = vmul.f32 %v802, 0.5
        %v862 = vmul.f32 %v701, 0.5
        %v863 = vmul.f32 %v703, 0.5
        %v864 = vmul.f32 %v804, 0.5
        %v865 = vmul.f32 %v806, 0.5
        %v866 = vmul.f32 %v707, 0.5
        %v867 = vmul.f32 %v709, 0.5
        %v868 = vmul.f32 %v810, 0.5
        %v869 = vmul.f32 %v812, 0.5
        %v870 = vmul.f32 %v711, 0.5
        %v871 = vmul.f32 %v713, 0.5
        %v872 = vmul.f32 %v814, 0.5
        %v873 = vmul.f32 %v816, 0.5
        %v874 = vmul.f32 %v647, %v647
        %v875 = vmul.f32 %v649, %v649
        %v876 = vmul.f32 %v750, %v750
        %v877 = vmul.f32 %v752, %v752
        %v878 = vmul.f32 %v651, %v651
        %v879 = vmul.f32 %v653, %v653
        %v880 = vmul.f32 %v754, %v754
        %v881 = vmul.f32 %v756, %v756
        %v882 = vmul.f32 %v657, %v657
        %v883 = vmul.f32 %v659, %v659
        %v884 = vmul.f32 %v760, %v760
        %v885 = vmul.f32 %v762, %v762
        %v886 = vmul.f32 %v661, %v661
        %v887 = vmul.f32 %v663, %v663
        %v888 = vmul.f32 %v764, %v764
        %v889 = vmul.f32 %v766, %v766
        %v890 = vmul.f32 %v667, %v667
        %v891 = vmul.f32 %v669, %v669
        %v892 = vmul.f32 %v770, %v770
        %v893 = vmul.f32 %v772, %v772
        %v894 = vmul.f32 %v671, %v671
        %v895 = vmul.f32 %v673, %v673
        %v896 = vmul.f32 %v774, %v774
        %v897 = vmul.f32 %v776, %v776
        %v898 = vmul.f32 %v677, %v677
        %v899 = vmul.f32 %v679, %v679
        %v900 = vmul.f32 %v780, %v780
        %v901 = vmul.f32 %v782, %v782
        %v902 = vmul.f32 %v681, %v681
        %v903 = vmul.f32 %v683, %v683
        %v904 = vmul.f32 %v784, %v784
        %v905 = vmul.f32 %v786, %v786
        %v906 = vmul.f32 %v687, %v687
        %v907 = vmul.f32 %v689, %v689
        %v908 = vmul.f32 %v790, %v790
        %v909 = vmul.f32 %v792, %v792
        %v910 = vmul.f32 %v691, %v691
        %v911 = vmul.f32 %v693, %v693
        %v912 = vmul.f32 %v794, %v794
        %v913 = vmul.f32 %v796, %v796
        %v914 = vmul.f32 %v697, %v697
        %v915 = vmul.f32 %v699, %v699
        %v916 = vmul.f32 %v800, %v800
        %v917 = vmul.f32 %v802, %v802
        %v918 = vmul.f32 %v701, %v701
        %v919 = vmul.f32 %v703, %v703
        %v920 = vmul.f32 %v804, %v804
        %v921 = vmul.f32 %v806, %v806
        %v922 = vmul.f32 %v707, %v707
        %v923 = vmul.f32 %v709, %v709
        %v924 = vmul.f32 %v810, %v810
        %v925 = vmul.f32 %v812, %v812
        %v926 = vmul.f32 %v711, %v711
        %v927 = vmul.f32 %v713, %v713
        %v928 = vmul.f32 %v814, %v814
        %v929 = vmul.f32 %v816, %v816
        %v930 = vmul.f32 %v874, 0.035677407
        %v931 = vmul.f32 %v875, 0.035677407
        %v932 = vmul.f32 %v876, 0.035677407
        %v933 = vmul.f32 %v877, 0.035677407
        %v934 = vmul.f32 %v878, 0.035677407
        %v935 = vmul.f32 %v879, 0.035677407
        %v936 = vmul.f32 %v880, 0.035677407
        %v937 = vmul.f32 %v881, 0.035677407
        %v938 = vmul.f32 %v882, 0.035677407
        %v939 = vmul.f32 %v883, 0.035677407
        %v940 = vmul.f32 %v884, 0.035677407
        %v941 = vmul.f32 %v885, 0.035677407
        %v942 = vmul.f32 %v886, 0.035677407
        %v943 = vmul.f32 %v887, 0.035677407
        %v944 = vmul.f32 %v888, 0.035677407
        %v945 = vmul.f32 %v889, 0.035677407
        %v946 = vmul.f32 %v890, 0.035677407
        %v947 = vmul.f32 %v891, 0.035677407
        %v948 = vmul.f32 %v892, 0.035677407
        %v949 = vmul.f32 %v893, 0.035677407
        %v950 = vmul.f32 %v894, 0.035677407
        %v951 = vmul.f32 %v895, 0.035677407
        %v952 = vmul.f32 %v896, 0.035677407
        %v953 = vmul.f32 %v897, 0.035677407
        %v954 = vmul.f32 %v898, 0.035677407
        %v955 = vmul.f32 %v899, 0.035677407
        %v956 = vmul.f32 %v900, 0.035677407
        %v957 = vmul.f32 %v901, 0.035677407
        %v958 = vmul.f32 %v902, 0.035677407
        %v959 = vmul.f32 %v903, 0.035677407
        %v960 = vmul.f32 %v904, 0.035677407
        %v961 = vmul.f32 %v905, 0.035677407
        %v962 = vmul.f32 %v906, 0.035677407
        %v963 = vmul.f32 %v907, 0.035677407
        %v964 = vmul.f32 %v908, 0.035677407
        %v965 = vmul.f32 %v909, 0.035677407
        %v966 = vmul.f32 %v910, 0.035677407
        %v967 = vmul.f32 %v911, 0.035677407
        %v968 = vmul.f32 %v912, 0.035677407
        %v969 = vmul.f32 %v913, 0.035677407
        %v970 = vmul.f32 %v914, 0.035677407
        %v971 = vmul.f32 %v915, 0.035677407
        %v972 = vmul.f32 %v916, 0.035677407
        %v973 = vmul.f32 %v917, 0.035677407
        %v974 = vmul.f32 %v918, 0.035677407
        %v975 = vmul.f32 %v919, 0.035677407
        %v976 = vmul.f32 %v920, 0.035677407
        %v977 = vmul.f32 %v921, 0.035677407
        %v978 = vmul.f32 %v922, 0.035677407
        %v979 = vmul.f32 %v923, 0.035677407
        %v980 = vmul.f32 %v924, 0.035677407
        %v981 = vmul.f32 %v925, 0.035677407
        %v982 = vmul.f32 %v926, 0.035677407
        %v983 = vmul.f32 %v927, 0.035677407
        %v984 = vmul.f32 %v928, 0.035677407
        %v985 = vmul.f32 %v929, 0.035677407
        %v986 = vadd.f32 %v930, 0.7978846
        %v987 = vadd.f32 %v931, 0.7978846
        %v988 = vadd.f32 %v932, 0.7978846
        %v989 = vadd.f32 %v933, 0.7978846
        %v990 = vadd.f32 %v934, 0.7978846
        %v991 = vadd.f32 %v935, 0.7978846
        %v992 = vadd.f32 %v936, 0.7978846
        %v993 = vadd.f32 %v937, 0.7978846
        %v994 = vadd.f32 %v938, 0.7978846
        %v995 = vadd.f32 %v939, 0.7978846
        %v996 = vadd.f32 %v940, 0.7978846
        %v997 = vadd.f32 %v941, 0.7978846
        %v998 = vadd.f32 %v942, 0.7978846
        %v999 = vadd.f32 %v943, 0.7978846
        %v1000 = vadd.f32 %v944, 0.7978846
        %v1001 = vadd.f32 %v945, 0.7978846
        %v1002 = vadd.f32 %v946, 0.7978846
        %v1003 = vadd.f32 %v947, 0.7978846
        %v1004 = vadd.f32 %v948, 0.7978846
        %v1005 = vadd.f32 %v949, 0.7978846
        %v1006 = vadd.f32 %v950, 0.7978846
        %v1007 = vadd.f32 %v951, 0.7978846
        %v1008 = vadd.f32 %v952, 0.7978846
        %v1009 = vadd.f32 %v953, 0.7978846
        %v1010 = vadd.f32 %v954, 0.7978846
        %v1011 = vadd.f32 %v955, 0.7978846
        %v1012 = vadd.f32 %v956, 0.7978846
        %v1013 = vadd.f32 %v957, 0.7978846
        %v1014 = vadd.f32 %v958, 0.7978846
        %v1015 = vadd.f32 %v959, 0.7978846
        %v1016 = vadd.f32 %v960, 0.7978846
        %v1017 = vadd.f32 %v961, 0.7978846
        %v1018 = vadd.f32 %v962, 0.7978846
        %v1019 = vadd.f32 %v963, 0.7978846
        %v1020 = vadd.f32 %v964, 0.7978846
        %v1021 = vadd.f32 %v965, 0.7978846
        %v1022 = vadd.f32 %v966, 0.7978846
        %v1023 = vadd.f32 %v967, 0.7978846
        %v1024 = vadd.f32 %v968, 0.7978846
        %v1025 = vadd.f32 %v969, 0.7978846
        %v1026 = vadd.f32 %v970, 0.7978846
        %v1027 = vadd.f32 %v971, 0.7978846
        %v1028 = vadd.f32 %v972, 0.7978846
        %v1029 = vadd.f32 %v973, 0.7978846
        %v1030 = vadd.f32 %v974, 0.7978846
        %v1031 = vadd.f32 %v975, 0.7978846
        %v1032 = vadd.f32 %v976, 0.7978846
        %v1033 = vadd.f32 %v977, 0.7978846
        %v1034 = vadd.f32 %v978, 0.7978846
        %v1035 = vadd.f32 %v979, 0.7978846
        %v1036 = vadd.f32 %v980, 0.7978846
        %v1037 = vadd.f32 %v981, 0.7978846
        %v1038 = vadd.f32 %v982, 0.7978846
        %v1039 = vadd.f32 %v983, 0.7978846
        %v1040 = vadd.f32 %v984, 0.7978846
        %v1041 = vadd.f32 %v985, 0.7978846
        %v1042 = vmul.f32 %v647, %v986
        %v1043 = vmul.f32 %v649, %v987
        %v1044 = vmul.f32 %v750, %v988
        %v1045 = vmul.f32 %v752, %v989
        %v1046 = vmul.f32 %v651, %v990
        %v1047 = vmul.f32 %v653, %v991
        %v1048 = vmul.f32 %v754, %v992
        %v1049 = vmul.f32 %v756, %v993
        %v1050 = vmul.f32 %v657, %v994
        %v1051 = vmul.f32 %v659, %v995
        %v1052 = vmul.f32 %v760, %v996
        %v1053 = vmul.f32 %v762, %v997
        %v1054 = vmul.f32 %v661, %v998
        %v1055 = vmul.f32 %v663, %v999
        %v1056 = vmul.f32 %v764, %v1000
        %v1057 = vmul.f32 %v766, %v1001
        %v1058 = vmul.f32 %v667, %v1002
        %v1059 = vmul.f32 %v669, %v1003
        %v1060 = vmul.f32 %v770, %v1004
        %v1061 = vmul.f32 %v772, %v1005
        %v1062 = vmul.f32 %v671, %v1006
        %v1063 = vmul.f32 %v673, %v1007
        %v1064 = vmul.f32 %v774, %v1008
        %v1065 = vmul.f32 %v776, %v1009
        %v1066 = vmul.f32 %v677, %v1010
        %v1067 = vmul.f32 %v679, %v1011
        %v1068 = vmul.f32 %v780, %v1012
        %v1069 = vmul.f32 %v782, %v1013
        %v1070 = vmul.f32 %v681, %v1014
        %v1071 = vmul.f32 %v683, %v1015
        %v1072 = vmul.f32 %v784, %v1016
        %v1073 = vmul.f32 %v786, %v1017
        %v1074 = vmul.f32 %v687, %v1018
        %v1075 = vmul.f32 %v689, %v1019
        %v1076 = vmul.f32 %v790, %v1020
        %v1077 = vmul.f32 %v792, %v1021
        %v1078 = vmul.f32 %v691, %v1022
        %v1079 = vmul.f32 %v693, %v1023
        %v1080 = vmul.f32 %v794, %v1024
        %v1081 = vmul.f32 %v796, %v1025
        %v1082 = vmul.f32 %v697, %v1026
        %v1083 = vmul.f32 %v699, %v1027
        %v1084 = vmul.f32 %v800, %v1028
        %v1085 = vmul.f32 %v802, %v1029
        %v1086 = vmul.f32 %v701, %v1030
        %v1087 = vmul.f32 %v703, %v1031
        %v1088 = vmul.f32 %v804, %v1032
        %v1089 = vmul.f32 %v806, %v1033
        %v1090 = vmul.f32 %v707, %v1034
        %v1091 = vmul.f32 %v709, %v1035
        %v1092 = vmul.f32 %v810, %v1036
        %v1093 = vmul.f32 %v812, %v1037
        %v1094 = vmul.f32 %v711, %v1038
        %v1095 = vmul.f32 %v713, %v1039
        %v1096 = vmul.f32 %v814, %v1040
        %v1097 = vmul.f32 %v816, %v1041
        %v1098 = vtanh.pop %v1042
        %v1099 = vtanh.pop %v1043
        %v1100 = vtanh.pop %v1044
        %v1101 = vtanh.pop %v1045
        %v1102 = vtanh.pop %v1046
        %v1103 = vtanh.pop %v1047
        %v1104 = vtanh.pop %v1048
        %v1105 = vtanh.pop %v1049
        %v1106 = vtanh.pop %v1050
        %v1107 = vtanh.pop %v1051
        %v1108 = vtanh.pop %v1052
        %v1109 = vtanh.pop %v1053
        %v1110 = vtanh.pop %v1054
        %v1111 = vtanh.pop %v1055
        %v1112 = vtanh.pop %v1056
        %v1113 = vtanh.pop %v1057
        %v1114 = vtanh.pop %v1058
        %v1115 = vtanh.pop %v1059
        %v1116 = vtanh.pop %v1060
        %v1117 = vtanh.pop %v1061
        %v1118 = vtanh.pop %v1062
        %v1119 = vtanh.pop %v1063
        %v1120 = vtanh.pop %v1064
        %v1121 = vtanh.pop %v1065
        %v1122 = vtanh.pop %v1066
        %v1123 = vtanh.pop %v1067
        %v1124 = vtanh.pop %v1068
        %v1125 = vtanh.pop %v1069
        %v1126 = vtanh.pop %v1070
        %v1127 = vtanh.pop %v1071
        %v1128 = vtanh.pop %v1072
        %v1129 = vtanh.pop %v1073
        %v1130 = vtanh.pop %v1074
        %v1131 = vtanh.pop %v1075
        %v1132 = vtanh.pop %v1076
        %v1133 = vtanh.pop %v1077
        %v1134 = vtanh.pop %v1078
        %v1135 = vtanh.pop %v1079
        %v1136 = vtanh.pop %v1080
        %v1137 = vtanh.pop %v1081
        %v1138 = vtanh.pop %v1082
        %v1139 = vtanh.pop %v1083
        %v1140 = vtanh.pop %v1084
        %v1141 = vtanh.pop %v1085
        %v1142 = vtanh.pop %v1086
        %v1143 = vtanh.pop %v1087
        %v1144 = vtanh.pop %v1088
        %v1145 = vtanh.pop %v1089
        %v1146 = vtanh.pop %v1090
        %v1147 = vtanh.pop %v1091
        %v1148 = vtanh.pop %v1092
        %v1149 = vtanh.pop %v1093
        %v1150 = vtanh.pop %v1094
        %v1151 = vtanh.pop %v1095
        %v1152 = vtanh.pop %v1096
        %v1153 = vtanh.pop %v1097
        %v1154 = vadd.f32 %v1098, 1.0
        %v1155 = vadd.f32 %v1099, 1.0
        %v1156 = vadd.f32 %v1100, 1.0
        %v1157 = vadd.f32 %v1101, 1.0
        %v1158 = vadd.f32 %v1102, 1.0
        %v1159 = vadd.f32 %v1103, 1.0
        %v1160 = vadd.f32 %v1104, 1.0
        %v1161 = vadd.f32 %v1105, 1.0
        %v1162 = vadd.f32 %v1106, 1.0
        %v1163 = vadd.f32 %v1107, 1.0
        %v1164 = vadd.f32 %v1108, 1.0
        %v1165 = vadd.f32 %v1109, 1.0
        %v1166 = vadd.f32 %v1110, 1.0
        %v1167 = vadd.f32 %v1111, 1.0
        %v1168 = vadd.f32 %v1112, 1.0
        %v1169 = vadd.f32 %v1113, 1.0
        %v1170 = vadd.f32 %v1114, 1.0
        %v1171 = vadd.f32 %v1115, 1.0
        %v1172 = vadd.f32 %v1116, 1.0
        %v1173 = vadd.f32 %v1117, 1.0
        %v1174 = vadd.f32 %v1118, 1.0
        %v1175 = vadd.f32 %v1119, 1.0
        %v1176 = vadd.f32 %v1120, 1.0
        %v1177 = vadd.f32 %v1121, 1.0
        %v1178 = vadd.f32 %v1122, 1.0
        %v1179 = vadd.f32 %v1123, 1.0
        %v1180 = vadd.f32 %v1124, 1.0
        %v1181 = vadd.f32 %v1125, 1.0
        %v1182 = vadd.f32 %v1126, 1.0
        %v1183 = vadd.f32 %v1127, 1.0
        %v1184 = vadd.f32 %v1128, 1.0
        %v1185 = vadd.f32 %v1129, 1.0
        %v1186 = vadd.f32 %v1130, 1.0
        %v1187 = vadd.f32 %v1131, 1.0
        %v1188 = vadd.f32 %v1132, 1.0
        %v1189 = vadd.f32 %v1133, 1.0
        %v1190 = vadd.f32 %v1134, 1.0
        %v1191 = vadd.f32 %v1135, 1.0
        %v1192 = vadd.f32 %v1136, 1.0
        %v1193 = vadd.f32 %v1137, 1.0
        %v1194 = vadd.f32 %v1138, 1.0
        %v1195 = vadd.f32 %v1139, 1.0
        %v1196 = vadd.f32 %v1140, 1.0
        %v1197 = vadd.f32 %v1141, 1.0
        %v1198 = vadd.f32 %v1142, 1.0
        %v1199 = vadd.f32 %v1143, 1.0
        %v1200 = vadd.f32 %v1144, 1.0
        %v1201 = vadd.f32 %v1145, 1.0
        %v1202 = vadd.f32 %v1146, 1.0
        %v1203 = vadd.f32 %v1147, 1.0
        %v1204 = vadd.f32 %v1148, 1.0
        %v1205 = vadd.f32 %v1149, 1.0
        %v1206 = vadd.f32 %v1150, 1.0
        %v1207 = vadd.f32 %v1151, 1.0
        %v1208 = vadd.f32 %v1152, 1.0
        %v1209 = vadd.f32 %v1153, 1.0
        %v1210 = vmul.f32 %v818, %v1154
        %v1211 = vmul.f32 %v819, %v1155
        %v1212 = vmul.f32 %v820, %v1156
        %v1213 = vmul.f32 %v821, %v1157
        %v1214 = vmul.f32 %v822, %v1158
        %v1215 = vmul.f32 %v823, %v1159
        %v1216 = vmul.f32 %v824, %v1160
        %v1217 = vmul.f32 %v825, %v1161
        %v1218 = vmul.f32 %v826, %v1162
        %v1219 = vmul.f32 %v827, %v1163
        %v1220 = vmul.f32 %v828, %v1164
        %v1221 = vmul.f32 %v829, %v1165
        %v1222 = vmul.f32 %v830, %v1166
        %v1223 = vmul.f32 %v831, %v1167
        %v1224 = vmul.f32 %v832, %v1168
        %v1225 = vmul.f32 %v833, %v1169
        %v1226 = vmul.f32 %v834, %v1170
        %v1227 = vmul.f32 %v835, %v1171
        %v1228 = vmul.f32 %v836, %v1172
        %v1229 = vmul.f32 %v837, %v1173
        %v1230 = vmul.f32 %v838, %v1174
        %v1231 = vmul.f32 %v839, %v1175
        %v1232 = vmul.f32 %v840, %v1176
        %v1233 = vmul.f32 %v841, %v1177
        %v1234 = vmul.f32 %v842, %v1178
        %v1235 = vmul.f32 %v843, %v1179
        %v1236 = vmul.f32 %v844, %v1180
        %v1237 = vmul.f32 %v845, %v1181
        %v1238 = vmul.f32 %v846, %v1182
        %v1239 = vmul.f32 %v847, %v1183
        %v1240 = vmul.f32 %v848, %v1184
        %v1241 = vmul.f32 %v849, %v1185
        %v1242 = vmul.f32 %v850, %v1186
        %v1243 = vmul.f32 %v851, %v1187
        %v1244 = vmul.f32 %v852, %v1188
        %v1245 = vmul.f32 %v853, %v1189
        %v1246 = vmul.f32 %v854, %v1190
        %v1247 = vmul.f32 %v855, %v1191
        %v1248 = vmul.f32 %v856, %v1192
        %v1249 = vmul.f32 %v857, %v1193
        %v1250 = vmul.f32 %v858, %v1194
        %v1251 = vmul.f32 %v859, %v1195
        %v1252 = vmul.f32 %v860, %v1196
        %v1253 = vmul.f32 %v861, %v1197
        %v1254 = vmul.f32 %v862, %v1198
        %v1255 = vmul.f32 %v863, %v1199
        %v1256 = vmul.f32 %v864, %v1200
        %v1257 = vmul.f32 %v865, %v1201
        %v1258 = vmul.f32 %v866, %v1202
        %v1259 = vmul.f32 %v867, %v1203
        %v1260 = vmul.f32 %v868, %v1204
        %v1261 = vmul.f32 %v869, %v1205
        %v1262 = vmul.f32 %v870, %v1206
        %v1263 = vmul.f32 %v871, %v1207
        %v1264 = vmul.f32 %v872, %v1208
        %v1265 = vmul.f32 %v873, %v1209
        %v1266 = vld [vmem:[#allocation2] sm:$0xff]
        %v1267 = vld [vmem:[#allocation2 + $0x8] sm:$0xff]
        %v1268 = vld [vmem:[#allocation2 + $0x10] sm:$0xff]
        %v1269 = vld [vmem:[#allocation2 + $0x18] sm:$0xff]
        %v1270 = vld [vmem:[#allocation2 + $0x20] sm:$0xff]
        %v1271 = vld [vmem:[#allocation2 + $0x28] sm:$0xff]
        %v1272 = vld [vmem:[#allocation2 + $0x30] sm:$0xff]
        %v1273 = vld [vmem:[#allocation2 + $0x38] sm:$0xff]
        %v1274 = vld [vmem:[#allocation2 + $0x40] sm:$0xff]
        %v1275 = vld [vmem:[#allocation2 + $0x48] sm:$0xff]
        %v1276 = vld [vmem:[#allocation2 + $0x50] sm:$0xff]
        %v1277 = vld [vmem:[#allocation2 + $0x58] sm:$0xff]
        %v1278 = vld [vmem:[#allocation2 + $0x60] sm:$0xff]
        %v1279 = vld [vmem:[#allocation2 + $0x68] sm:$0xff]
        %v1280 = vpack.c.bf16 %v1214, %v1210
        %v1281 = vpack.c.bf16 %v1215, %v1211
        %v1282 = vpack.c.bf16 %v1216, %v1212
        %v1283 = vpack.c.bf16 %v1217, %v1213
        %v1284 = vpack.c.bf16 %v1222, %v1218
        %v1285 = vpack.c.bf16 %v1223, %v1219
        %v1286 = vpack.c.bf16 %v1224, %v1220
        %v1287 = vpack.c.bf16 %v1225, %v1221
        %v1288 = vpack.c.bf16 %v1230, %v1226
        %v1289 = vpack.c.bf16 %v1231, %v1227
        %v1290 = vpack.c.bf16 %v1232, %v1228
        %v1291 = vpack.c.bf16 %v1233, %v1229
        %v1292 = vpack.c.bf16 %v1238, %v1234
        %v1293 = vpack.c.bf16 %v1239, %v1235
        %v1294 = vpack.c.bf16 %v1240, %v1236
        %v1295 = vpack.c.bf16 %v1241, %v1237
        %v1296 = vpack.c.bf16 %v1246, %v1242
        %v1297 = vpack.c.bf16 %v1247, %v1243
        %v1298 = vpack.c.bf16 %v1248, %v1244
        %v1299 = vpack.c.bf16 %v1249, %v1245
        %v1300 = vpack.c.bf16 %v1254, %v1250
        %v1301 = vpack.c.bf16 %v1255, %v1251
        %v1302 = vpack.c.bf16 %v1256, %v1252
        %v1303 = vpack.c.bf16 %v1257, %v1253
        %v1304 = vpack.c.bf16 %v1262, %v1258
        %v1305 = vpack.c.bf16 %v1263, %v1259
        %v1306 = vpack.c.bf16 %v1264, %v1260
        %v1307 = vpack.c.bf16 %v1265, %v1261
        %v1308 = vld [vmem:[#allocation8] sm:$0xf]
        %v1309 = vld [vmem:[#allocation8 + $0x4] sm:$0xf]
        %v1310 = vld [vmem:[#allocation8 + $0x8] sm:$0xf]
        %v1311 = vld [vmem:[#allocation8 + $0xc] sm:$0xf]
        %v1312 = vld [vmem:[#allocation8 + $0x10] sm:$0xf]
        %v1313 = vld [vmem:[#allocation8 + $0x14] sm:$0xf]
        %v1314 = vld [vmem:[#allocation8 + $0x18] sm:$0xf]
        %v1315 = vld [vmem:[#allocation8 + $0x1c] sm:$0xf]
        %v1316 = vld [vmem:[#allocation8 + $0x20] sm:$0xf]
        %v1317 = vld [vmem:[#allocation8 + $0x24] sm:$0xf]
        %v1318 = vld [vmem:[#allocation8 + $0x28] sm:$0xf]
        %v1319 = vld [vmem:[#allocation8 + $0x2c] sm:$0xf]
        %v1320 = vld [vmem:[#allocation8 + $0x30] sm:$0xf]
        %v1321 = vld [vmem:[#allocation8 + $0x34] sm:$0xf]
        %v1322 = vld [vmem:[#allocation8 + $0x38] sm:$0xf]
        %v1323 = vld [vmem:[#allocation8 + $0x3c] sm:$0xf]
        %v1324 = vld [vmem:[#allocation8 + $0x40] sm:$0xf]
        %v1325 = vld [vmem:[#allocation8 + $0x44] sm:$0xf]
        %v1326 = vld [vmem:[#allocation8 + $0x48] sm:$0xf]
        %v1327 = vld [vmem:[#allocation8 + $0x4c] sm:$0xf]
        %v1328 = vld [vmem:[#allocation8 + $0x50] sm:$0xf]
        %v1329 = vld [vmem:[#allocation8 + $0x54] sm:$0xf]
        %v1330 = vld [vmem:[#allocation8 + $0x58] sm:$0xf]
        %v1331 = vld [vmem:[#allocation8 + $0x5c] sm:$0xf]
        %v1332 = vld [vmem:[#allocation8 + $0x60] sm:$0xf]
        %v1333 = vld [vmem:[#allocation8 + $0x64] sm:$0xf]
        %v1334 = vld [vmem:[#allocation8 + $0x68] sm:$0xf]
        %v1335 = vld [vmem:[#allocation8 + $0x6c] sm:$0xf]
        %v1336 = vld [vmem:[#allocation8 + $0x70] sm:$0xf]
        %v1337 = vld [vmem:[#allocation8 + $0x74] sm:$0xf]
        %v1338 = vld [vmem:[#allocation8 + $0x78] sm:$0xf]
        %v1339 = vld [vmem:[#allocation8 + $0x7c] sm:$0xf]
        %v1340 = vld [vmem:[#allocation8 + $0x80] sm:$0xf]
        %v1341 = vld [vmem:[#allocation8 + $0x84] sm:$0xf]
        %v1342 = vld [vmem:[#allocation8 + $0x88] sm:$0xf]
        %v1343 = vld [vmem:[#allocation8 + $0x8c] sm:$0xf]
        %v1344 = vld [vmem:[#allocation8 + $0x90] sm:$0xf]
        %v1345 = vld [vmem:[#allocation8 + $0x94] sm:$0xf]
        %v1346 = vld [vmem:[#allocation8 + $0x98] sm:$0xf]
        %v1347 = vld [vmem:[#allocation8 + $0x9c] sm:$0xf]
        %v1348 = vld [vmem:[#allocation8 + $0xa0] sm:$0xf]
        %v1349 = vld [vmem:[#allocation8 + $0xa4] sm:$0xf]
        %v1350 = vld [vmem:[#allocation8 + $0xa8] sm:$0xf]
        %v1351 = vld [vmem:[#allocation8 + $0xac] sm:$0xf]
        %v1352 = vld [vmem:[#allocation8 + $0xb0] sm:$0xf]
        %v1353 = vld [vmem:[#allocation8 + $0xb4] sm:$0xf]
        %v1354 = vld [vmem:[#allocation8 + $0xb8] sm:$0xf]
        %v1355 = vld [vmem:[#allocation8 + $0xbc] sm:$0xf]
        %v1356 = vld [vmem:[#allocation8 + $0xc0] sm:$0xf]
        %v1357 = vld [vmem:[#allocation8 + $0xc4] sm:$0xf]
        %v1358 = vld [vmem:[#allocation8 + $0xc8] sm:$0xf]
        %v1359 = vld [vmem:[#allocation8 + $0xcc] sm:$0xf]
        %v1360 = vld [vmem:[#allocation8 + $0xd0] sm:$0xf]
        %v1361 = vld [vmem:[#allocation8 + $0xd4] sm:$0xf]
        %v1362 = vld [vmem:[#allocation8 + $0xd8] sm:$0xf]
        %v1363 = vld [vmem:[#allocation8 + $0xdc] sm:$0xf]
        %v1364 = vld [vmem:[#allocation8 + $0xe0] sm:$0xf]
        %v1365 = vld [vmem:[#allocation8 + $0xe4] sm:$0xf]
        %v1366 = vld [vmem:[#allocation8 + $0xe8] sm:$0xf]
        %v1367 = vld [vmem:[#allocation8 + $0xec] sm:$0xf]
        %v1368 = vld [vmem:[#allocation8 + $0xf0] sm:$0xf]
        %v1369 = vld [vmem:[#allocation8 + $0xf4] sm:$0xf]
        %v1370 = vld [vmem:[#allocation8 + $0xf8] sm:$0xf]
        %v1371 = vld [vmem:[#allocation8 + $0xfc] sm:$0xf]
        %v1436 = vunpack.c.l.b16 %v1308
        %v1437 = vunpack.c.l.b16 %v1309
        %v1438 = vunpack.c.l.b16 %v1310
        %v1439 = vunpack.c.l.b16 %v1311
        %v1440 = vunpack.c.l.b16 %v1312
        %v1441 = vunpack.c.l.b16 %v1313
        %v1442 = vunpack.c.l.b16 %v1314
        %v1443 = vunpack.c.l.b16 %v1315
        %v1444 = vunpack.c.l.b16 %v1316
        %v1445 = vunpack.c.l.b16 %v1317
        %v1446 = vunpack.c.l.b16 %v1318
        %v1447 = vunpack.c.l.b16 %v1319
        %v1448 = vunpack.c.l.b16 %v1320
        %v1449 = vunpack.c.l.b16 %v1321
        %v1450 = vunpack.c.l.b16 %v1322
        %v1451 = vunpack.c.l.b16 %v1323
        %v1452 = vunpack.c.l.b16 %v1324
        %v1453 = vunpack.c.l.b16 %v1325
        %v1454 = vunpack.c.l.b16 %v1326
        %v1455 = vunpack.c.l.b16 %v1327
        %v1456 = vunpack.c.l.b16 %v1328
        %v1457 = vunpack.c.l.b16 %v1329
        %v1458 = vunpack.c.l.b16 %v1330
        %v1459 = vunpack.c.l.b16 %v1331
        %v1460 = vunpack.c.l.b16 %v1332
        %v1461 = vunpack.c.l.b16 %v1333
        %v1462 = vunpack.c.l.b16 %v1334
        %v1463 = vunpack.c.l.b16 %v1335
        %v1464 = vunpack.c.l.b16 %v1336
        %v1465 = vunpack.c.l.b16 %v1337
        %v1466 = vunpack.c.l.b16 %v1338
        %v1467 = vunpack.c.l.b16 %v1339
        %v1468 = vunpack.c.l.b16 %v1340
        %v1469 = vunpack.c.l.b16 %v1341
        %v1470 = vunpack.c.l.b16 %v1342
        %v1471 = vunpack.c.l.b16 %v1343
        %v1472 = vunpack.c.l.b16 %v1344
        %v1473 = vunpack.c.l.b16 %v1345
        %v1474 = vunpack.c.l.b16 %v1346
        %v1475 = vunpack.c.l.b16 %v1347
        %v1476 = vunpack.c.l.b16 %v1348
        %v1477 = vunpack.c.l.b16 %v1349
        %v1478 = vunpack.c.l.b16 %v1350
        %v1479 = vunpack.c.l.b16 %v1351
        %v1480 = vunpack.c.l.b16 %v1352
        %v1481 = vunpack.c.l.b16 %v1353
        %v1482 = vunpack.c.l.b16 %v1354
        %v1483 = vunpack.c.l.b16 %v1355
        %v1484 = vunpack.c.l.b16 %v1356
        %v1485 = vunpack.c.l.b16 %v1357
        %v1486 = vunpack.c.l.b16 %v1358
        %v1487 = vunpack.c.l.b16 %v1359
        %v1488 = vunpack.c.l.b16 %v1360
        %v1489 = vunpack.c.l.b16 %v1361
        %v1490 = vunpack.c.l.b16 %v1362
        %v1491 = vunpack.c.l.b16 %v1363
        %v1492 = vunpack.c.l.b16 %v1364
        %v1493 = vunpack.c.l.b16 %v1365
        %v1494 = vunpack.c.l.b16 %v1366
        %v1495 = vunpack.c.l.b16 %v1367
        %v1496 = vunpack.c.l.b16 %v1368
        %v1497 = vunpack.c.l.b16 %v1369
        %v1498 = vunpack.c.l.b16 %v1370
        %v1499 = vunpack.c.l.b16 %v1371
        %v1500 = vpack.c.b16 %v1437, %v1436
        %v1501 = vpack.c.b16 %v1439, %v1438
        %v1502 = vpack.c.b16 %v1441, %v1440
        %v1503 = vpack.c.b16 %v1443, %v1442
        %v1504 = vpack.c.b16 %v1445, %v1444
        %v1505 = vpack.c.b16 %v1447, %v1446
        %v1506 = vpack.c.b16 %v1449, %v1448
        %v1507 = vpack.c.b16 %v1451, %v1450
        %v1508 = vpack.c.b16 %v1453, %v1452
        %v1509 = vpack.c.b16 %v1455, %v1454
        %v1510 = vpack.c.b16 %v1457, %v1456
        %v1511 = vpack.c.b16 %v1459, %v1458
        %v1512 = vpack.c.b16 %v1461, %v1460
        %v1513 = vpack.c.b16 %v1463, %v1462
        %v1514 = vpack.c.b16 %v1465, %v1464
        %v1515 = vpack.c.b16 %v1467, %v1466
        %v1516 = vpack.c.b16 %v1469, %v1468
        %v1517 = vpack.c.b16 %v1471, %v1470
        %v1518 = vpack.c.b16 %v1473, %v1472
        %v1519 = vpack.c.b16 %v1475, %v1474
        %v1520 = vpack.c.b16 %v1477, %v1476
        %v1521 = vpack.c.b16 %v1479, %v1478
        %v1522 = vpack.c.b16 %v1481, %v1480
        %v1523 = vpack.c.b16 %v1483, %v1482
        %v1524 = vpack.c.b16 %v1485, %v1484
        %v1525 = vpack.c.b16 %v1487, %v1486
        %v1526 = vpack.c.b16 %v1489, %v1488
        %v1527 = vpack.c.b16 %v1491, %v1490
        %v1528 = vpack.c.b16 %v1493, %v1492
        %v1529 = vpack.c.b16 %v1495, %v1494
        %v1530 = vpack.c.b16 %v1497, %v1496
        %v1531 = vpack.c.b16 %v1499, %v1498
        %1564 = vmatprep.subr.bf16.mxu0 0
        %1565 = vmatpush1.bf16.msra.mxu0 %v1500
        %1566 = vmatprep.subr.bf16.mxu0 0
        %1567 = vmatpush1.bf16.msra.mxu0 %v1501
        %1568 = vmatprep.subr.bf16.mxu0 0
        %1569 = vmatpush1.bf16.msra.mxu0 %v1502
        %1570 = vmatprep.subr.bf16.mxu0 0
        %1571 = vmatpush1.bf16.msra.mxu0 %v1503
        %1572 = vmatprep.subr.bf16.mxu0 0
        %1573 = vmatpush1.bf16.msra.mxu0 %v1504
        %1574 = vmatprep.subr.bf16.mxu0 0
        %1575 = vmatpush1.bf16.msra.mxu0 %v1505
        %1576 = vmatprep.subr.bf16.mxu0 0
        %1577 = vmatpush1.bf16.msra.mxu0 %v1506
        %1578 = vmatprep.subr.bf16.mxu0 0
        %1579 = vmatpush1.bf16.msra.mxu0 %v1507
        %1580 = vmatprep.subr.bf16.mxu0 0
        %1581 = vmatpush1.bf16.msra.mxu0 %v1508
        %1582 = vmatprep.subr.bf16.mxu0 0
        %1583 = vmatpush1.bf16.msra.mxu0 %v1509
        %1584 = vmatprep.subr.bf16.mxu0 0
        %1585 = vmatpush1.bf16.msra.mxu0 %v1510
        %1586 = vmatprep.subr.bf16.mxu0 0
        %1587 = vmatpush1.bf16.msra.mxu0 %v1511
        %1588 = vmatprep.subr.bf16.mxu0 0
        %1589 = vmatpush1.bf16.msra.mxu0 %v1512
        %1590 = vmatprep.subr.bf16.mxu0 0
        %1591 = vmatpush1.bf16.msra.mxu0 %v1513
        %1592 = vmatprep.subr.bf16.mxu0 0
        %1593 = vmatpush1.bf16.msra.mxu0 %v1514
        %1594 = vmatprep.subr.bf16.mxu0 0
        %1595 = vmatpush1.bf16.msra.mxu0 %v1515
        %1596 = vmatprep.mubr.bf16.mxu0 %v1281
        %1597 = vmatmul.mubr.bf16.gmra.mrb[0].mxu0 %v1280
        %v1598 = vpop.f32.mrb[0].mxu0
        %v1599 = vadd.f32 0.0, %v1598
        %v1600 = vpop.f32.mrb[0].mxu0
        %v1601 = vpop.f32.mrb[0].mxu0
        %v1602 = vadd.f32 0.0, %v1601
        %v1603 = vpop.f32.mrb[0].mxu0
        %1604 = vmatprep.mubr.bf16.mxu0 %v1285
        %1605 = vmatmul.mubr.bf16.gmra.mrb[0].mxu0 %v1284
        %v1606 = vpop.f32.mrb[0].mxu0
        %v1607 = vadd.f32 0.0, %v1606
        %v1608 = vpop.f32.mrb[0].mxu0
        %v1609 = vpop.f32.mrb[0].mxu0
        %v1610 = vadd.f32 0.0, %v1609
        %v1611 = vpop.f32.mrb[0].mxu0
        %1612 = vmatprep.mubr.bf16.mxu0 %v1289
        %1613 = vmatmul.mubr.bf16.gmra.mrb[0].mxu0 %v1288
        %v1614 = vpop.f32.mrb[0].mxu0
        %v1615 = vadd.f32 0.0, %v1614
        %v1616 = vpop.f32.mrb[0].mxu0
        %v1617 = vpop.f32.mrb[0].mxu0
        %v1618 = vadd.f32 0.0, %v1617
        %v1619 = vpop.f32.mrb[0].mxu0
        %1620 = vmatprep.mubr.bf16.mxu0 %v1293
        %1621 = vmatmul.mubr.bf16.gmra.mrb[0].mxu0 %v1292
        %v1622 = vpop.f32.mrb[0].mxu0
        %v1623 = vadd.f32 0.0, %v1622
        %v1624 = vpop.f32.mrb[0].mxu0
        %v1625 = vpop.f32.mrb[0].mxu0
        %v1626 = vadd.f32 0.0, %v1625
        %v1627 = vpop.f32.mrb[0].mxu0
        %1628 = vmatprep.mubr.bf16.mxu0 %v1297
        %1629 = vmatmul.mubr.bf16.gmra.mrb[0].mxu0 %v1296
        %v1630 = vpop.f32.mrb[0].mxu0
        %v1631 = vadd.f32 0.0, %v1630
        %v1632 = vpop.f32.mrb[0].mxu0
        %v1633 = vpop.f32.mrb[0].mxu0
        %v1634 = vadd.f32 0.0, %v1633
        %v1635 = vpop.f32.mrb[0].mxu0
        %1636 = vmatprep.mubr.bf16.mxu0 %v1301
        %1637 = vmatmul.mubr.bf16.gmra.mrb[0].mxu0 %v1300
        %v1638 = vpop.f32.mrb[0].mxu0
        %v1639 = vadd.f32 0.0, %v1638
        %v1640 = vpop.f32.mrb[0].mxu0
        %v1641 = vpop.f32.mrb[0].mxu0
        %v1642 = vadd.f32 0.0, %v1641
        %v1643 = vpop.f32.mrb[0].mxu0
        %1644 = vmatprep.mubr.bf16.mxu0 %v1305
        %1645 = vmatmul.mubr.bf16.gmra.mrb[0].mxu0 %v1304
        %v1646 = vpop.f32.mrb[0].mxu0
        %v1647 = vadd.f32 0.0, %v1646
        %v1648 = vpop.f32.mrb[0].mxu0
        %v1649 = vpop.f32.mrb[0].mxu0
        %v1650 = vadd.f32 0.0, %v1649
        %v1651 = vpop.f32.mrb[0].mxu0
        %1652 = vdwg.mxu0
        %1653 = vmatprep.subr.bf16.mxu0 0
        %1654 = vmatpush1.bf16.msra.mxu0 %v1516
        %1655 = vmatprep.subr.bf16.mxu0 0
        %1656 = vmatpush1.bf16.msra.mxu0 %v1517
        %1657 = vmatprep.subr.bf16.mxu0 0
        %1658 = vmatpush1.bf16.msra.mxu0 %v1518
        %1659 = vmatprep.subr.bf16.mxu0 0
        %1660 = vmatpush1.bf16.msra.mxu0 %v1519
        %1661 = vmatprep.subr.bf16.mxu0 0
        %1662 = vmatpush1.bf16.msra.mxu0 %v1520
        %1663 = vmatprep.subr.bf16.mxu0 0
        %1664 = vmatpush1.bf16.msra.mxu0 %v1521
        %1665 = vmatprep.subr.bf16.mxu0 0
        %1666 = vmatpush1.bf16.msra.mxu0 %v1522
        %1667 = vmatprep.subr.bf16.mxu0 0
        %1668 = vmatpush1.bf16.msra.mxu0 %v1523
        %1669 = vmatprep.subr.bf16.mxu0 0
        %1670 = vmatpush1.bf16.msra.mxu0 %v1524
        %1671 = vmatprep.subr.bf16.mxu0 0
        %1672 = vmatpush1.bf16.msra.mxu0 %v1525
        %1673 = vmatprep.subr.bf16.mxu0 0
        %1674 = vmatpush1.bf16.msra.mxu0 %v1526
        %1675 = vmatprep.subr.bf16.mxu0 0
        %1676 = vmatpush1.bf16.msra.mxu0 %v1527
        %1677 = vmatprep.subr.bf16.mxu0 0
        %1678 = vmatpush1.bf16.msra.mxu0 %v1528
        %1679 = vmatprep.subr.bf16.mxu0 0
        %1680 = vmatpush1.bf16.msra.mxu0 %v1529
        %1681 = vmatprep.subr.bf16.mxu0 0
        %1682 = vmatpush1.bf16.msra.mxu0 %v1530
        %1683 = vmatprep.subr.bf16.mxu0 0
        %1684 = vmatpush1.bf16.msra.mxu0 %v1531
        %1685 = vmatprep.mubr.bf16.mxu0 %v1283
        %1686 = vmatmul.mubr.bf16.gmra.mrb[0].mxu0 %v1282
        %v1687 = vpop.f32.mrb[0].mxu0
        %v1688 = vadd.f32 %v1599, %v1687
        %v1689 = vpop.f32.mrb[0].mxu0
        %v1690 = vpop.f32.mrb[0].mxu0
        %v1691 = vadd.f32 %v1602, %v1690
        %v1692 = vpop.f32.mrb[0].mxu0
        %1693 = vmatprep.mubr.bf16.mxu0 %v1287
        %1694 = vmatmul.mubr.bf16.gmra.mrb[0].mxu0 %v1286
        %v1695 = vpop.f32.mrb[0].mxu0
        %v1696 = vadd.f32 %v1607, %v1695
        %v1697 = vpop.f32.mrb[0].mxu0
        %v1698 = vpop.f32.mrb[0].mxu0
        %v1699 = vadd.f32 %v1610, %v1698
        %v1700 = vpop.f32.mrb[0].mxu0
        %1701 = vmatprep.mubr.bf16.mxu0 %v1291
        %1702 = vmatmul.mubr.bf16.gmra.mrb[0].mxu0 %v1290
        %v1703 = vpop.f32.mrb[0].mxu0
        %v1704 = vadd.f32 %v1615, %v1703
        %v1705 = vpop.f32.mrb[0].mxu0
        %v1706 = vpop.f32.mrb[0].mxu0
        %v1707 = vadd.f32 %v1618, %v1706
        %v1708 = vpop.f32.mrb[0].mxu0
        %1709 = vmatprep.mubr.bf16.mxu0 %v1295
        %1710 = vmatmul.mubr.bf16.gmra.mrb[0].mxu0 %v1294
        %v1711 = vpop.f32.mrb[0].mxu0
        %v1712 = vadd.f32 %v1623, %v1711
        %v1713 = vpop.f32.mrb[0].mxu0
        %v1714 = vpop.f32.mrb[0].mxu0
        %v1715 = vadd.f32 %v1626, %v1714
        %v1716 = vpop.f32.mrb[0].mxu0
        %1717 = vmatprep.mubr.bf16.mxu0 %v1299
        %1718 = vmatmul.mubr.bf16.gmra.mrb[0].mxu0 %v1298
        %v1719 = vpop.f32.mrb[0].mxu0
        %v1720 = vadd.f32 %v1631, %v1719
        %v1721 = vpop.f32.mrb[0].mxu0
        %v1722 = vpop.f32.mrb[0].mxu0
        %v1723 = vadd.f32 %v1634, %v1722
        %v1724 = vpop.f32.mrb[0].mxu0
        %1725 = vmatprep.mubr.bf16.mxu0 %v1303
        %1726 = vmatmul.mubr.bf16.gmra.mrb[0].mxu0 %v1302
        %v1727 = vpop.f32.mrb[0].mxu0
        %v1728 = vadd.f32 %v1639, %v1727
        %v1729 = vpop.f32.mrb[0].mxu0
        %v1730 = vpop.f32.mrb[0].mxu0
        %v1731 = vadd.f32 %v1642, %v1730
        %v1732 = vpop.f32.mrb[0].mxu0
        %1733 = vmatprep.mubr.bf16.mxu0 %v1307
        %1734 = vmatmul.mubr.bf16.gmra.mrb[0].mxu0 %v1306
        %v1735 = vpop.f32.mrb[0].mxu0
        %v1736 = vadd.f32 %v1647, %v1735
        %v1737 = vpop.f32.mrb[0].mxu0
        %v1738 = vpop.f32.mrb[0].mxu0
        %v1739 = vadd.f32 %v1650, %v1738
        %v1740 = vpop.f32.mrb[0].mxu0
        %1741 = vdwg.mxu0
        %v1742 = vadd.f32 %v1266, %v1688
        %v1743 = vadd.f32 %v1267, %v1691
        %v1744 = vadd.f32 %v1268, %v1696
        %v1745 = vadd.f32 %v1269, %v1699
        %v1746 = vadd.f32 %v1270, %v1704
        %v1747 = vadd.f32 %v1271, %v1707
        %v1748 = vadd.f32 %v1272, %v1712
        %v1749 = vadd.f32 %v1273, %v1715
        %v1750 = vadd.f32 %v1274, %v1720
        %v1751 = vadd.f32 %v1275, %v1723
        %v1752 = vadd.f32 %v1276, %v1728
        %v1753 = vadd.f32 %v1277, %v1731
        %v1754 = vadd.f32 %v1278, %v1736
        %v1755 = vadd.f32 %v1279, %v1739
        %1756 = vst [vmem:[#allocation2] sm:$0xff] %v1742
        %1757 = vst [vmem:[#allocation2 + $0x8] sm:$0xff] %v1743
        %1758 = vst [vmem:[#allocation2 + $0x10] sm:$0xff] %v1744
        %1759 = vst [vmem:[#allocation2 + $0x18] sm:$0xff] %v1745
        %1760 = vst [vmem:[#allocation2 + $0x20] sm:$0xff] %v1746
        %1761 = vst [vmem:[#allocation2 + $0x28] sm:$0xff] %v1747
        %1762 = vst [vmem:[#allocation2 + $0x30] sm:$0xff] %v1748
        %1763 = vst [vmem:[#allocation2 + $0x38] sm:$0xff] %v1749
        %1764 = vst [vmem:[#allocation2 + $0x40] sm:$0xff] %v1750
        %1765 = vst [vmem:[#allocation2 + $0x48] sm:$0xff] %v1751
        %1766 = vst [vmem:[#allocation2 + $0x50] sm:$0xff] %v1752
        %1767 = vst [vmem:[#allocation2 + $0x58] sm:$0xff] %v1753
        %1768 = vst [vmem:[#allocation2 + $0x60] sm:$0xff] %v1754
        %1769 = vst [vmem:[#allocation2 + $0x68] sm:$0xff] %v1755
        // Predicated region
        $region57: #{tpu_custom_call.1} parent=39 // pred_check
          %p1770 = pneg %p324
        $region58: #{tpu_custom_call.1} parent=39 // pred_check_branch
          %1772 = sbr.rel (%p1770) target = $region60
        $region59: #{tpu_custom_call.1} parent=39 // pred_region
          %v1773 = vld [vmem:[#allocation2] sm:$0xff]
          %v1774 = vld [vmem:[#allocation2 + $0x8] sm:$0xff]
          %v1775 = vld [vmem:[#allocation2 + $0x10] sm:$0xff]
          %v1776 = vld [vmem:[#allocation2 + $0x18] sm:$0xff]
          %v1777 = vld [vmem:[#allocation2 + $0x20] sm:$0xff]
          %v1778 = vld [vmem:[#allocation2 + $0x28] sm:$0xff]
          %v1779 = vld [vmem:[#allocation2 + $0x30] sm:$0xff]
          %v1780 = vld [vmem:[#allocation2 + $0x38] sm:$0xff]
          %v1781 = vld [vmem:[#allocation2 + $0x40] sm:$0xff]
          %v1782 = vld [vmem:[#allocation2 + $0x48] sm:$0xff]
          %v1783 = vld [vmem:[#allocation2 + $0x50] sm:$0xff]
          %v1784 = vld [vmem:[#allocation2 + $0x58] sm:$0xff]
          %v1785 = vld [vmem:[#allocation2 + $0x60] sm:$0xff]
          %v1786 = vld [vmem:[#allocation2 + $0x68] sm:$0xff]
          %v1787 = vld [vmem:[%s4] sm:$0x1]
          %v1789 = vlaneseq
          %v1790 = vshrl.u32 %v1789, 7
          %v1791 = vsub.s32 0, %v1790
          %v1792 = vrot.slane %v1787, %v1791
          %v1794 = vadd.f32 %v1773, %v1792
          %v1795 = vadd.f32 %v1774, %v1792
          %v1796 = vadd.f32 %v1775, %v1792
          %v1797 = vadd.f32 %v1776, %v1792
          %v1798 = vadd.f32 %v1777, %v1792
          %v1799 = vadd.f32 %v1778, %v1792
          %v1800 = vadd.f32 %v1779, %v1792
          %v1801 = vadd.f32 %v1780, %v1792
          %v1802 = vadd.f32 %v1781, %v1792
          %v1803 = vadd.f32 %v1782, %v1792
          %v1804 = vadd.f32 %v1783, %v1792
          %v1805 = vadd.f32 %v1784, %v1792
          %v1806 = vadd.f32 %v1785, %v1792
          %v1807 = vadd.f32 %v1786, %v1792
          %1808 = vst [vmem:[%s313] sm:$0xff] %v1794
          %1809 = vst [vmem:[%s313 + $0x8] sm:$0xff] %v1795
          %1810 = vst [vmem:[%s313 + $0x10] sm:$0xff] %v1796
          %1811 = vst [vmem:[%s313 + $0x18] sm:$0xff] %v1797
          %1812 = vst [vmem:[%s313 + $0x20] sm:$0xff] %v1798
          %1813 = vst [vmem:[%s313 + $0x28] sm:$0xff] %v1799
          %1814 = vst [vmem:[%s313 + $0x30] sm:$0xff] %v1800
          %1815 = vst [vmem:[%s313 + $0x38] sm:$0xff] %v1801
          %1816 = vst [vmem:[%s313 + $0x40] sm:$0xff] %v1802
          %1817 = vst [vmem:[%s313 + $0x48] sm:$0xff] %v1803
          %1818 = vst [vmem:[%s313 + $0x50] sm:$0xff] %v1804
          %1819 = vst [vmem:[%s313 + $0x58] sm:$0xff] %v1805
          %1820 = vst [vmem:[%s313 + $0x60] sm:$0xff] %v1806
          %1821 = vst [vmem:[%s313 + $0x68] sm:$0xff] %v1807
        $region60: #{tpu_custom_call.1} parent=39 // pred_fallthru
          _
        %s1822 = sand.u32 %s168, 1
        %s1823 = scalar_lea.sflag [#allocation5], %s1822
        %s1824 = sand.u32 %s168, 1
        %s1825 = smul.addr %s1824, 112
        %s1826 = scalar_lea.vmem [#allocation9], %s1825
        // Predicated region
        $region61: #{tpu_custom_call.1} parent=39 // pred_check
          %p1827 = pneg %p178
        $region62: #{tpu_custom_call.1} parent=39 // pred_check_branch
          %1829 = sbr.rel (%p1827) target = $region64
        $region63: #{tpu_custom_call.1} parent=39 // pred_region
          %s1830 = smul.u32 14, %s27
          %s1832 = ssub.s32 1792, 1792
          %1833 = vsyncadd %s1823, %s1832
          %s1834 = smul.addr %s1830, 128
          %s1835 = scalar_lea.hbm %s5, %s1834
          %s1836 = sshll.u32 %s1826, 4
          %s1837 = int_to_ptr.vmem [resolvable:$true] %s1836
          %1842 = dma.vmem_to_hbm [thread:$0]  %s1837, 1792, %s1835, %s1823, 128, 128, 8
        $region64: #{tpu_custom_call.1} parent=39 // pred_fallthru
          _
      $region40: #{tpu_custom_call.1} parent=5 // pred_fallthru
        _
      %p1843 = scmp.le.s32.totalorder 2, %s18
      // Predicated region
      $region65: #{tpu_custom_call.1} parent=5 // pred_check
        %p1844 = pneg %p1843
      $region66: #{tpu_custom_call.1} parent=5 // pred_check_branch
        %1846 = sbr.rel (%p1844) target = $region68
      $region67: #{tpu_custom_call.1} parent=5 // pred_region
        %s1847 = ssub.s32 %s18, 2
        // Predicated region
        $region69: #{tpu_custom_call.1} parent=67 // pred_check
          %p1848 = pneg %p184
        $region70: #{tpu_custom_call.1} parent=67 // pred_check_branch
          %1850 = sbr.rel (%p1848) target = $region72
        $region71: #{tpu_custom_call.1} parent=67 // pred_region
          %s1851 = sand.u32 %s169, 1
          %s1852 = scalar_lea.sflag [#allocation5], %s1851
          %s1853 = sand.u32 %s169, 1
          %s1854 = smul.addr %s1853, 112
          %s1855 = scalar_lea.vmem [#allocation9], %s1854
          %1856 = dma.done %s1852, 1792
        $region72: #{tpu_custom_call.1} parent=67 // pred_fallthru
          _
      $region68: #{tpu_custom_call.1} parent=5 // pred_fallthru
        _
    $region6: #{tpu_custom_call.1} parent=1 // loop_footer
      %s22 = sadd.s32 1, %s18
    $region7: #{tpu_custom_call.1} parent=1 // loop_footer_branch
      %17 = sbr.rel target = $region3
    $region8: #{tpu_custom_call.1} parent=1 // loop_exit
      _
    %1857 = vsyncpa [#allocation4], 1
    %s1858 = scalar_lea.sflag [#allocation4], 1
    %1859 = vsyncpa %s1858, 1
    %1860 = vsyncpa [#allocation7], 1
    %1861 = vsyncpa [#allocation5], 1
    %s1862 = scalar_lea.sflag [#allocation5], 1
    %1863 = vsyncpa %s1862, 1

// kernel: tpu_custom_call.1
$region0: #{tpu_custom_call.1}
  #allocation0 [shape = 'u32[]', space=smem, size = 0x4, offset = 0x4, fixed_abs, tag = 'smem constant byte address 0x4 - core index']
  #allocation1 [shape = 'u32[144,128]{1,0:T(1,128)}', space=vmem, size = 0x12000, scoped, tag = 'internal scratch']
  #allocation2 [shape = 'f32[112,128]{1,0:T(8,128)}', space=vmem, size = 0xe000, scoped, tag = 'scratch operand']
  %s0 = inlined_call_operand.hbm [shape: bf16[448,128], index: 0, kind: input, shape index: {}]
  %s1 = inlined_call_operand.hbm [shape: bf16[128,512], index: 1, kind: input, shape index: {}]
  %s2 = inlined_call_operand.vmem [shape: f32[1,512], index: 2, kind: input, shape index: {}]
  %s3 = inlined_call_operand.hbm [shape: bf16[512,128], index: 3, kind: input, shape index: {}]
  %s4 = inlined_call_operand.vmem [shape: f32[1,128], index: 4, kind: input, shape index: {}]
  %s5 = inlined_call_operand.hbm [shape: f32[448,128], index: 5, kind: output, shape index: {}]
  %s6 = sld [smem:[#allocation0]]
  $region73: #{tpu_custom_call.1} parent=0
    _
  %s8 = ssub.s32 1, %s6
  %s9 = scalar_select 0, %s8, %s6
  $region1: #{tpu_custom_call.1} parent=0
    #allocation3 [shape = 'u8[57344]{0}', space=vmem, size = 0xe000, scoped, tag = 'input window, operand 0']
    #allocation4 [shape = 's32[2]{0}', space=sflag, size = 0x8, scoped, tag = 'scoped memory for tpu_custom_call.1']
    #allocation5 [shape = 's32[2]{0}', space=sflag, size = 0x8, scoped, tag = 'scoped memory for tpu_custom_call.1']
    #allocation6 [shape = 'u8[131072]{0}', space=vmem, size = 0x20000, scoped, tag = 'input window, operand 1, single buffered']
    #allocation7 [shape = 's32[1]{0}', space=sflag, size = 0x4, scoped, tag = 'scoped memory for tpu_custom_call.1']
    #allocation8 [shape = 'u8[131072]{0}', space=vmem, size = 0x20000, scoped, tag = 'input window, operand 3, single buffered']
    #allocation9 [shape = 'u8[114688]{0}', space=vmem, size = 0x1c000, scoped, tag = 'output window, operand 0']
    %10 = vsyncpa [#allocation4], 0
    %s11 = scalar_lea.sflag [#allocation4], 1
    %12 = vsyncpa %s11, 0
    %13 = vsyncpa [#allocation7], 0
    %14 = vsyncpa [#allocation5], 0
    %s15 = scalar_lea.sflag [#allocation5], 1
    %16 = vsyncpa %s15, 0
    loop: start=0, step=1, limit=6
    $region2: #{tpu_custom_call.1} parent=1 // loop_pre_header
      _
    $region3: #{tpu_custom_call.1} parent=1 // loop_header
      %s18 = sphi 0, %s22
      %p19 = scmp.ge.s32.totalorder %s18, 6
      %s25 = sphi 0, %s37
      %s26 = sphi 0, %s33
      %s27 = sphi 0, %s25
      %s28 = sphi 0, %s26
      %s29 = sphi 0, %s27
      %s30 = sphi 0, %s28
      %s40 = sphi 0, %s42
      %s43 = sphi 0, %s40
      %s44 = sphi 0, %s43
      %s60 = sphi 0, %s44
      %s66 = sphi 0, %s68
      %s69 = sphi 0, %s66
      %s70 = sphi 0, %s69
      %s86 = sphi 0, %s70
      %s92 = sphi 0, %s94
      %s95 = sphi 0, %s92
      %s96 = sphi 0, %s95
      %s112 = sphi 0, %s96
      %s118 = sphi 0, %s120
      %s121 = sphi 0, %s118
      %s122 = sphi 0, %s121
      %s138 = sphi 0, %s122
      %s142 = sphi 0, %s142
      %s144 = sphi 0, %s142
      %s145 = sphi 0, %s144
      %s159 = sphi 0, %s145
      %s165 = sphi 0, %s167
      %s168 = sphi 0, %s165
      %s169 = sphi 0, %s168
      %s185 = sphi 0, %s169
    $region4: #{tpu_custom_call.1} parent=1 // loop_header_branch
      %21 = sbr.rel (%p19) target = $region8
    $region5: #{tpu_custom_call.1} parent=1 // loop_body
      %s23 = ssub.s32 %s18, 1
      %s24 = ssub.s32 %s18, 2
      %s31 = sadd.s32 1, %s26
      %p32 = scmp.ge.s32.totalorder %s31, 1
      %s33 = scalar_select %p32, 0, %s31
      %s34 = sadd.s32 1, %s25
      %s35 = scalar_select %p32, %s34, %s25
      %p36 = scmp.ge.s32.totalorder %s35, 4
      %s37 = scalar_select %p36, 0, %s35
      %s38 = ssub.s32 %s25, %s37
      %p39 = scmp.eq.s32.totalorder %s38, 0
      %s41 = sadd.s32 %s40, 1
      %s42 = scalar_select %p39, %s40, %s41
      %p45 = pneg %p39
      %p46 = scmp.eq.s32.totalorder %s18, 3
      %p47 = por %p45, %p46
      %p48 = scmp.ne.s32.totalorder %s40, %s43
      %p49 = scmp.eq.s32.totalorder %s18, 0
      %p50 = por %p48, %p49
      %p51 = scmp.ne.s32.totalorder %s40, %s43
      %p52 = scmp.eq.s32.totalorder %s23, 3
      %p53 = por %p51, %p52
      %p54 = scmp.ne.s32.totalorder %s43, %s44
      %p55 = scmp.eq.s32.totalorder %s23, 0
      %p56 = por %p54, %p55
      %p57 = scmp.ne.s32.totalorder %s43, %s44
      %p58 = scmp.eq.s32.totalorder %s24, 3
      %p59 = por %p57, %p58
      %p61 = scmp.ne.s32.totalorder %s44, %s60
      %p62 = scmp.eq.s32.totalorder %s24, 0
      %p63 = por %p61, %p62
      %s64 = ssub.s32 %s26, %s33
      %p65 = scmp.eq.s32.totalorder %s64, 0
      %s67 = sadd.s32 %s66, 1
      %s68 = scalar_select %p65, %s66, %s67
      %p71 = pneg %p65
      %p72 = scmp.eq.s32.totalorder %s18, 3
      %p73 = por %p71, %p72
      %p74 = scmp.ne.s32.totalorder %s66, %s69
      %p75 = scmp.eq.s32.totalorder %s18, 0
      %p76 = por %p74, %p75
      %p77 = scmp.ne.s32.totalorder %s66, %s69
      %p78 = scmp.eq.s32.totalorder %s23, 3
      %p79 = por %p77, %p78
      %p80 = scmp.ne.s32.totalorder %s69, %s70
      %p81 = scmp.eq.s32.totalorder %s23, 0
      %p82 = por %p80, %p81
      %p83 = scmp.ne.s32.totalorder %s69, %s70
      %p84 = scmp.eq.s32.totalorder %s24, 3
      %p85 = por %p83, %p84
      %p87 = scmp.ne.s32.totalorder %s70, %s86
      %p88 = scmp.eq.s32.totalorder %s24, 0
      %p89 = por %p87, %p88
      %s90 = ssub.s32 %s26, %s33
      %p91 = scmp.eq.s32.totalorder %s90, 0
      %s93 = sadd.s32 %s92, 1
      %s94 = scalar_select %p91, %s92, %s93
      %p97 = pneg %p91
      %p98 = scmp.eq.s32.totalorder %s18, 3
      %p99 = por %p97, %p98
      %p100 = scmp.ne.s32.totalorder %s92, %s95
      %p101 = scmp.eq.s32.totalorder %s18, 0
      %p102 = por %p100, %p101
      %p103 = scmp.ne.s32.totalorder %s92, %s95
      %p104 = scmp.eq.s32.totalorder %s23, 3
      %p105 = por %p103, %p104
      %p106 = scmp.ne.s32.totalorder %s95, %s96
      %p107 = scmp.eq.s32.totalorder %s23, 0
      %p108 = por %p106, %p107
      %p109 = scmp.ne.s32.totalorder %s95, %s96
      %p110 = scmp.eq.s32.totalorder %s24, 3
      %p111 = por %p109, %p110
      %p113 = scmp.ne.s32.totalorder %s96, %s112
      %p114 = scmp.eq.s32.totalorder %s24, 0
      %p115 = por %p113, %p114
      %s116 = ssub.s32 %s26, %s33
      %p117 = scmp.eq.s32.totalorder %s116, 0
      %s119 = sadd.s32 %s118, 1
      %s120 = scalar_select %p117, %s118, %s119
      %p123 = pneg %p117
      %p124 = scmp.eq.s32.totalorder %s18, 3
      %p125 = por %p123, %p124
      %p126 = scmp.ne.s32.totalorder %s118, %s121
      %p127 = scmp.eq.s32.totalorder %s18, 0
      %p128 = por %p126, %p127
      %p129 = scmp.ne.s32.totalorder %s118, %s121
      %p130 = scmp.eq.s32.totalorder %s23, 3
      %p131 = por %p129, %p130
      %p132 = scmp.ne.s32.totalorder %s121, %s122
      %p133 = scmp.eq.s32.totalorder %s23, 0
      %p134 = por %p132, %p133
      %p135 = scmp.ne.s32.totalorder %s121, %s122
      %p136 = scmp.eq.s32.totalorder %s24, 3
      %p137 = por %p135, %p136
      %p139 = scmp.ne.s32.totalorder %s122, %s138
      %p140 = scmp.eq.s32.totalorder %s24, 0
      %p141 = por %p139, %p140
      %s143 = sadd.s32 %s142, 1
      %p146 = scmp.eq.s32.totalorder %s18, 3
      %p147 = scmp.ne.s32.totalorder %s142, %s144
      %p148 = scmp.eq.s32.totalorder %s18, 0
      %p149 = por %p147, %p148
      %p150 = scmp.ne.s32.totalorder %s142, %s144
      %p151 = scmp.eq.s32.totalorder %s23, 3
      %p152 = por %p150, %p151
      %p153 = scmp.ne.s32.totalorder %s144, %s145
      %p154 = scmp.eq.s32.totalorder %s23, 0
      %p155 = por %p153, %p154
      %p156 = scmp.ne.s32.totalorder %s144, %s145
      %p157 = scmp.eq.s32.totalorder %s24, 3
      %p158 = por %p156, %p157
      %p160 = scmp.ne.s32.totalorder %s145, %s159
      %p161 = scmp.eq.s32.totalorder %s24, 0
      %p162 = por %p160, %p161
      %s163 = ssub.s32 %s25, %s37
      %p164 = scmp.eq.s32.totalorder %s163, 0
      %s166 = sadd.s32 %s165, 1
      %s167 = scalar_select %p164, %s165, %s166
      %p170 = pneg %p164
      %p171 = scmp.eq.s32.totalorder %s18, 3
      %p172 = por %p170, %p171
      %p173 = scmp.ne.s32.totalorder %s165, %s168
      %p174 = scmp.eq.s32.totalorder %s18, 0
      %p175 = por %p173, %p174
      %p176 = scmp.ne.s32.totalorder %s165, %s168
      %p177 = scmp.eq.s32.totalorder %s23, 3
      %p178 = por %p176, %p177
      %p179 = scmp.ne.s32.totalorder %s168, %s169
      %p180 = scmp.eq.s32.totalorder %s23, 0
      %p181 = por %p179, %p180
      %p182 = scmp.ne.s32.totalorder %s168, %s169
      %p183 = scmp.eq.s32.totalorder %s24, 3
      %p184 = por %p182, %p183
      %p186 = scmp.ne.s32.totalorder %s169, %s185
      %p187 = scmp.eq.s32.totalorder %s24, 0
      %p188 = por %p186, %p187
      %p189 = scmp.le.s32.totalorder 1, %s18
      %p190 = scmp.lt.s32.totalorder %s18, 5
      %p191 = pnand %p189, %p190
      %p192 = pneg %p191
      // Predicated region
      $region9: #{tpu_custom_call.1} parent=5 // pred_check
        _
      $region10: #{tpu_custom_call.1} parent=5 // pred_check_branch
        %194 = sbr.rel (%p191) target = $region12
      $region11: #{tpu_custom_call.1} parent=5 // pred_region
        %s195 = ssub.s32 %s18, 1
        // Predicated region
        $region13: #{tpu_custom_call.1} parent=11 // pred_check
          %p196 = pneg %p82
        $region14: #{tpu_custom_call.1} parent=11 // pred_check_branch
          %198 = sbr.rel (%p196) target = $region16
        $region15: #{tpu_custom_call.1} parent=11 // pred_region
          %s199 = smul.u32 4, %s28
          %s201 = ssub.s32 4096, 4096
          %202 = vsyncadd [#allocation7], %s201
          %s203 = smul.addr %s199, 64
          %s204 = scalar_lea.hbm %s1, %s203
          %s205 = sshll.u32 [#allocation6], 4
          %s206 = int_to_ptr.vmem [resolvable:$true] %s205
          %211 = dma.hbm_to_vmem [thread:$0]  %s204, 4096, %s206, [#allocation7], 256, 256, 16
        $region16: #{tpu_custom_call.1} parent=11 // pred_fallthru
          _
        // Predicated region
        $region17: #{tpu_custom_call.1} parent=11 // pred_check
          %p212 = pneg %p108
        $region18: #{tpu_custom_call.1} parent=11 // pred_check_branch
          %214 = sbr.rel (%p212) target = $region20
        $region19: #{tpu_custom_call.1} parent=11 // pred_region
          %s215 = smul.u32 4, %s28
          %p216 = scmp.lt.s32.totalorder %s215, 3
          %s217 = scalar_select %p216, %s215, 3
          %s218 = scalar_lea.vmem %s2, %s217
          %s219 = smul.u32 4, %s28
        $region20: #{tpu_custom_call.1} parent=11 // pred_fallthru
          _
        // Predicated region
        $region21: #{tpu_custom_call.1} parent=11 // pred_check
          %p220 = pneg %p134
        $region22: #{tpu_custom_call.1} parent=11 // pred_check_branch
          %222 = sbr.rel (%p220) target = $region24
        $region23: #{tpu_custom_call.1} parent=11 // pred_region
          %s223 = smul.u32 64, %s28
          %s225 = ssub.s32 4096, 4096
          %226 = vsyncadd [#allocation7], %s225
          %s227 = smul.addr %s223, 64
          %s228 = scalar_lea.hbm %s3, %s227
          %s229 = sshll.u32 [#allocation8], 4
          %s230 = int_to_ptr.vmem [resolvable:$true] %s229
          %235 = dma.hbm_to_vmem [thread:$0]  %s228, 4096, %s230, [#allocation7], 64, 64, 4
        $region24: #{tpu_custom_call.1} parent=11 // pred_fallthru
          _
        // Predicated region
        $region25: #{tpu_custom_call.1} parent=11 // pred_check
          %p236 = pneg %p155
        $region26: #{tpu_custom_call.1} parent=11 // pred_check_branch
          %238 = sbr.rel (%p236) target = $region28
        $region27: #{tpu_custom_call.1} parent=11 // pred_region
          _
        $region28: #{tpu_custom_call.1} parent=11 // pred_fallthru
          _
      $region12: #{tpu_custom_call.1} parent=5 // pred_fallthru
        _
      %p239 = scmp.lt.s32.totalorder %s18, 4
      // Predicated region
      $region29: #{tpu_custom_call.1} parent=5 // pred_check
        %p240 = pneg %p239
      $region30: #{tpu_custom_call.1} parent=5 // pred_check_branch
        %242 = sbr.rel (%p240) target = $region32
      $region31: #{tpu_custom_call.1} parent=5 // pred_region
        // Predicated region
        $region33: #{tpu_custom_call.1} parent=31 // pred_check
          %p243 = pneg %p50
        $region34: #{tpu_custom_call.1} parent=31 // pred_check_branch
          %245 = sbr.rel (%p243) target = $region36
        $region35: #{tpu_custom_call.1} parent=31 // pred_region
          %s246 = sand.u32 %s40, 1
          %s247 = scalar_lea.sflag [#allocation4], %s246
          %s248 = sand.u32 %s40, 1
          %s249 = smul.addr %s248, 56
          %s250 = scalar_lea.vmem [#allocation3], %s249
          %s251 = smul.u32 14, %s25
          %s253 = ssub.s32 896, 896
          %254 = vsyncadd %s247, %s253
          %s255 = smul.addr %s251, 64
          %s256 = scalar_lea.hbm %s0, %s255
          %s257 = sshll.u32 %s250, 4
          %s258 = int_to_ptr.vmem [resolvable:$true] %s257
          %263 = dma.hbm_to_vmem [thread:$0]  %s256, 896, %s258, %s247, 64, 64, 4
        $region36: #{tpu_custom_call.1} parent=31 // pred_fallthru
          _
      $region32: #{tpu_custom_call.1} parent=5 // pred_fallthru
        _
      %p264 = scmp.le.s32.totalorder 1, %s18
      %p265 = scmp.lt.s32.totalorder %s18, 5
      %p266 = pnand %p264, %p265
      %p267 = pneg %p266
      // Predicated region
      $region37: #{tpu_custom_call.1} parent=5 // pred_check
        _
      $region38: #{tpu_custom_call.1} parent=5 // pred_check_branch
        %269 = sbr.rel (%p266) target = $region40
      $region39: #{tpu_custom_call.1} parent=5 // pred_region
        %s270 = ssub.s32 %s18, 1
        %s271 = sand.u32 %s43, 1
        %s272 = scalar_lea.sflag [#allocation4], %s271
        %s273 = sand.u32 %s43, 1
        %s274 = smul.addr %s273, 56
        %s275 = scalar_lea.vmem [#allocation3], %s274
        // Predicated region
        $region41: #{tpu_custom_call.1} parent=39 // pred_check
          %p276 = pneg %p56
        $region42: #{tpu_custom_call.1} parent=39 // pred_check_branch
          %278 = sbr.rel (%p276) target = $region44
        $region43: #{tpu_custom_call.1} parent=39 // pred_region
          %279 = dma.done %s272, 896
        $region44: #{tpu_custom_call.1} parent=39 // pred_fallthru
          _
        // Predicated region
        $region45: #{tpu_custom_call.1} parent=39 // pred_check
          %p280 = pneg %p82
        $region46: #{tpu_custom_call.1} parent=39 // pred_check_branch
          %282 = sbr.rel (%p280) target = $region48
        $region47: #{tpu_custom_call.1} parent=39 // pred_region
          %283 = dma.done [#allocation7], 4096
        $region48: #{tpu_custom_call.1} parent=39 // pred_fallthru
          _
        // Predicated region
        $region49: #{tpu_custom_call.1} parent=39 // pred_check
          %p284 = pneg %p134
        $region50: #{tpu_custom_call.1} parent=39 // pred_check_branch
          %286 = sbr.rel (%p284) target = $region52
        $region51: #{tpu_custom_call.1} parent=39 // pred_region
          %287 = dma.done [#allocation7], 4096
        $region52: #{tpu_custom_call.1} parent=39 // pred_fallthru
          _
        %s288 = sand.u32 %s43, 1
        %s289 = scalar_lea.sflag [#allocation4], %s288
        %s290 = sand.u32 %s43, 1
        %s291 = smul.addr %s290, 56
        %s292 = scalar_lea.vmem [#allocation3], %s291
        %p293 = pneg %p56
        %p294 = pneg %p53
        %p295 = pneg %p82
        %p296 = pneg %p79
        %s297 = smul.u32 4, %s28
        %p298 = scmp.lt.s32.totalorder %s297, 3
        %s299 = scalar_select %p298, %s297, 3
        %s300 = scalar_lea.vmem %s2, %s299
        %p301 = pneg %p108
        %p302 = pneg %p105
        %p303 = pneg %p134
        %p304 = pneg %p131
        %p305 = pneg %p155
        %p306 = pneg %p152
        %p307 = pneg %p181
        %p308 = pneg %p178
        %s309 = sand.u32 %s168, 1
        %s310 = scalar_lea.sflag [#allocation5], %s309
        %s311 = sand.u32 %s168, 1
        %s312 = smul.addr %s311, 112
        %s313 = scalar_lea.vmem [#allocation9], %s312
        %s314 = smul.u32 14, %s27
        %s315 = smul.u32 4, %s28
        %s316 = smul.u32 4, %s28
        %p317 = scmp.lt.s32.totalorder %s316, 3
        %s318 = scalar_select %p317, %s316, 3
        %s319 = scalar_lea.vmem %s2, %s318
        %s320 = smul.u32 4, %s28
        %s321 = smul.u32 64, %s28
        %s322 = smul.u32 14, %s27
        %p324 = scmp.eq.s32.totalorder %s28, 0
        // Predicated region
        $region53: #{tpu_custom_call.1} parent=39 // pred_check
          %p325 = pneg %p324
        $region54: #{tpu_custom_call.1} parent=39 // pred_check_branch
          %327 = sbr.rel (%p325) target = $region56
        $region55: #{tpu_custom_call.1} parent=39 // pred_region
          %328 = vst [vmem:[#allocation2] sm:$0xff] 0.0
          %329 = vst [vmem:[#allocation2 + $0x8] sm:$0xff] 0.0
          %330 = vst [vmem:[#allocation2 + $0x10] sm:$0xff] 0.0
          %331 = vst [vmem:[#allocation2 + $0x18] sm:$0xff] 0.0
          %332 = vst [vmem:[#allocation2 + $0x20] sm:$0xff] 0.0
          %333 = vst [vmem:[#allocation2 + $0x28] sm:$0xff] 0.0
          %334 = vst [vmem:[#allocation2 + $0x30] sm:$0xff] 0.0
          %335 = vst [vmem:[#allocation2 + $0x38] sm:$0xff] 0.0
          %336 = vst [vmem:[#allocation2 + $0x40] sm:$0xff] 0.0
          %337 = vst [vmem:[#allocation2 + $0x48] sm:$0xff] 0.0
          %338 = vst [vmem:[#allocation2 + $0x50] sm:$0xff] 0.0
          %339 = vst [vmem:[#allocation2 + $0x58] sm:$0xff] 0.0
          %340 = vst [vmem:[#allocation2 + $0x60] sm:$0xff] 0.0
          %341 = vst [vmem:[#allocation2 + $0x68] sm:$0xff] 0.0
        $region56: #{tpu_custom_call.1} parent=39 // pred_fallthru
          _
        %v342 = vld [vmem:[%s275] sm:$0xf]
        %v343 = vld [vmem:[%s275 + $0x4] sm:$0xf]
        %v344 = vld [vmem:[%s275 + $0x8] sm:$0xf]
        %v345 = vld [vmem:[%s275 + $0xc] sm:$0xf]
        %v346 = vld [vmem:[%s275 + $0x10] sm:$0xf]
        %v347 = vld [vmem:[%s275 + $0x14] sm:$0xf]
        %v348 = vld [vmem:[%s275 + $0x18] sm:$0xf]
        %v349 = vld [vmem:[%s275 + $0x1c] sm:$0xf]
        %v350 = vld [vmem:[%s275 + $0x20] sm:$0xf]
        %v351 = vld [vmem:[%s275 + $0x24] sm:$0xf]
        %v352 = vld [vmem:[%s275 + $0x28] sm:$0xf]
        %v353 = vld [vmem:[%s275 + $0x2c] sm:$0xf]
        %v354 = vld [vmem:[%s275 + $0x30] sm:$0xf]
        %v355 = vld [vmem:[%s275 + $0x34] sm:$0xf]
        %v356 = vld [vmem:[#allocation6] sm:$0xff]
        %v357 = vld [vmem:[#allocation6 + $0x8] sm:$0xff]
        %v358 = vld [vmem:[#allocation6 + $0x10] sm:$0xff]
        %v359 = vld [vmem:[#allocation6 + $0x18] sm:$0xff]
        %v360 = vld [vmem:[#allocation6 + $0x20] sm:$0xff]
        %v361 = vld [vmem:[#allocation6 + $0x28] sm:$0xff]
        %v362 = vld [vmem:[#allocation6 + $0x30] sm:$0xff]
        %v363 = vld [vmem:[#allocation6 + $0x38] sm:$0xff]
        %v364 = vld [vmem:[#allocation6 + $0x40] sm:$0xff]
        %v365 = vld [vmem:[#allocation6 + $0x48] sm:$0xff]
        %v366 = vld [vmem:[#allocation6 + $0x50] sm:$0xff]
        %v367 = vld [vmem:[#allocation6 + $0x58] sm:$0xff]
        %v368 = vld [vmem:[#allocation6 + $0x60] sm:$0xff]
        %v369 = vld [vmem:[#allocation6 + $0x68] sm:$0xff]
        %v370 = vld [vmem:[#allocation6 + $0x70] sm:$0xff]
        %v371 = vld [vmem:[#allocation6 + $0x78] sm:$0xff]
        %v372 = vld [vmem:[#allocation6 + $0x80] sm:$0xff]
        %v373 = vld [vmem:[#allocation6 + $0x88] sm:$0xff]
        %v374 = vld [vmem:[#allocation6 + $0x90] sm:$0xff]
        %v375 = vld [vmem:[#allocation6 + $0x98] sm:$0xff]
        %v376 = vld [vmem:[#allocation6 + $0xa0] sm:$0xff]
        %v377 = vld [vmem:[#allocation6 + $0xa8] sm:$0xff]
        %v378 = vld [vmem:[#allocation6 + $0xb0] sm:$0xff]
        %v379 = vld [vmem:[#allocation6 + $0xb8] sm:$0xff]
        %v380 = vld [vmem:[#allocation6 + $0xc0] sm:$0xff]
        %v381 = vld [vmem:[#allocation6 + $0xc8] sm:$0xff]
        %v382 = vld [vmem:[#allocation6 + $0xd0] sm:$0xff]
        %v383 = vld [vmem:[#allocation6 + $0xd8] sm:$0xff]
        %v384 = vld [vmem:[#allocation6 + $0xe0] sm:$0xff]
        %v385 = vld [vmem:[#allocation6 + $0xe8] sm:$0xff]
        %v386 = vld [vmem:[#allocation6 + $0xf0] sm:$0xff]
        %v387 = vld [vmem:[#allocation6 + $0xf8] sm:$0xff]
        %v388 = vld [vmem:[%s319] sm:$0xf]
        %v390 = vlaneseq
        %v391 = vshrl.u32 %v390, 7
        %v392 = vsub.s32 0, %v391
        %v393 = vrot.slane %v388, %v392
        %v394 = vlaneseq
        %v395 = vshrl.u32 %v394, 7
        %v396 = vsub.s32 1, %v395
        %v397 = vrot.slane %v388, %v396
        %v398 = vlaneseq
        %v399 = vshrl.u32 %v398, 7
        %v400 = vsub.s32 2, %v399
        %v401 = vrot.slane %v388, %v400
        %v402 = vlaneseq
        %v403 = vshrl.u32 %v402, 7
        %v404 = vsub.s32 3, %v403
        %v405 = vrot.slane %v388, %v404
        %v424 = vunpack.c.l.b16 %v342
        %v425 = vunpack.c.l.b16 %v343
        %v426 = vunpack.c.l.b16 %v344
        %v427 = vunpack.c.l.b16 %v345
        %v428 = vunpack.c.l.b16 %v346
        %v429 = vunpack.c.l.b16 %v347
        %v430 = vunpack.c.l.b16 %v348
        %v431 = vunpack.c.l.b16 %v349
        %v432 = vunpack.c.l.b16 %v350
        %v433 = vunpack.c.l.b16 %v351
        %v434 = vunpack.c.l.b16 %v352
        %v435 = vunpack.c.l.b16 %v353
        %v436 = vunpack.c.l.b16 %v354
        %v437 = vunpack.c.l.b16 %v355
        %v438 = vpack.c.b16 %v425, %v424
        %v439 = vpack.c.b16 %v427, %v426
        %v440 = vpack.c.b16 %v429, %v428
        %v441 = vpack.c.b16 %v431, %v430
        %v442 = vpack.c.b16 %v433, %v432
        %v443 = vpack.c.b16 %v435, %v434
        %v444 = vpack.c.b16 %v437, %v436
        %v484 = vunpack.c.l.b16 %v356
        %v485 = vunpack.c.h.b16 %v356
        %v486 = vunpack.c.l.b16 %v357
        %v487 = vunpack.c.h.b16 %v357
        %v488 = vunpack.c.l.b16 %v358
        %v489 = vunpack.c.h.b16 %v358
        %v490 = vunpack.c.l.b16 %v359
        %v491 = vunpack.c.h.b16 %v359
        %v492 = vunpack.c.l.b16 %v360
        %v493 = vunpack.c.h.b16 %v360
        %v494 = vunpack.c.l.b16 %v361
        %v495 = vunpack.c.h.b16 %v361
        %v496 = vunpack.c.l.b16 %v362
        %v497 = vunpack.c.h.b16 %v362
        %v498 = vunpack.c.l.b16 %v363
        %v499 = vunpack.c.h.b16 %v363
        %v500 = vunpack.c.l.b16 %v364
        %v501 = vunpack.c.h.b16 %v364
        %v502 = vunpack.c.l.b16 %v365
        %v503 = vunpack.c.h.b16 %v365
        %v504 = vunpack.c.l.b16 %v366
        %v505 = vunpack.c.h.b16 %v366
        %v506 = vunpack.c.l.b16 %v367
        %v507 = vunpack.c.h.b16 %v367
        %v508 = vunpack.c.l.b16 %v368
        %v509 = vunpack.c.h.b16 %v368
        %v510 = vunpack.c.l.b16 %v369
        %v511 = vunpack.c.h.b16 %v369
        %v512 = vunpack.c.l.b16 %v370
        %v513 = vunpack.c.h.b16 %v370
        %v514 = vunpack.c.l.b16 %v371
        %v515 = vunpack.c.h.b16 %v371
        %v516 = vunpack.c.l.b16 %v372
        %v517 = vunpack.c.h.b16 %v372
        %v518 = vunpack.c.l.b16 %v373
        %v519 = vunpack.c.h.b16 %v373
        %v520 = vunpack.c.l.b16 %v374
        %v521 = vunpack.c.h.b16 %v374
        %v522 = vunpack.c.l.b16 %v375
        %v523 = vunpack.c.h.b16 %v375
        %v524 = vunpack.c.l.b16 %v376
        %v525 = vunpack.c.h.b16 %v376
        %v526 = vunpack.c.l.b16 %v377
        %v527 = vunpack.c.h.b16 %v377
        %v528 = vunpack.c.l.b16 %v378
        %v529 = vunpack.c.h.b16 %v378
        %v530 = vunpack.c.l.b16 %v379
        %v531 = vunpack.c.h.b16 %v379
        %v532 = vunpack.c.l.b16 %v380
        %v533 = vunpack.c.h.b16 %v380
        %v534 = vunpack.c.l.b16 %v381
        %v535 = vunpack.c.h.b16 %v381
        %v536 = vunpack.c.l.b16 %v382
        %v537 = vunpack.c.h.b16 %v382
        %v538 = vunpack.c.l.b16 %v383
        %v539 = vunpack.c.h.b16 %v383
        %v540 = vunpack.c.l.b16 %v384
        %v541 = vunpack.c.h.b16 %v384
        %v542 = vunpack.c.l.b16 %v385
        %v543 = vunpack.c.h.b16 %v385
        %v544 = vunpack.c.l.b16 %v386
        %v545 = vunpack.c.h.b16 %v386
        %v546 = vunpack.c.l.b16 %v387
        %v547 = vunpack.c.h.b16 %v387
        %v548 = vpack.c.b16 %v488, %v484
        %v549 = vpack.c.b16 %v489, %v485
        %v550 = vpack.c.b16 %v490, %v486
        %v551 = vpack.c.b16 %v491, %v487
        %v552 = vpack.c.b16 %v496, %v492
        %v553 = vpack.c.b16 %v497, %v493
        %v554 = vpack.c.b16 %v498, %v494
        %v555 = vpack.c.b16 %v499, %v495
        %v556 = vpack.c.b16 %v504, %v500
        %v557 = vpack.c.b16 %v505, %v501
        %v558 = vpack.c.b16 %v506, %v502
        %v559 = vpack.c.b16 %v507, %v503
        %v560 = vpack.c.b16 %v512, %v508
        %v561 = vpack.c.b16 %v513, %v509
        %v562 = vpack.c.b16 %v514, %v510
        %v563 = vpack.c.b16 %v515, %v511
        %v564 = vpack.c.b16 %v520, %v516
        %v565 = vpack.c.b16 %v521, %v517
        %v566 = vpack.c.b16 %v522, %v518
        %v567 = vpack.c.b16 %v523, %v519
        %v568 = vpack.c.b16 %v528, %v524
        %v569 = vpack.c.b16 %v529, %v525
        %v570 = vpack.c.b16 %v530, %v526
        %v571 = vpack.c.b16 %v531, %v527
        %v572 = vpack.c.b16 %v536, %v532
        %v573 = vpack.c.b16 %v537, %v533
        %v574 = vpack.c.b16 %v538, %v534
        %v575 = vpack.c.b16 %v539, %v535
        %v576 = vpack.c.b16 %v544, %v540
        %v577 = vpack.c.b16 %v545, %v541
        %v578 = vpack.c.b16 %v546, %v542
        %v579 = vpack.c.b16 %v547, %v543
        %612 = vmatprep.subr.bf16.mxu0 %v549
        %613 = vmatpush1.bf16.msra.mxu0 %v548
        %614 = vmatprep.subr.bf16.mxu0 %v553
        %615 = vmatpush1.bf16.msra.mxu0 %v552
        %616 = vmatprep.subr.bf16.mxu0 %v557
        %617 = vmatpush1.bf16.msra.mxu0 %v556
        %618 = vmatprep.subr.bf16.mxu0 %v561
        %619 = vmatpush1.bf16.msra.mxu0 %v560
        %620 = vmatprep.subr.bf16.mxu0 %v565
        %621 = vmatpush1.bf16.msra.mxu0 %v564
        %622 = vmatprep.subr.bf16.mxu0 %v569
        %623 = vmatpush1.bf16.msra.mxu0 %v568
        %624 = vmatprep.subr.bf16.mxu0 %v573
        %625 = vmatpush1.bf16.msra.mxu0 %v572
        %626 = vmatprep.subr.bf16.mxu0 %v577
        %627 = vmatpush1.bf16.msra.mxu0 %v576
        %628 = vmatprep.subr.bf16.mxu0 0
        %629 = vmatpush1.bf16.msra.mxu0 0
        %630 = vmatprep.subr.bf16.mxu0 0
        %631 = vmatpush1.bf16.msra.mxu0 0
        %632 = vmatprep.subr.bf16.mxu0 0
        %633 = vmatpush1.bf16.msra.mxu0 0
        %634 = vmatprep.subr.bf16.mxu0 0
        %635 = vmatpush1.bf16.msra.mxu0 0
        %636 = vmatprep.subr.bf16.mxu0 0
        %637 = vmatpush1.bf16.msra.mxu0 0
        %638 = vmatprep.subr.bf16.mxu0 0
        %639 = vmatpush1.bf16.msra.mxu0 0
        %640 = vmatprep.subr.bf16.mxu0 0
        %641 = vmatpush1.bf16.msra.mxu0 0
        %642 = vmatprep.subr.bf16.mxu0 0
        %643 = vmatpush1.bf16.msra.mxu0 0
        %644 = vmatprep.mubr.bf16.mxu0 0
        %645 = vmatmul.mubr.bf16.gmra.mrb[0].mxu0 %v438
        %v646 = vpop.f32.mrb[0].mxu0
        %v647 = vadd.f32 %v393, %v646
        %v648 = vpop.f32.mrb[0].mxu0
        %v649 = vadd.f32 %v397, %v648
        %v650 = vpop.f32.mrb[0].mxu0
        %v651 = vadd.f32 %v393, %v650
        %v652 = vpop.f32.mrb[0].mxu0
        %v653 = vadd.f32 %v397, %v652
        %654 = vmatprep.mubr.bf16.mxu0 0
        %655 = vmatmul.mubr.bf16.gmra.mrb[0].mxu0 %v439
        %v656 = vpop.f32.mrb[0].mxu0
        %v657 = vadd.f32 %v393, %v656
        %v658 = vpop.f32.mrb[0].mxu0
        %v659 = vadd.f32 %v397, %v658
        %v660 = vpop.f32.mrb[0].mxu0
        %v661 = vadd.f32 %v393, %v660
        %v662 = vpop.f32.mrb[0].mxu0
        %v663 = vadd.f32 %v397, %v662
        %664 = vmatprep.mubr.bf16.mxu0 0
        %665 = vmatmul.mubr.bf16.gmra.mrb[0].mxu0 %v440
        %v666 = vpop.f32.mrb[0].mxu0
        %v667 = vadd.f32 %v393, %v666
        %v668 = vpop.f32.mrb[0].mxu0
        %v669 = vadd.f32 %v397, %v668
        %v670 = vpop.f32.mrb[0].mxu0
        %v671 = vadd.f32 %v393, %v670
        %v672 = vpop.f32.mrb[0].mxu0
        %v673 = vadd.f32 %v397, %v672
        %674 = vmatprep.mubr.bf16.mxu0 0
        %675 = vmatmul.mubr.bf16.gmra.mrb[0].mxu0 %v441
        %v676 = vpop.f32.mrb[0].mxu0
        %v677 = vadd.f32 %v393, %v676
        %v678 = vpop.f32.mrb[0].mxu0
        %v679 = vadd.f32 %v397, %v678
        %v680 = vpop.f32.mrb[0].mxu0
        %v681 = vadd.f32 %v393, %v680
        %v682 = vpop.f32.mrb[0].mxu0
        %v683 = vadd.f32 %v397, %v682
        %684 = vmatprep.mubr.bf16.mxu0 0
        %685 = vmatmul.mubr.bf16.gmra.mrb[0].mxu0 %v442
        %v686 = vpop.f32.mrb[0].mxu0
        %v687 = vadd.f32 %v393, %v686
        %v688 = vpop.f32.mrb[0].mxu0
        %v689 = vadd.f32 %v397, %v688
        %v690 = vpop.f32.mrb[0].mxu0
        %v691 = vadd.f32 %v393, %v690
        %v692 = vpop.f32.mrb[0].mxu0
        %v693 = vadd.f32 %v397, %v692
        %694 = vmatprep.mubr.bf16.mxu0 0
        %695 = vmatmul.mubr.bf16.gmra.mrb[0].mxu0 %v443
        %v696 = vpop.f32.mrb[0].mxu0
        %v697 = vadd.f32 %v393, %v696
        %v698 = vpop.f32.mrb[0].mxu0
        %v699 = vadd.f32 %v397, %v698
        %v700 = vpop.f32.mrb[0].mxu0
        %v701 = vadd.f32 %v393, %v700
        %v702 = vpop.f32.mrb[0].mxu0
        %v703 = vadd.f32 %v397, %v702
        %704 = vmatprep.mubr.bf16.mxu0 0
        %705 = vmatmul.mubr.bf16.gmra.mrb[0].mxu0 %v444
        %v706 = vpop.f32.mrb[0].mxu0
        %v707 = vadd.f32 %v393, %v706
        %v708 = vpop.f32.mrb[0].mxu0
        %v709 = vadd.f32 %v397, %v708
        %v710 = vpop.f32.mrb[0].mxu0
        %v711 = vadd.f32 %v393, %v710
        %v712 = vpop.f32.mrb[0].mxu0
        %v713 = vadd.f32 %v397, %v712
        %714 = vdwg.mxu0
        %715 = vmatprep.subr.bf16.mxu0 %v551
        %716 = vmatpush1.bf16.msra.mxu0 %v550
        %717 = vmatprep.subr.bf16.mxu0 %v555
        %718 = vmatpush1.bf16.msra.mxu0 %v554
        %719 = vmatprep.subr.bf16.mxu0 %v559
        %720 = vmatpush1.bf16.msra.mxu0 %v558
        %721 = vmatprep.subr.bf16.mxu0 %v563
        %722 = vmatpush1.bf16.msra.mxu0 %v562
        %723 = vmatprep.subr.bf16.mxu0 %v567
        %724 = vmatpush1.bf16.msra.mxu0 %v566
        %725 = vmatprep.subr.bf16.mxu0 %v571
        %726 = vmatpush1.bf16.msra.mxu0 %v570
        %727 = vmatprep.subr.bf16.mxu0 %v575
        %728 = vmatpush1.bf16.msra.mxu0 %v574
        %729 = vmatprep.subr.bf16.mxu0 %v579
        %730 = vmatpush1.bf16.msra.mxu0 %v578
        %731 = vmatprep.subr.bf16.mxu0 0
        %732 = vmatpush1.bf16.msra.mxu0 0
        %733 = vmatprep.subr.bf16.mxu0 0
        %734 = vmatpush1.bf16.msra.mxu0 0
        %735 = vmatprep.subr.bf16.mxu0 0
        %736 = vmatpush1.bf16.msra.mxu0 0
        %737 = vmatprep.subr.bf16.mxu0 0
        %738 = vmatpush1.bf16.msra.mxu0 0
        %739 = vmatprep.subr.bf16.mxu0 0
        %740 = vmatpush1.bf16.msra.mxu0 0
        %741 = vmatprep.subr.bf16.mxu0 0
        %742 = vmatpush1.bf16.msra.mxu0 0
        %743 = vmatprep.subr.bf16.mxu0 0
        %744 = vmatpush1.bf16.msra.mxu0 0
        %745 = vmatprep.subr.bf16.mxu0 0
        %746 = vmatpush1.bf16.msra.mxu0 0
        %747 = vmatprep.mubr.bf16.mxu0 0
        %748 = vmatmul.mubr.bf16.gmra.mrb[0].mxu0 %v438
        %v749 = vpop.f32.mrb[0].mxu0
        %v750 = vadd.f32 %v401, %v749
        %v751 = vpop.f32.mrb[0].mxu0
        %v752 = vadd.f32 %v405, %v751
        %v753 = vpop.f32.mrb[0].mxu0
        %v754 = vadd.f32 %v401, %v753
        %v755 = vpop.f32.mrb[0].mxu0
        %v756 = vadd.f32 %v405, %v755
        %757 = vmatprep.mubr.bf16.mxu0 0
        %758 = vmatmul.mubr.bf16.gmra.mrb[0].mxu0 %v439
        %v759 = vpop.f32.mrb[0].mxu0
        %v760 = vadd.f32 %v401, %v759
        %v761 = vpop.f32.mrb[0].mxu0
        %v762 = vadd.f32 %v405, %v761
        %v763 = vpop.f32.mrb[0].mxu0
        %v764 = vadd.f32 %v401, %v763
        %v765 = vpop.f32.mrb[0].mxu0
        %v766 = vadd.f32 %v405, %v765
        %767 = vmatprep.mubr.bf16.mxu0 0
        %768 = vmatmul.mubr.bf16.gmra.mrb[0].mxu0 %v440
        %v769 = vpop.f32.mrb[0].mxu0
        %v770 = vadd.f32 %v401, %v769
        %v771 = vpop.f32.mrb[0].mxu0
        %v772 = vadd.f32 %v405, %v771
        %v773 = vpop.f32.mrb[0].mxu0
        %v774 = vadd.f32 %v401, %v773
        %v775 = vpop.f32.mrb[0].mxu0
        %v776 = vadd.f32 %v405, %v775
        %777 = vmatprep.mubr.bf16.mxu0 0
        %778 = vmatmul.mubr.bf16.gmra.mrb[0].mxu0 %v441
        %v779 = vpop.f32.mrb[0].mxu0
        %v780 = vadd.f32 %v401, %v779
        %v781 = vpop.f32.mrb[0].mxu0
        %v782 = vadd.f32 %v405, %v781
        %v783 = vpop.f32.mrb[0].mxu0
        %v784 = vadd.f32 %v401, %v783
        %v785 = vpop.f32.mrb[0].mxu0
        %v786 = vadd.f32 %v405, %v785
        %787 = vmatprep.mubr.bf16.mxu0 0
        %788 = vmatmul.mubr.bf16.gmra.mrb[0].mxu0 %v442
        %v789 = vpop.f32.mrb[0].mxu0
        %v790 = vadd.f32 %v401, %v789
        %v791 = vpop.f32.mrb[0].mxu0
        %v792 = vadd.f32 %v405, %v791
        %v793 = vpop.f32.mrb[0].mxu0
        %v794 = vadd.f32 %v401, %v793
        %v795 = vpop.f32.mrb[0].mxu0
        %v796 = vadd.f32 %v405, %v795
        %797 = vmatprep.mubr.bf16.mxu0 0
        %798 = vmatmul.mubr.bf16.gmra.mrb[0].mxu0 %v443
        %v799 = vpop.f32.mrb[0].mxu0
        %v800 = vadd.f32 %v401, %v799
        %v801 = vpop.f32.mrb[0].mxu0
        %v802 = vadd.f32 %v405, %v801
        %v803 = vpop.f32.mrb[0].mxu0
        %v804 = vadd.f32 %v401, %v803
        %v805 = vpop.f32.mrb[0].mxu0
        %v806 = vadd.f32 %v405, %v805
        %807 = vmatprep.mubr.bf16.mxu0 0
        %808 = vmatmul.mubr.bf16.gmra.mrb[0].mxu0 %v444
        %v809 = vpop.f32.mrb[0].mxu0
        %v810 = vadd.f32 %v401, %v809
        %v811 = vpop.f32.mrb[0].mxu0
        %v812 = vadd.f32 %v405, %v811
        %v813 = vpop.f32.mrb[0].mxu0
        %v814 = vadd.f32 %v401, %v813
        %v815 = vpop.f32.mrb[0].mxu0
        %v816 = vadd.f32 %v405, %v815
        %817 = vdwg.mxu0
        %v818 = vmul.f32 %v647, 0.5
        %v819 = vmul.f32 %v649, 0.5
        %v820 = vmul.f32 %v750, 0.5
        %v821 = vmul.f32 %v752, 0.5
        %v822 = vmul.f32 %v651, 0.5
        %v823 = vmul.f32 %v653, 0.5
        %v824 = vmul.f32 %v754, 0.5
        %v825 = vmul.f32 %v756, 0.5
        %v826 = vmul.f32 %v657, 0.5
        %v827 = vmul.f32 %v659, 0.5
        %v828 = vmul.f32 %v760, 0.5
        %v829 = vmul.f32 %v762, 0.5
        %v830 = vmul.f32 %v661, 0.5
        %v831 = vmul.f32 %v663, 0.5
        %v832 = vmul.f32 %v764, 0.5
        %v833 = vmul.f32 %v766, 0.5
        %v834 = vmul.f32 %v667, 0.5
        %v835 = vmul.f32 %v669, 0.5
        %v836 = vmul.f32 %v770, 0.5
        %v837 = vmul.f32 %v772, 0.5
        %v838 = vmul.f32 %v671, 0.5
        %v839 = vmul.f32 %v673, 0.5
        %v840 = vmul.f32 %v774, 0.5
        %v841 = vmul.f32 %v776, 0.5
        %v842 = vmul.f32 %v677, 0.5
        %v843 = vmul.f32 %v679, 0.5
        %v844 = vmul.f32 %v780, 0.5
        %v845 = vmul.f32 %v782, 0.5
        %v846 = vmul.f32 %v681, 0.5
        %v847 = vmul.f32 %v683, 0.5
        %v848 = vmul.f32 %v784, 0.5
        %v849 = vmul.f32 %v786, 0.5
        %v850 = vmul.f32 %v687, 0.5
        %v851 = vmul.f32 %v689, 0.5
        %v852 = vmul.f32 %v790, 0.5
        %v853 = vmul.f32 %v792, 0.5
        %v854 = vmul.f32 %v691, 0.5
        %v855 = vmul.f32 %v693, 0.5
        %v856 = vmul.f32 %v794, 0.5
        %v857 = vmul.f32 %v796, 0.5
        %v858 = vmul.f32 %v697, 0.5
        %v859 = vmul.f32 %v699, 0.5
        %v860 = vmul.f32 %v800, 0.5
        %v861 = vmul.f32 %v802, 0.5
        %v862 = vmul.f32 %v701, 0.5
        %v863 = vmul.f32 %v703, 0.5
        %v864 = vmul.f32 %v804, 0.5
        %v865 = vmul.f32 %v806, 0.5
        %v866 = vmul.f32 %v707, 0.5
        %v867 = vmul.f32 %v709, 0.5
        %v868 = vmul.f32 %v810, 0.5
        %v869 = vmul.f32 %v812, 0.5
        %v870 = vmul.f32 %v711, 0.5
        %v871 = vmul.f32 %v713, 0.5
        %v872 = vmul.f32 %v814, 0.5
        %v873 = vmul.f32 %v816, 0.5
        %v874 = vmul.f32 %v647, %v647
        %v875 = vmul.f32 %v649, %v649
        %v876 = vmul.f32 %v750, %v750
        %v877 = vmul.f32 %v752, %v752
        %v878 = vmul.f32 %v651, %v651
        %v879 = vmul.f32 %v653, %v653
        %v880 = vmul.f32 %v754, %v754
        %v881 = vmul.f32 %v756, %v756
        %v882 = vmul.f32 %v657, %v657
        %v883 = vmul.f32 %v659, %v659
        %v884 = vmul.f32 %v760, %v760
        %v885 = vmul.f32 %v762, %v762
        %v886 = vmul.f32 %v661, %v661
        %v887 = vmul.f32 %v663, %v663
        %v888 = vmul.f32 %v764, %v764
        %v889 = vmul.f32 %v766, %v766
        %v890 = vmul.f32 %v667, %v667
        %v891 = vmul.f32 %v669, %v669
        %v892 = vmul.f32 %v770, %v770
        %v893 = vmul.f32 %v772, %v772
        %v894 = vmul.f32 %v671, %v671
        %v895 = vmul.f32 %v673, %v673
        %v896 = vmul.f32 %v774, %v774
        %v897 = vmul.f32 %v776, %v776
        %v898 = vmul.f32 %v677, %v677
        %v899 = vmul.f32 %v679, %v679
        %v900 = vmul.f32 %v780, %v780
        %v901 = vmul.f32 %v782, %v782
        %v902 = vmul.f32 %v681, %v681
        %v903 = vmul.f32 %v683, %v683
        %v904 = vmul.f32 %v784, %v784
        %v905 = vmul.f32 %v786, %v786
        %v906 = vmul.f32 %v687, %v687
        %v907 = vmul.f32 %v689, %v689
        %v908 = vmul.f32 %v790, %v790
        %v909 = vmul.f32 %v792, %v792
        %v910 = vmul.f32 %v691, %v691
        %v911 = vmul.f32 %v693, %v693
        %v912 = vmul.f32 %v794, %v794
        %v913 = vmul.f32 %v796, %v796
        %v914 = vmul.f32 %v697, %v697
        %v915 = vmul.f32 %v699, %v699
        %v916 = vmul.f32 %v800, %v800
        %v917 = vmul.f32 %v802, %v802
        %v918 = vmul.f32 %v701, %v701
        %v919 = vmul.f32 %v703, %v703
        %v920 = vmul.f32 %v804, %v804
        %v921 = vmul.f32 %v806, %v806
        %v922 = vmul.f32 %v707, %v707
        %v923 = vmul.f32 %v709, %v709
        %v924 = vmul.f32 %v810, %v810
        %v925 = vmul.f32 %v812, %v812
        %v926 = vmul.f32 %v711, %v711
        %v927 = vmul.f32 %v713, %v713
        %v928 = vmul.f32 %v814, %v814
        %v929 = vmul.f32 %v816, %v816
        %v930 = vmul.f32 %v874, 0.035677407
        %v931 = vmul.f32 %v875, 0.035677407
        %v932 = vmul.f32 %v876, 0.035677407
        %v933 = vmul.f32 %v877, 0.035677407
        %v934 = vmul.f32 %v878, 0.035677407
        %v935 = vmul.f32 %v879, 0.035677407
        %v936 = vmul.f32 %v880, 0.035677407
        %v937 = vmul.f32 %v881, 0.035677407
        %v938 = vmul.f32 %v882, 0.035677407
        %v939 = vmul.f32 %v883, 0.035677407
        %v940 = vmul.f32 %v884, 0.035677407
        %v941 = vmul.f32 %v885, 0.035677407
        %v942 = vmul.f32 %v886, 0.035677407
        %v943 = vmul.f32 %v887, 0.035677407
        %v944 = vmul.f32 %v888, 0.035677407
        %v945 = vmul.f32 %v889, 0.035677407
        %v946 = vmul.f32 %v890, 0.035677407
        %v947 = vmul.f32 %v891, 0.035677407
        %v948 = vmul.f32 %v892, 0.035677407
        %v949 = vmul.f32 %v893, 0.035677407
        %v950 = vmul.f32 %v894, 0.035677407
        %v951 = vmul.f32 %v895, 0.035677407
        %v952 = vmul.f32 %v896, 0.035677407
        %v953 = vmul.f32 %v897, 0.035677407
        %v954 = vmul.f32 %v898, 0.035677407
        %v955 = vmul.f32 %v899, 0.035677407
        %v956 = vmul.f32 %v900, 0.035677407
        %v957 = vmul.f32 %v901, 0.035677407
        %v958 = vmul.f32 %v902, 0.035677407
        %v959 = vmul.f32 %v903, 0.035677407
        %v960 = vmul.f32 %v904, 0.035677407
        %v961 = vmul.f32 %v905, 0.035677407
        %v962 = vmul.f32 %v906, 0.035677407
        %v963 = vmul.f32 %v907, 0.035677407
        %v964 = vmul.f32 %v908, 0.035677407
        %v965 = vmul.f32 %v909, 0.035677407
        %v966 = vmul.f32 %v910, 0.035677407
        %v967 = vmul.f32 %v911, 0.035677407
        %v968 = vmul.f32 %v912, 0.035677407
        %v969 = vmul.f32 %v913, 0.035677407
        %v970 = vmul.f32 %v914, 0.035677407
        %v971 = vmul.f32 %v915, 0.035677407
        %v972 = vmul.f32 %v916, 0.035677407
        %v973 = vmul.f32 %v917, 0.035677407
        %v974 = vmul.f32 %v918, 0.035677407
        %v975 = vmul.f32 %v919, 0.035677407
        %v976 = vmul.f32 %v920, 0.035677407
        %v977 = vmul.f32 %v921, 0.035677407
        %v978 = vmul.f32 %v922, 0.035677407
        %v979 = vmul.f32 %v923, 0.035677407
        %v980 = vmul.f32 %v924, 0.035677407
        %v981 = vmul.f32 %v925, 0.035677407
        %v982 = vmul.f32 %v926, 0.035677407
        %v983 = vmul.f32 %v927, 0.035677407
        %v984 = vmul.f32 %v928, 0.035677407
        %v985 = vmul.f32 %v929, 0.035677407
        %v986 = vadd.f32 %v930, 0.7978846
        %v987 = vadd.f32 %v931, 0.7978846
        %v988 = vadd.f32 %v932, 0.7978846
        %v989 = vadd.f32 %v933, 0.7978846
        %v990 = vadd.f32 %v934, 0.7978846
        %v991 = vadd.f32 %v935, 0.7978846
        %v992 = vadd.f32 %v936, 0.7978846
        %v993 = vadd.f32 %v937, 0.7978846
        %v994 = vadd.f32 %v938, 0.7978846
        %v995 = vadd.f32 %v939, 0.7978846
        %v996 = vadd.f32 %v940, 0.7978846
        %v997 = vadd.f32 %v941, 0.7978846
        %v998 = vadd.f32 %v942, 0.7978846
        %v999 = vadd.f32 %v943, 0.7978846
        %v1000 = vadd.f32 %v944, 0.7978846
        %v1001 = vadd.f32 %v945, 0.7978846
        %v1002 = vadd.f32 %v946, 0.7978846
        %v1003 = vadd.f32 %v947, 0.7978846
        %v1004 = vadd.f32 %v948, 0.7978846
        %v1005 = vadd.f32 %v949, 0.7978846
        %v1006 = vadd.f32 %v950, 0.7978846
        %v1007 = vadd.f32 %v951, 0.7978846
        %v1008 = vadd.f32 %v952, 0.7978846
        %v1009 = vadd.f32 %v953, 0.7978846
        %v1010 = vadd.f32 %v954, 0.7978846
        %v1011 = vadd.f32 %v955, 0.7978846
        %v1012 = vadd.f32 %v956, 0.7978846
        %v1013 = vadd.f32 %v957, 0.7978846
        %v1014 = vadd.f32 %v958, 0.7978846
        %v1015 = vadd.f32 %v959, 0.7978846
        %v1016 = vadd.f32 %v960, 0.7978846
        %v1017 = vadd.f32 %v961, 0.7978846
        %v1018 = vadd.f32 %v962, 0.7978846
        %v1019 = vadd.f32 %v963, 0.7978846
        %v1020 = vadd.f32 %v964, 0.7978846
        %v1021 = vadd.f32 %v965, 0.7978846
        %v1022 = vadd.f32 %v966, 0.7978846
        %v1023 = vadd.f32 %v967, 0.7978846
        %v1024 = vadd.f32 %v968, 0.7978846
        %v1025 = vadd.f32 %v969, 0.7978846
        %v1026 = vadd.f32 %v970, 0.7978846
        %v1027 = vadd.f32 %v971, 0.7978846
        %v1028 = vadd.f32 %v972, 0.7978846
        %v1029 = vadd.f32 %v973, 0.7978846
        %v1030 = vadd.f32 %v974, 0.7978846
        %v1031 = vadd.f32 %v975, 0.7978846
        %v1032 = vadd.f32 %v976, 0.7978846
        %v1033 = vadd.f32 %v977, 0.7978846
        %v1034 = vadd.f32 %v978, 0.7978846
        %v1035 = vadd.f32 %v979, 0.7978846
        %v1036 = vadd.f32 %v980, 0.7978846
        %v1037 = vadd.f32 %v981, 0.7978846
        %v1038 = vadd.f32 %v982, 0.7978846
        %v1039 = vadd.f32 %v983, 0.7978846
        %v1040 = vadd.f32 %v984, 0.7978846
        %v1041 = vadd.f32 %v985, 0.7978846
        %v1042 = vmul.f32 %v647, %v986
        %v1043 = vmul.f32 %v649, %v987
        %v1044 = vmul.f32 %v750, %v988
        %v1045 = vmul.f32 %v752, %v989
        %v1046 = vmul.f32 %v651, %v990
        %v1047 = vmul.f32 %v653, %v991
        %v1048 = vmul.f32 %v754, %v992
        %v1049 = vmul.f32 %v756, %v993
        %v1050 = vmul.f32 %v657, %v994
        %v1051 = vmul.f32 %v659, %v995
        %v1052 = vmul.f32 %v760, %v996
        %v1053 = vmul.f32 %v762, %v997
        %v1054 = vmul.f32 %v661, %v998
        %v1055 = vmul.f32 %v663, %v999
        %v1056 = vmul.f32 %v764, %v1000
        %v1057 = vmul.f32 %v766, %v1001
        %v1058 = vmul.f32 %v667, %v1002
        %v1059 = vmul.f32 %v669, %v1003
        %v1060 = vmul.f32 %v770, %v1004
        %v1061 = vmul.f32 %v772, %v1005
        %v1062 = vmul.f32 %v671, %v1006
        %v1063 = vmul.f32 %v673, %v1007
        %v1064 = vmul.f32 %v774, %v1008
        %v1065 = vmul.f32 %v776, %v1009
        %v1066 = vmul.f32 %v677, %v1010
        %v1067 = vmul.f32 %v679, %v1011
        %v1068 = vmul.f32 %v780, %v1012
        %v1069 = vmul.f32 %v782, %v1013
        %v1070 = vmul.f32 %v681, %v1014
        %v1071 = vmul.f32 %v683, %v1015
        %v1072 = vmul.f32 %v784, %v1016
        %v1073 = vmul.f32 %v786, %v1017
        %v1074 = vmul.f32 %v687, %v1018
        %v1075 = vmul.f32 %v689, %v1019
        %v1076 = vmul.f32 %v790, %v1020
        %v1077 = vmul.f32 %v792, %v1021
        %v1078 = vmul.f32 %v691, %v1022
        %v1079 = vmul.f32 %v693, %v1023
        %v1080 = vmul.f32 %v794, %v1024
        %v1081 = vmul.f32 %v796, %v1025
        %v1082 = vmul.f32 %v697, %v1026
        %v1083 = vmul.f32 %v699, %v1027
        %v1084 = vmul.f32 %v800, %v1028
        %v1085 = vmul.f32 %v802, %v1029
        %v1086 = vmul.f32 %v701, %v1030
        %v1087 = vmul.f32 %v703, %v1031
        %v1088 = vmul.f32 %v804, %v1032
        %v1089 = vmul.f32 %v806, %v1033
        %v1090 = vmul.f32 %v707, %v1034
        %v1091 = vmul.f32 %v709, %v1035
        %v1092 = vmul.f32 %v810, %v1036
        %v1093 = vmul.f32 %v812, %v1037
        %v1094 = vmul.f32 %v711, %v1038
        %v1095 = vmul.f32 %v713, %v1039
        %v1096 = vmul.f32 %v814, %v1040
        %v1097 = vmul.f32 %v816, %v1041
        %v1098 = vtanh.pop %v1042
        %v1099 = vtanh.pop %v1043
        %v1100 = vtanh.pop %v1044
        %v1101 = vtanh.pop %v1045
        %v1102 = vtanh.pop %v1046
        %v1103 = vtanh.pop %v1047
        %v1104 = vtanh.pop %v1048
        %v1105 = vtanh.pop %v1049
        %v1106 = vtanh.pop %v1050
        %v1107 = vtanh.pop %v1051
        %v1108 = vtanh.pop %v1052
        %v1109 = vtanh.pop %v1053
        %v1110 = vtanh.pop %v1054
        %v1111 = vtanh.pop %v1055
        %v1112 = vtanh.pop %v1056
        %v1113 = vtanh.pop %v1057
        %v1114 = vtanh.pop %v1058
        %v1115 = vtanh.pop %v1059
        %v1116 = vtanh.pop %v1060
        %v1117 = vtanh.pop %v1061
        %v1118 = vtanh.pop %v1062
        %v1119 = vtanh.pop %v1063
        %v1120 = vtanh.pop %v1064
        %v1121 = vtanh.pop %v1065
        %v1122 = vtanh.pop %v1066
        %v1123 = vtanh.pop %v1067
        %v1124 = vtanh.pop %v1068
        %v1125 = vtanh.pop %v1069
        %v1126 = vtanh.pop %v1070
        %v1127 = vtanh.pop %v1071
        %v1128 = vtanh.pop %v1072
        %v1129 = vtanh.pop %v1073
        %v1130 = vtanh.pop %v1074
        %v1131 = vtanh.pop %v1075
        %v1132 = vtanh.pop %v1076
        %v1133 = vtanh.pop %v1077
        %v1134 = vtanh.pop %v1078
        %v1135 = vtanh.pop %v1079
        %v1136 = vtanh.pop %v1080
        %v1137 = vtanh.pop %v1081
        %v1138 = vtanh.pop %v1082
        %v1139 = vtanh.pop %v1083
        %v1140 = vtanh.pop %v1084
        %v1141 = vtanh.pop %v1085
        %v1142 = vtanh.pop %v1086
        %v1143 = vtanh.pop %v1087
        %v1144 = vtanh.pop %v1088
        %v1145 = vtanh.pop %v1089
        %v1146 = vtanh.pop %v1090
        %v1147 = vtanh.pop %v1091
        %v1148 = vtanh.pop %v1092
        %v1149 = vtanh.pop %v1093
        %v1150 = vtanh.pop %v1094
        %v1151 = vtanh.pop %v1095
        %v1152 = vtanh.pop %v1096
        %v1153 = vtanh.pop %v1097
        %v1154 = vadd.f32 %v1098, 1.0
        %v1155 = vadd.f32 %v1099, 1.0
        %v1156 = vadd.f32 %v1100, 1.0
        %v1157 = vadd.f32 %v1101, 1.0
        %v1158 = vadd.f32 %v1102, 1.0
        %v1159 = vadd.f32 %v1103, 1.0
        %v1160 = vadd.f32 %v1104, 1.0
        %v1161 = vadd.f32 %v1105, 1.0
        %v1162 = vadd.f32 %v1106, 1.0
        %v1163 = vadd.f32 %v1107, 1.0
        %v1164 = vadd.f32 %v1108, 1.0
        %v1165 = vadd.f32 %v1109, 1.0
        %v1166 = vadd.f32 %v1110, 1.0
        %v1167 = vadd.f32 %v1111, 1.0
        %v1168 = vadd.f32 %v1112, 1.0
        %v1169 = vadd.f32 %v1113, 1.0
        %v1170 = vadd.f32 %v1114, 1.0
        %v1171 = vadd.f32 %v1115, 1.0
        %v1172 = vadd.f32 %v1116, 1.0
        %v1173 = vadd.f32 %v1117, 1.0
        %v1174 = vadd.f32 %v1118, 1.0
        %v1175 = vadd.f32 %v1119, 1.0
        %v1176 = vadd.f32 %v1120, 1.0
        %v1177 = vadd.f32 %v1121, 1.0
        %v1178 = vadd.f32 %v1122, 1.0
        %v1179 = vadd.f32 %v1123, 1.0
        %v1180 = vadd.f32 %v1124, 1.0
        %v1181 = vadd.f32 %v1125, 1.0
        %v1182 = vadd.f32 %v1126, 1.0
        %v1183 = vadd.f32 %v1127, 1.0
        %v1184 = vadd.f32 %v1128, 1.0
        %v1185 = vadd.f32 %v1129, 1.0
        %v1186 = vadd.f32 %v1130, 1.0
        %v1187 = vadd.f32 %v1131, 1.0
        %v1188 = vadd.f32 %v1132, 1.0
        %v1189 = vadd.f32 %v1133, 1.0
        %v1190 = vadd.f32 %v1134, 1.0
        %v1191 = vadd.f32 %v1135, 1.0
        %v1192 = vadd.f32 %v1136, 1.0
        %v1193 = vadd.f32 %v1137, 1.0
        %v1194 = vadd.f32 %v1138, 1.0
        %v1195 = vadd.f32 %v1139, 1.0
        %v1196 = vadd.f32 %v1140, 1.0
        %v1197 = vadd.f32 %v1141, 1.0
        %v1198 = vadd.f32 %v1142, 1.0
        %v1199 = vadd.f32 %v1143, 1.0
        %v1200 = vadd.f32 %v1144, 1.0
        %v1201 = vadd.f32 %v1145, 1.0
        %v1202 = vadd.f32 %v1146, 1.0
        %v1203 = vadd.f32 %v1147, 1.0
        %v1204 = vadd.f32 %v1148, 1.0
        %v1205 = vadd.f32 %v1149, 1.0
        %v1206 = vadd.f32 %v1150, 1.0
        %v1207 = vadd.f32 %v1151, 1.0
        %v1208 = vadd.f32 %v1152, 1.0
        %v1209 = vadd.f32 %v1153, 1.0
        %v1210 = vmul.f32 %v818, %v1154
        %v1211 = vmul.f32 %v819, %v1155
        %v1212 = vmul.f32 %v820, %v1156
        %v1213 = vmul.f32 %v821, %v1157
        %v1214 = vmul.f32 %v822, %v1158
        %v1215 = vmul.f32 %v823, %v1159
        %v1216 = vmul.f32 %v824, %v1160
        %v1217 = vmul.f32 %v825, %v1161
        %v1218 = vmul.f32 %v826, %v1162
        %v1219 = vmul.f32 %v827, %v1163
        %v1220 = vmul.f32 %v828, %v1164
        %v1221 = vmul.f32 %v829, %v1165
        %v1222 = vmul.f32 %v830, %v1166
        %v1223 = vmul.f32 %v831, %v1167
        %v1224 = vmul.f32 %v832, %v1168
        %v1225 = vmul.f32 %v833, %v1169
        %v1226 = vmul.f32 %v834, %v1170
        %v1227 = vmul.f32 %v835, %v1171
        %v1228 = vmul.f32 %v836, %v1172
        %v1229 = vmul.f32 %v837, %v1173
        %v1230 = vmul.f32 %v838, %v1174
        %v1231 = vmul.f32 %v839, %v1175
        %v1232 = vmul.f32 %v840, %v1176
        %v1233 = vmul.f32 %v841, %v1177
        %v1234 = vmul.f32 %v842, %v1178
        %v1235 = vmul.f32 %v843, %v1179
        %v1236 = vmul.f32 %v844, %v1180
        %v1237 = vmul.f32 %v845, %v1181
        %v1238 = vmul.f32 %v846, %v1182
        %v1239 = vmul.f32 %v847, %v1183
        %v1240 = vmul.f32 %v848, %v1184
        %v1241 = vmul.f32 %v849, %v1185
        %v1242 = vmul.f32 %v850, %v1186
        %v1243 = vmul.f32 %v851, %v1187
        %v1244 = vmul.f32 %v852, %v1188
        %v1245 = vmul.f32 %v853, %v1189
        %v1246 = vmul.f32 %v854, %v1190
        %v1247 = vmul.f32 %v855, %v1191
        %v1248 = vmul.f32 %v856, %v1192
        %v1249 = vmul.f32 %v857, %v1193
        %v1250 = vmul.f32 %v858, %v1194
        %v1251 = vmul.f32 %v859, %v1195
        %v1252 = vmul.f32 %v860, %v1196
        %v1253 = vmul.f32 %v861, %v1197
        %v1254 = vmul.f32 %v862, %v1198
        %v1255 = vmul.f32 %v863, %v1199
        %v1256 = vmul.f32 %v864, %v1200
        %v1257 = vmul.f32 %v865, %v1201
        %v1258 = vmul.f32 %v866, %v1202
        %v1259 = vmul.f32 %v867, %v1203
        %v1260 = vmul.f32 %v868, %v1204
        %v1261 = vmul.f32 %v869, %v1205
        %v1262 = vmul.f32 %v870, %v1206
        %v1263 = vmul.f32 %v871, %v1207
        %v1264 = vmul.f32 %v872, %v1208
        %v1265 = vmul.f32 %v873, %v1209
        %v1266 = vld [vmem:[#allocation2] sm:$0xff]
        %v1267 = vld [vmem:[#allocation2 + $0x8] sm:$0xff]
        %v1268 = vld [vmem:[#allocation2 + $0x10] sm:$0xff]
        %v1269 = vld [vmem:[#allocation2 + $0x18] sm:$0xff]
        %v1270 = vld [vmem:[#allocation2 + $0x20] sm:$0xff]
        %v1271 = vld [vmem:[#allocation2 + $0x28] sm:$0xff]
        %v1272 = vld [vmem:[#allocation2 + $0x30] sm:$0xff]
        %v1273 = vld [vmem:[#allocation2 + $0x38] sm:$0xff]
        %v1274 = vld [vmem:[#allocation2 + $0x40] sm:$0xff]
        %v1275 = vld [vmem:[#allocation2 + $0x48] sm:$0xff]
        %v1276 = vld [vmem:[#allocation2 + $0x50] sm:$0xff]
        %v1277 = vld [vmem:[#allocation2 + $0x58] sm:$0xff]
        %v1278 = vld [vmem:[#allocation2 + $0x60] sm:$0xff]
        %v1279 = vld [vmem:[#allocation2 + $0x68] sm:$0xff]
        %v1280 = vpack.c.bf16 %v1214, %v1210
        %v1281 = vpack.c.bf16 %v1215, %v1211
        %v1282 = vpack.c.bf16 %v1216, %v1212
        %v1283 = vpack.c.bf16 %v1217, %v1213
        %v1284 = vpack.c.bf16 %v1222, %v1218
        %v1285 = vpack.c.bf16 %v1223, %v1219
        %v1286 = vpack.c.bf16 %v1224, %v1220
        %v1287 = vpack.c.bf16 %v1225, %v1221
        %v1288 = vpack.c.bf16 %v1230, %v1226
        %v1289 = vpack.c.bf16 %v1231, %v1227
        %v1290 = vpack.c.bf16 %v1232, %v1228
        %v1291 = vpack.c.bf16 %v1233, %v1229
        %v1292 = vpack.c.bf16 %v1238, %v1234
        %v1293 = vpack.c.bf16 %v1239, %v1235
        %v1294 = vpack.c.bf16 %v1240, %v1236
        %v1295 = vpack.c.bf16 %v1241, %v1237
        %v1296 = vpack.c.bf16 %v1246, %v1242
        %v1297 = vpack.c.bf16 %v1247, %v1243
        %v1298 = vpack.c.bf16 %v1248, %v1244
        %v1299 = vpack.c.bf16 %v1249, %v1245
        %v1300 = vpack.c.bf16 %v1254, %v1250
        %v1301 = vpack.c.bf16 %v1255, %v1251
        %v1302 = vpack.c.bf16 %v1256, %v1252
        %v1303 = vpack.c.bf16 %v1257, %v1253
        %v1304 = vpack.c.bf16 %v1262, %v1258
        %v1305 = vpack.c.bf16 %v1263, %v1259
        %v1306 = vpack.c.bf16 %v1264, %v1260
        %v1307 = vpack.c.bf16 %v1265, %v1261
        %v1308 = vld [vmem:[#allocation8] sm:$0xf]
        %v1309 = vld [vmem:[#allocation8 + $0x4] sm:$0xf]
        %v1310 = vld [vmem:[#allocation8 + $0x8] sm:$0xf]
        %v1311 = vld [vmem:[#allocation8 + $0xc] sm:$0xf]
        %v1312 = vld [vmem:[#allocation8 + $0x10] sm:$0xf]
        %v1313 = vld [vmem:[#allocation8 + $0x14] sm:$0xf]
        %v1314 = vld [vmem:[#allocation8 + $0x18] sm:$0xf]
        %v1315 = vld [vmem:[#allocation8 + $0x1c] sm:$0xf]
        %v1316 = vld [vmem:[#allocation8 + $0x20] sm:$0xf]
        %v1317 = vld [vmem:[#allocation8 + $0x24] sm:$0xf]
        %v1318 = vld [vmem:[#allocation8 + $0x28] sm:$0xf]
        %v1319 = vld [vmem:[#allocation8 + $0x2c] sm:$0xf]
        %v1320 = vld [vmem:[#allocation8 + $0x30] sm:$0xf]
        %v1321 = vld [vmem:[#allocation8 + $0x34] sm:$0xf]
        %v1322 = vld [vmem:[#allocation8 + $0x38] sm:$0xf]
        %v1323 = vld [vmem:[#allocation8 + $0x3c] sm:$0xf]
        %v1324 = vld [vmem:[#allocation8 + $0x40] sm:$0xf]
        %v1325 = vld [vmem:[#allocation8 + $0x44] sm:$0xf]
        %v1326 = vld [vmem:[#allocation8 + $0x48] sm:$0xf]
        %v1327 = vld [vmem:[#allocation8 + $0x4c] sm:$0xf]
        %v1328 = vld [vmem:[#allocation8 + $0x50] sm:$0xf]
        %v1329 = vld [vmem:[#allocation8 + $0x54] sm:$0xf]
        %v1330 = vld [vmem:[#allocation8 + $0x58] sm:$0xf]
        %v1331 = vld [vmem:[#allocation8 + $0x5c] sm:$0xf]
        %v1332 = vld [vmem:[#allocation8 + $0x60] sm:$0xf]
        %v1333 = vld [vmem:[#allocation8 + $0x64] sm:$0xf]
        %v1334 = vld [vmem:[#allocation8 + $0x68] sm:$0xf]
        %v1335 = vld [vmem:[#allocation8 + $0x6c] sm:$0xf]
        %v1336 = vld [vmem:[#allocation8 + $0x70] sm:$0xf]
        %v1337 = vld [vmem:[#allocation8 + $0x74] sm:$0xf]
        %v1338 = vld [vmem:[#allocation8 + $0x78] sm:$0xf]
        %v1339 = vld [vmem:[#allocation8 + $0x7c] sm:$0xf]
        %v1340 = vld [vmem:[#allocation8 + $0x80] sm:$0xf]
        %v1341 = vld [vmem:[#allocation8 + $0x84] sm:$0xf]
        %v1342 = vld [vmem:[#allocation8 + $0x88] sm:$0xf]
        %v1343 = vld [vmem:[#allocation8 + $0x8c] sm:$0xf]
        %v1344 = vld [vmem:[#allocation8 + $0x90] sm:$0xf]
        %v1345 = vld [vmem:[#allocation8 + $0x94] sm:$0xf]
        %v1346 = vld [vmem:[#allocation8 + $0x98] sm:$0xf]
        %v1347 = vld [vmem:[#allocation8 + $0x9c] sm:$0xf]
        %v1348 = vld [vmem:[#allocation8 + $0xa0] sm:$0xf]
        %v1349 = vld [vmem:[#allocation8 + $0xa4] sm:$0xf]
        %v1350 = vld [vmem:[#allocation8 + $0xa8] sm:$0xf]
        %v1351 = vld [vmem:[#allocation8 + $0xac] sm:$0xf]
        %v1352 = vld [vmem:[#allocation8 + $0xb0] sm:$0xf]
        %v1353 = vld [vmem:[#allocation8 + $0xb4] sm:$0xf]
        %v1354 = vld [vmem:[#allocation8 + $0xb8] sm:$0xf]
        %v1355 = vld [vmem:[#allocation8 + $0xbc] sm:$0xf]
        %v1356 = vld [vmem:[#allocation8 + $0xc0] sm:$0xf]
        %v1357 = vld [vmem:[#allocation8 + $0xc4] sm:$0xf]
        %v1358 = vld [vmem:[#allocation8 + $0xc8] sm:$0xf]
        %v1359 = vld [vmem:[#allocation8 + $0xcc] sm:$0xf]
        %v1360 = vld [vmem:[#allocation8 + $0xd0] sm:$0xf]
        %v1361 = vld [vmem:[#allocation8 + $0xd4] sm:$0xf]
        %v1362 = vld [vmem:[#allocation8 + $0xd8] sm:$0xf]
        %v1363 = vld [vmem:[#allocation8 + $0xdc] sm:$0xf]
        %v1364 = vld [vmem:[#allocation8 + $0xe0] sm:$0xf]
        %v1365 = vld [vmem:[#allocation8 + $0xe4] sm:$0xf]
        %v1366 = vld [vmem:[#allocation8 + $0xe8] sm:$0xf]
        %v1367 = vld [vmem:[#allocation8 + $0xec] sm:$0xf]
        %v1368 = vld [vmem:[#allocation8 + $0xf0] sm:$0xf]
        %v1369 = vld [vmem:[#allocation8 + $0xf4] sm:$0xf]
        %v1370 = vld [vmem:[#allocation8 + $0xf8] sm:$0xf]
        %v1371 = vld [vmem:[#allocation8 + $0xfc] sm:$0xf]
        %v1436 = vunpack.c.l.b16 %v1308
        %v1437 = vunpack.c.l.b16 %v1309
        %v1438 = vunpack.c.l.b16 %v1310
        %v1439 = vunpack.c.l.b16 %v1311
        %v1440 = vunpack.c.l.b16 %v1312
        %v1441 = vunpack.c.l.b16 %v1313
        %v1442 = vunpack.c.l.b16 %v1314
        %v1443 = vunpack.c.l.b16 %v1315
        %v1444 = vunpack.c.l.b16 %v1316
        %v1445 = vunpack.c.l.b16 %v1317
        %v1446 = vunpack.c.l.b16 %v1318
        %v1447 = vunpack.c.l.b16 %v1319
        %v1448 = vunpack.c.l.b16 %v1320
        %v1449 = vunpack.c.l.b16 %v1321
        %v1450 = vunpack.c.l.b16 %v1322
        %v1451 = vunpack.c.l.b16 %v1323
        %v1452 = vunpack.c.l.b16 %v1324
        %v1453 = vunpack.c.l.b16 %v1325
        %v1454 = vunpack.c.l.b16 %v1326
        %v1455 = vunpack.c.l.b16 %v1327
        %v1456 = vunpack.c.l.b16 %v1328
        %v1457 = vunpack.c.l.b16 %v1329
        %v1458 = vunpack.c.l.b16 %v1330
        %v1459 = vunpack.c.l.b16 %v1331
        %v1460 = vunpack.c.l.b16 %v1332
        %v1461 = vunpack.c.l.b16 %v1333
        %v1462 = vunpack.c.l.b16 %v1334
        %v1463 = vunpack.c.l.b16 %v1335
        %v1464 = vunpack.c.l.b16 %v1336
        %v1465 = vunpack.c.l.b16 %v1337
        %v1466 = vunpack.c.l.b16 %v1338
        %v1467 = vunpack.c.l.b16 %v1339
        %v1468 = vunpack.c.l.b16 %v1340
        %v1469 = vunpack.c.l.b16 %v1341
        %v1470 = vunpack.c.l.b16 %v1342
        %v1471 = vunpack.c.l.b16 %v1343
        %v1472 = vunpack.c.l.b16 %v1344
        %v1473 = vunpack.c.l.b16 %v1345
        %v1474 = vunpack.c.l.b16 %v1346
        %v1475 = vunpack.c.l.b16 %v1347
        %v1476 = vunpack.c.l.b16 %v1348
        %v1477 = vunpack.c.l.b16 %v1349
        %v1478 = vunpack.c.l.b16 %v1350
        %v1479 = vunpack.c.l.b16 %v1351
        %v1480 = vunpack.c.l.b16 %v1352
        %v1481 = vunpack.c.l.b16 %v1353
        %v1482 = vunpack.c.l.b16 %v1354
        %v1483 = vunpack.c.l.b16 %v1355
        %v1484 = vunpack.c.l.b16 %v1356
        %v1485 = vunpack.c.l.b16 %v1357
        %v1486 = vunpack.c.l.b16 %v1358
        %v1487 = vunpack.c.l.b16 %v1359
        %v1488 = vunpack.c.l.b16 %v1360
        %v1489 = vunpack.c.l.b16 %v1361
        %v1490 = vunpack.c.l.b16 %v1362
        %v1491 = vunpack.c.l.b16 %v1363
        %v1492 = vunpack.c.l.b16 %v1364
        %v1493 = vunpack.c.l.b16 %v1365
        %v1494 = vunpack.c.l.b16 %v1366
        %v1495 = vunpack.c.l.b16 %v1367
        %v1496 = vunpack.c.l.b16 %v1368
        %v1497 = vunpack.c.l.b16 %v1369
        %v1498 = vunpack.c.l.b16 %v1370
        %v1499 = vunpack.c.l.b16 %v1371
        %v1500 = vpack.c.b16 %v1437, %v1436
        %v1501 = vpack.c.b16 %v1439, %v1438
        %v1502 = vpack.c.b16 %v1441, %v1440
        %v1503 = vpack.c.b16 %v1443, %v1442
        %v1504 = vpack.c.b16 %v1445, %v1444
        %v1505 = vpack.c.b16 %v1447, %v1446
        %v1506 = vpack.c.b16 %v1449, %v1448
        %v1507 = vpack.c.b16 %v1451, %v1450
        %v1508 = vpack.c.b16 %v1453, %v1452
        %v1509 = vpack.c.b16 %v1455, %v1454
        %v1510 = vpack.c.b16 %v1457, %v1456
        %v1511 = vpack.c.b16 %v1459, %v1458
        %v1512 = vpack.c.b16 %v1461, %v1460
        %v1513 = vpack.c.b16 %v1463, %v1462
        %v1514 = vpack.c.b16 %v1465, %v1464
        %v1515 = vpack.c.b16 %v1467, %v1466
        %v1516 = vpack.c.b16 %v1469, %v1468
        %v1517 = vpack.c.b16 %v1471, %v1470
        %v1518 = vpack.c.b16 %v1473, %v1472
        %v1519 = vpack.c.b16 %v1475, %v1474
        %v1520 = vpack.c.b16 %v1477, %v1476
        %v1521 = vpack.c.b16 %v1479, %v1478
        %v1522 = vpack.c.b16 %v1481, %v1480
        %v1523 = vpack.c.b16 %v1483, %v1482
        %v1524 = vpack.c.b16 %v1485, %v1484
        %v1525 = vpack.c.b16 %v1487, %v1486
        %v1526 = vpack.c.b16 %v1489, %v1488
        %v1527 = vpack.c.b16 %v1491, %v1490
        %v1528 = vpack.c.b16 %v1493, %v1492
        %v1529 = vpack.c.b16 %v1495, %v1494
        %v1530 = vpack.c.b16 %v1497, %v1496
        %v1531 = vpack.c.b16 %v1499, %v1498
        %1564 = vmatprep.subr.bf16.mxu0 0
        %1565 = vmatpush1.bf16.msra.mxu0 %v1500
        %1566 = vmatprep.subr.bf16.mxu0 0
        %1567 = vmatpush1.bf16.msra.mxu0 %v1501
        %1568 = vmatprep.subr.bf16.mxu0 0
        %1569 = vmatpush1.bf16.msra.mxu0 %v1502
        %1570 = vmatprep.subr.bf16.mxu0 0
        %1571 = vmatpush1.bf16.msra.mxu0 %v1503
        %1572 = vmatprep.subr.bf16.mxu0 0
        %1573 = vmatpush1.bf16.msra.mxu0 %v1504
        %1574 = vmatprep.subr.bf16.mxu0 0
        %1575 = vmatpush1.bf16.msra.mxu0 %v1505
        %1576 = vmatprep.subr.bf16.mxu0 0
        %1577 = vmatpush1.bf16.msra.mxu0 %v1506
        %1578 = vmatprep.subr.bf16.mxu0 0
        %1579 = vmatpush1.bf16.msra.mxu0 %v1507
        %1580 = vmatprep.subr.bf16.mxu0 0
        %1581 = vmatpush1.bf16.msra.mxu0 %v1508
        %1582 = vmatprep.subr.bf16.mxu0 0
        %1583 = vmatpush1.bf16.msra.mxu0 %v1509
        %1584 = vmatprep.subr.bf16.mxu0 0
        %1585 = vmatpush1.bf16.msra.mxu0 %v1510
        %1586 = vmatprep.subr.bf16.mxu0 0
        %1587 = vmatpush1.bf16.msra.mxu0 %v1511
        %1588 = vmatprep.subr.bf16.mxu0 0
        %1589 = vmatpush1.bf16.msra.mxu0 %v1512
        %1590 = vmatprep.subr.bf16.mxu0 0
        %1591 = vmatpush1.bf16.msra.mxu0 %v1513
        %1592 = vmatprep.subr.bf16.mxu0 0
        %1593 = vmatpush1.bf16.msra.mxu0 %v1514
        %1594 = vmatprep.subr.bf16.mxu0 0
        %1595 = vmatpush1.bf16.msra.mxu0 %v1515
        %1596 = vmatprep.mubr.bf16.mxu0 %v1281
        %1597 = vmatmul.mubr.bf16.gmra.mrb[0].mxu0 %v1280
        %v1598 = vpop.f32.mrb[0].mxu0
        %v1599 = vadd.f32 0.0, %v1598
        %v1600 = vpop.f32.mrb[0].mxu0
        %v1601 = vpop.f32.mrb[0].mxu0
        %v1602 = vadd.f32 0.0, %v1601
        %v1603 = vpop.f32.mrb[0].mxu0
        %1604 = vmatprep.mubr.bf16.mxu0 %v1285
        %1605 = vmatmul.mubr.bf16.gmra.mrb[0].mxu0 %v1284
        %v1606 = vpop.f32.mrb[0].mxu0
        %v1607 = vadd.f32 0.0, %v1606
        %v1608 = vpop.f32.mrb[0].mxu0
        %v1609 = vpop.f32.mrb[0].mxu0
        %v1610 = vadd.f32 0.0, %v1609
        %v1611 = vpop.f32.mrb[0].mxu0
        %1612 = vmatprep.mubr.bf16.mxu0 %v1289
        %1613 = vmatmul.mubr.bf16.gmra.mrb[0].mxu0 %v1288
        %v1614 = vpop.f32.mrb[0].mxu0
        %v1615 = vadd.f32 0.0, %v1614
        %v1616 = vpop.f32.mrb[0].mxu0
        %v1617 = vpop.f32.mrb[0].mxu0
        %v1618 = vadd.f32 0.0, %v1617
        %v1619 = vpop.f32.mrb[0].mxu0
        %1620 = vmatprep.mubr.bf16.mxu0 %v1293
        %1621 = vmatmul.mubr.bf16.gmra.mrb[0].mxu0 %v1292
        %v1622 = vpop.f32.mrb[0].mxu0
        %v1623 = vadd.f32 0.0, %v1622
        %v1624 = vpop.f32.mrb[0].mxu0
        %v1625 = vpop.f32.mrb[0].mxu0
        %v1626 = vadd.f32 0.0, %v1625
        %v1627 = vpop.f32.mrb[0].mxu0
        %1628 = vmatprep.mubr.bf16.mxu0 %v1297
        %1629 = vmatmul.mubr.bf16.gmra.mrb[0].mxu0 %v1296
        %v1630 = vpop.f32.mrb[0].mxu0
        %v1631 = vadd.f32 0.0, %v1630
        %v1632 = vpop.f32.mrb[0].mxu0
        %v1633 = vpop.f32.mrb[0].mxu0
        %v1634 = vadd.f32 0.0, %v1633
        %v1635 = vpop.f32.mrb[0].mxu0
        %1636 = vmatprep.mubr.bf16.mxu0 %v1301
        %1637 = vmatmul.mubr.bf16.gmra.mrb[0].mxu0 %v1300
        %v1638 = vpop.f32.mrb[0].mxu0
        %v1639 = vadd.f32 0.0, %v1638
        %v1640 = vpop.f32.mrb[0].mxu0
        %v1641 = vpop.f32.mrb[0].mxu0
        %v1642 = vadd.f32 0.0, %v1641
        %v1643 = vpop.f32.mrb[0].mxu0
        %1644 = vmatprep.mubr.bf16.mxu0 %v1305
        %1645 = vmatmul.mubr.bf16.gmra.mrb[0].mxu0 %v1304
        %v1646 = vpop.f32.mrb[0].mxu0
        %v1647 = vadd.f32 0.0, %v1646
        %v1648 = vpop.f32.mrb[0].mxu0
        %v1649 = vpop.f32.mrb[0].mxu0
        %v1650 = vadd.f32 0.0, %v1649
        %v1651 = vpop.f32.mrb[0].mxu0
        %1652 = vdwg.mxu0
        %1653 = vmatprep.subr.bf16.mxu0 0
        %1654 = vmatpush1.bf16.msra.mxu0 %v1516
        %1655 = vmatprep.subr.bf16.mxu0 0
        %1656 = vmatpush1.bf16.msra.mxu0 %v1517
        %1657 = vmatprep.subr.bf16.mxu0 0
        %1658 = vmatpush1.bf16.msra.mxu0 %v1518
        %1659 = vmatprep.subr.bf16.mxu0 0
        %1660 = vmatpush1.bf16.msra.mxu0 %v1519
        %1661 = vmatprep.subr.bf16.mxu0 0
        %1662 = vmatpush1.bf16.msra.mxu0 %v1520
        %1663 = vmatprep.subr.bf16.mxu0 0
        %1664 = vmatpush1.bf16.msra.mxu0 %v1521
        %1665 = vmatprep.subr.bf16.mxu0 0
        %1666 = vmatpush1.bf16.msra.mxu0 %v1522
        %1667 = vmatprep.subr.bf16.mxu0 0
        %1668 = vmatpush1.bf16.msra.mxu0 %v1523
        %1669 = vmatprep.subr.bf16.mxu0 0
        %1670 = vmatpush1.bf16.msra.mxu0 %v1524
        %1671 = vmatprep.subr.bf16.mxu0 0
        %1672 = vmatpush1.bf16.msra.mxu0 %v1525
        %1673 = vmatprep.subr.bf16.mxu0 0
        %1674 = vmatpush1.bf16.msra.mxu0 %v1526
        %1675 = vmatprep.subr.bf16.mxu0 0
        %1676 = vmatpush1.bf16.msra.mxu0 %v1527
        %1677 = vmatprep.subr.bf16.mxu0 0
        %1678 = vmatpush1.bf16.msra.mxu0 %v1528
        %1679 = vmatprep.subr.bf16.mxu0 0
        %1680 = vmatpush1.bf16.msra.mxu0 %v1529
        %1681 = vmatprep.subr.bf16.mxu0 0
        %1682 = vmatpush1.bf16.msra.mxu0 %v1530
        %1683 = vmatprep.subr.bf16.mxu0 0
        %1684 = vmatpush1.bf16.msra.mxu0 %v1531
        %1685 = vmatprep.mubr.bf16.mxu0 %v1283
        %1686 = vmatmul.mubr.bf16.gmra.mrb[0].mxu0 %v1282
        %v1687 = vpop.f32.mrb[0].mxu0
        %v1688 = vadd.f32 %v1599, %v1687
        %v1689 = vpop.f32.mrb[0].mxu0
        %v1690 = vpop.f32.mrb[0].mxu0
        %v1691 = vadd.f32 %v1602, %v1690
        %v1692 = vpop.f32.mrb[0].mxu0
        %1693 = vmatprep.mubr.bf16.mxu0 %v1287
        %1694 = vmatmul.mubr.bf16.gmra.mrb[0].mxu0 %v1286
        %v1695 = vpop.f32.mrb[0].mxu0
        %v1696 = vadd.f32 %v1607, %v1695
        %v1697 = vpop.f32.mrb[0].mxu0
        %v1698 = vpop.f32.mrb[0].mxu0
        %v1699 = vadd.f32 %v1610, %v1698
        %v1700 = vpop.f32.mrb[0].mxu0
        %1701 = vmatprep.mubr.bf16.mxu0 %v1291
        %1702 = vmatmul.mubr.bf16.gmra.mrb[0].mxu0 %v1290
        %v1703 = vpop.f32.mrb[0].mxu0
        %v1704 = vadd.f32 %v1615, %v1703
        %v1705 = vpop.f32.mrb[0].mxu0
        %v1706 = vpop.f32.mrb[0].mxu0
        %v1707 = vadd.f32 %v1618, %v1706
        %v1708 = vpop.f32.mrb[0].mxu0
        %1709 = vmatprep.mubr.bf16.mxu0 %v1295
        %1710 = vmatmul.mubr.bf16.gmra.mrb[0].mxu0 %v1294
        %v1711 = vpop.f32.mrb[0].mxu0
        %v1712 = vadd.f32 %v1623, %v1711
        %v1713 = vpop.f32.mrb[0].mxu0
        %v1714 = vpop.f32.mrb[0].mxu0
        %v1715 = vadd.f32 %v1626, %v1714
        %v1716 = vpop.f32.mrb[0].mxu0
        %1717 = vmatprep.mubr.bf16.mxu0 %v1299
        %1718 = vmatmul.mubr.bf16.gmra.mrb[0].mxu0 %v1298
        %v1719 = vpop.f32.mrb[0].mxu0
        %v1720 = vadd.f32 %v1631, %v1719
        %v1721 = vpop.f32.mrb[0].mxu0
        %v1722 = vpop.f32.mrb[0].mxu0
        %v1723 = vadd.f32 %v1634, %v1722
        %v1724 = vpop.f32.mrb[0].mxu0
        %1725 = vmatprep.mubr.bf16.mxu0 %v1303
        %1726 = vmatmul.mubr.bf16.gmra.mrb[0].mxu0 %v1302
        %v1727 = vpop.f32.mrb[0].mxu0
        %v1728 = vadd.f32 %v1639, %v1727
        %v1729 = vpop.f32.mrb[0].mxu0
        %v1730 = vpop.f32.mrb[0].mxu0
        %v1731 = vadd.f32 %v1642, %v1730
        %v1732 = vpop.f32.mrb[0].mxu0
        %1733 = vmatprep.mubr.bf16.mxu0 %v1307
        %1734 = vmatmul.mubr.bf16.gmra.mrb[0].mxu0 %v1306
        %v1735 = vpop.f32.mrb[0].mxu0
        %v1736 = vadd.f32 %v1647, %v1735
        %v1737 = vpop.f32.mrb[0].mxu0
        %v1738 = vpop.f32.mrb[0].mxu0
        %v1739 = vadd.f32 %v1650, %v1738
        %v1740 = vpop.f32.mrb[0].mxu0
        %1741 = vdwg.mxu0
        %v1742 = vadd.f32 %v1266, %v1688
        %v1743 = vadd.f32 %v1267, %v1691
        %v1744 = vadd.f32 %v1268, %v1696
        %v1745 = vadd.f32 %v1269, %v1699
        %v1746 = vadd.f32 %v1270, %v1704
        %v1747 = vadd.f32 %v1271, %v1707
        %v1748 = vadd.f32 %v1272, %v1712
        %v1749 = vadd.f32 %v1273, %v1715
        %v1750 = vadd.f32 %v1274, %v1720
        %v1751 = vadd.f32 %v1275, %v1723
        %v1752 = vadd.f32 %v1276, %v1728
        %v1753 = vadd.f32 %v1277, %v1731
        %v1754 = vadd.f32 %v1278, %v1736
        %v1755 = vadd.f32 %v1279, %v1739
        %1756 = vst [vmem:[#allocation2] sm:$0xff] %v1742
        %1757 = vst [vmem:[#allocation2 + $0x8] sm:$0xff] %v1743
        %1758 = vst [vmem:[#allocation2 + $0x10] sm:$0xff] %v1744
        %1759 = vst [vmem:[#allocation2 + $0x18] sm:$0xff] %v1745
        %1760 = vst [vmem:[#allocation2 + $0x20] sm:$0xff] %v1746
        %1761 = vst [vmem:[#allocation2 + $0x28] sm:$0xff] %v1747
        %1762 = vst [vmem:[#allocation2 + $0x30] sm:$0xff] %v1748
        %1763 = vst [vmem:[#allocation2 + $0x38] sm:$0xff] %v1749
        %1764 = vst [vmem:[#allocation2 + $0x40] sm:$0xff] %v1750
        %1765 = vst [vmem:[#allocation2 + $0x48] sm:$0xff] %v1751
        %1766 = vst [vmem:[#allocation2 + $0x50] sm:$0xff] %v1752
        %1767 = vst [vmem:[#allocation2 + $0x58] sm:$0xff] %v1753
        %1768 = vst [vmem:[#allocation2 + $0x60] sm:$0xff] %v1754
        %1769 = vst [vmem:[#allocation2 + $0x68] sm:$0xff] %v1755
        // Predicated region
        $region57: #{tpu_custom_call.1} parent=39 // pred_check
          %p1770 = pneg %p324
        $region58: #{tpu_custom_call.1} parent=39 // pred_check_branch
          %1772 = sbr.rel (%p1770) target = $region60
        $region59: #{tpu_custom_call.1} parent=39 // pred_region
          %v1773 = vld [vmem:[#allocation2] sm:$0xff]
          %v1774 = vld [vmem:[#allocation2 + $0x8] sm:$0xff]
          %v1775 = vld [vmem:[#allocation2 + $0x10] sm:$0xff]
          %v1776 = vld [vmem:[#allocation2 + $0x18] sm:$0xff]
          %v1777 = vld [vmem:[#allocation2 + $0x20] sm:$0xff]
          %v1778 = vld [vmem:[#allocation2 + $0x28] sm:$0xff]
          %v1779 = vld [vmem:[#allocation2 + $0x30] sm:$0xff]
          %v1780 = vld [vmem:[#allocation2 + $0x38] sm:$0xff]
          %v1781 = vld [vmem:[#allocation2 + $0x40] sm:$0xff]
          %v1782 = vld [vmem:[#allocation2 + $0x48] sm:$0xff]
          %v1783 = vld [vmem:[#allocation2 + $0x50] sm:$0xff]
          %v1784 = vld [vmem:[#allocation2 + $0x58] sm:$0xff]
          %v1785 = vld [vmem:[#allocation2 + $0x60] sm:$0xff]
          %v1786 = vld [vmem:[#allocation2 + $0x68] sm:$0xff]
          %v1787 = vld [vmem:[%s4] sm:$0x1]
          %v1789 = vlaneseq
          %v1790 = vshrl.u32 %v1789, 7
          %v1791 = vsub.s32 0, %v1790
          %v1792 = vrot.slane %v1787, %v1791
          %v1794 = vadd.f32 %v1773, %v1792
          %v1795 = vadd.f32 %v1774, %v1792
          %v1796 = vadd.f32 %v1775, %v1792
          %v1797 = vadd.f32 %v1776, %v1792
          %v1798 = vadd.f32 %v1777, %v1792
          %v1799 = vadd.f32 %v1778, %v1792
          %v1800 = vadd.f32 %v1779, %v1792
          %v1801 = vadd.f32 %v1780, %v1792
          %v1802 = vadd.f32 %v1781, %v1792
          %v1803 = vadd.f32 %v1782, %v1792
          %v1804 = vadd.f32 %v1783, %v1792
          %v1805 = vadd.f32 %v1784, %v1792
          %v1806 = vadd.f32 %v1785, %v1792
          %v1807 = vadd.f32 %v1786, %v1792
          %1808 = vst [vmem:[%s313] sm:$0xff] %v1794
          %1809 = vst [vmem:[%s313 + $0x8] sm:$0xff] %v1795
          %1810 = vst [vmem:[%s313 + $0x10] sm:$0xff] %v1796
          %1811 = vst [vmem:[%s313 + $0x18] sm:$0xff] %v1797
          %1812 = vst [vmem:[%s313 + $0x20] sm:$0xff] %v1798
          %1813 = vst [vmem:[%s313 + $0x28] sm:$0xff] %v1799
          %1814 = vst [vmem:[%s313 + $0x30] sm:$0xff] %v1800
          %1815 = vst [vmem:[%s313 + $0x38] sm:$0xff] %v1801
          %1816 = vst [vmem:[%s313 + $0x40] sm:$0xff] %v1802
          %1817 = vst [vmem:[%s313 + $0x48] sm:$0xff] %v1803
          %1818 = vst [vmem:[%s313 + $0x50] sm:$0xff] %v1804
          %1819 = vst [vmem:[%s313 + $0x58] sm:$0xff] %v1805
          %1820 = vst [vmem:[%s313 + $0x60] sm:$0xff] %v1806
          %1821 = vst [vmem:[%s313 + $0x68] sm:$0xff] %v1807
        $region60: #{tpu_custom_call.1} parent=39 // pred_fallthru
          _
        %s1822 = sand.u32 %s168, 1
        %s1823 = scalar_lea.sflag [#allocation5], %s1822
        %s1824 = sand.u32 %s168, 1
        %s1825 = smul.addr %s1824, 112
        %s1826 = scalar_lea.vmem [#allocation9], %s1825
        // Predicated region
        $region61: #{tpu_custom_call.1} parent=39 // pred_check
          %p1827 = pneg %p178
        $region62: #{tpu_custom_call.1} parent=39 // pred_check_branch
          %1829 = sbr.rel (%p1827) target = $region64
        $region63: #{tpu_custom_call.1} parent=39 // pred_region
          %s1830 = smul.u32 14, %s27
          %s1832 = ssub.s32 1792, 1792
          %1833 = vsyncadd %s1823, %s1832
          %s1834 = smul.addr %s1830, 128
          %s1835 = scalar_lea.hbm %s5, %s1834
          %s1836 = sshll.u32 %s1826, 4
          %s1837 = int_to_ptr.vmem [resolvable:$true] %s1836
          %1842 = dma.vmem_to_hbm [thread:$0]  %s1837, 1792, %s1835, %s1823, 128, 128, 8
        $region64: #{tpu_custom_call.1} parent=39 // pred_fallthru
          _
      $region40: #{tpu_custom_call.1} parent=5 // pred_fallthru
        _
      %p1843 = scmp.le.s32.totalorder 2, %s18
      // Predicated region
      $region65: #{tpu_custom_call.1} parent=5 // pred_check
        %p1844 = pneg %p1843
      $region66: #{tpu_custom_call.1} parent=5 // pred_check_branch
        %1846 = sbr.rel (%p1844) target = $region68
      $region67: #{tpu_custom_call.1} parent=5 // pred_region
        %s1847 = ssub.s32 %s18, 2
        // Predicated region
        $region69: #{tpu_custom_call.1} parent=67 // pred_check
          %p1848 = pneg %p184
        $region70: #{tpu_custom_call.1} parent=67 // pred_check_branch
          %1850 = sbr.rel (%p1848) target = $region72
        $region71: #{tpu_custom_call.1} parent=67 // pred_region
          %s1851 = sand.u32 %s169, 1
          %s1852 = scalar_lea.sflag [#allocation5], %s1851
          %s1853 = sand.u32 %s169, 1
          %s1854 = smul.addr %s1853, 112
          %s1855 = scalar_lea.vmem [#allocation9], %s1854
          %1856 = dma.done %s1852, 1792
        $region72: #{tpu_custom_call.1} parent=67 // pred_fallthru
          _
      $region68: #{tpu_custom_call.1} parent=5 // pred_fallthru
        _
    $region6: #{tpu_custom_call.1} parent=1 // loop_footer
      %s22 = sadd.s32 1, %s18
    $region7: #{tpu_custom_call.1} parent=1 // loop_footer_branch
      %17 = sbr.rel target = $region3
    $region8: #{tpu_custom_call.1} parent=1 // loop_exit
      _
    %1857 = vsyncpa [#allocation4], 1
    %s1858 = scalar_lea.sflag [#allocation4], 1
    %1859 = vsyncpa %s1858, 1
    %1860 = vsyncpa [#allocation7], 1
    %1861 = vsyncpa [#allocation5], 1
    %s1862 = scalar_lea.sflag [#allocation5], 1
    %1863 = vsyncpa %s1862, 1

</llo_original>
